<compile_context>
chip_gen: v6e
topology: v6e:2x2x1
jax: 0.10.0
libtpu: 0.0.40
codegen_flags: <defaults>
</compile_context>

<pallas_src>
import jax
import jax.numpy as jnp
from jax.experimental import pallas as pl
from jax.experimental.pallas import tpu as pltpu

LANE = 128


# ----------------------------------------------------------------------------
# Layout helpers
# ----------------------------------------------------------------------------
def _rup(x, m=LANE):
    return ((x + m - 1) // m) * m


def _pick_rows(m, cap=1024):
    """Largest divisor of m that is a multiple of 8 and <= cap; full m otherwise.
    No /2 halving: on single-TensorCore chips (v5e/v6e) an extra grid step is
    pure per-step overhead."""
    if m % 8 != 0:
        return m
    start = (min(cap, m) // 8) * 8
    for t in range(start, 7, -8):
        if m % t == 0:
            return t
    return m


def pack_streams_to_slab(x_l, x_g):
    """NCHW (local, global) -> one (N*H*W, rup(cl+cg)) bf16 slab,
    lanes [0,cl)=local channels, [cl,cl+cg)=global channels, rest zero."""
    n, cl, h, w = x_l.shape
    cg = x_g.shape[1]
    xl = x_l.transpose(0, 2, 3, 1).reshape(n * h * w, cl)
    xg = x_g.transpose(0, 2, 3, 1).reshape(n * h * w, cg)
    s = jnp.concatenate([xl, xg], axis=-1).astype(jnp.float32)
    cpad = _rup(cl + cg)
    return jnp.pad(s, ((0, 0), (0, cpad - (cl + cg)))).astype(jnp.bfloat16)


def slab_channels_to_nchw(slab, nb, h, w, off, c):
    x = slab[:, off:off + c].astype(jnp.float32)
    return x.reshape(nb, h, w, c).transpose(0, 3, 1, 2)


def im2col_3x3(slab, nb, h, w, c_real):
    """(nb*h*w, Cpad) slab -> (nb*h*w, rup(9*c_real)) tap-packed im2col slab
    (zero border pad == conv padding=1).  Tap order t = kh*3 + kw, channels
    contiguous per tap (matches the 3x3 block-weight row layout)."""
    x = slab[:, :c_real].reshape(nb, h, w, c_real)
    xp = jnp.pad(x, ((0, 0), (1, 1), (1, 1), (0, 0)))
    taps = [xp[:, kh:kh + h, kw:kw + w, :] for kh in range(3) for kw in range(3)]
    y = jnp.concatenate(taps, axis=-1).reshape(nb * h * w, 9 * c_real)
    kpad = _rup(9 * c_real)
    return jnp.pad(y, ((0, 0), (0, kpad - 9 * c_real)))


# ----------------------------------------------------------------------------
# The single generic fused Pallas kernel:
#   out = relu_mask( (sum_g (sum_i A_gi) @ W_g) * scale + bias [+ post] )
# All operands are 128-lane padded; matmuls run bf16 on the MXU, f32 accumulate.
# ----------------------------------------------------------------------------
def fused_matmul(groups, scale, bias, *, relu_mask=None, post=None,
                 out_dtype=jnp.bfloat16, rows_cap=1024):
    m = groups[0][0][0].shape[0]
    npad = groups[0][1].shape[-1]
    rows = _pick_rows(m, rows_cap)
    grid = (m // rows,)

    inputs, in_specs = [], []
    vmem_bytes = 0
    flops = 0
    n_a = []
    for a_slabs, wt in groups:
        kpad = wt.shape[0]
        n_a.append(len(a_slabs))
        for a in a_slabs:
            inputs.append(a)
            in_specs.append(pl.BlockSpec((rows, kpad), lambda i: (i, 0)))
            vmem_bytes += 2 * rows * kpad * a.dtype.itemsize
        flops += 2 * m * kpad * npad
    for _, wt in groups:
        inputs.append(wt)
        in_specs.append(pl.BlockSpec(wt.shape, lambda i: (0, 0)))
        vmem_bytes += int(wt.size) * wt.dtype.itemsize
    inputs.append(scale)
    in_specs.append(pl.BlockSpec((1, npad), lambda i: (0, 0)))
    inputs.append(bias)
    in_specs.append(pl.BlockSpec((1, npad), lambda i: (0, 0)))
    has_mask = relu_mask is not None
    if has_mask:
        inputs.append(relu_mask)
        in_specs.append(pl.BlockSpec((1, npad), lambda i: (0, 0)))
    has_post = post is not None
    if has_post:
        inputs.append(post)
        in_specs.append(pl.BlockSpec((rows, npad), lambda i: (i, 0)))
        vmem_bytes += 2 * rows * npad * post.dtype.itemsize
    out_itemsize = jnp.dtype(out_dtype).itemsize
    vmem_bytes += 2 * rows * npad * out_itemsize + 4 * npad * 4

    n_groups = len(groups)

    def kernel(*refs):
        pos = 0
        a_refs_per_group = []
        for na in n_a:
            a_refs_per_group.append(refs[pos:pos + na])
            pos += na
        w_refs = refs[pos:pos + n_groups]
        pos += n_groups
        s_ref = refs[pos]
        b_ref = refs[pos + 1]
        pos += 2
        m_ref = None
        if has_mask:
            m_ref = refs[pos]
            pos += 1
        p_ref = None
        if has_post:
            p_ref = refs[pos]
            pos += 1
        o_ref = refs[pos]

        acc = None
        for a_refs, w_ref in zip(a_refs_per_group, w_refs):
            asum = a_refs[0][...]
            for extra in a_refs[1:]:
                asum = asum + extra[...]
            part = jnp.dot(asum.astype(jnp.bfloat16), w_ref[...],
                           preferred_element_type=jnp.float32)
            acc = part if acc is None else acc + part

        y = acc * s_ref[...] + b_ref[...]
        if has_post:
            y = y + p_ref[...].astype(jnp.float32)
        if has_mask:
            mrow = m_ref[...]
            y = mrow * jnp.maximum(y, 0.0) + (1.0 - mrow) * y
        else:
            y = jnp.maximum(y, 0.0)
        o_ref[...] = y.astype(o_ref.dtype)

    bytes_accessed = int(sum(int(a.size) * a.dtype.itemsize for a in inputs)
                         + m * npad * out_itemsize)
    vmem_limit = int(min(48 << 20, max(16 << 20, 2 * vmem_bytes + (2 << 20))))
    return pl.pallas_call(
        kernel,
        out_shape=jax.ShapeDtypeStruct((m, npad), out_dtype),
        grid=grid,
        in_specs=in_specs,
        out_specs=pl.BlockSpec((rows, npad), lambda i: (i, 0)),
        compiler_params=pltpu.CompilerParams(
            dimension_semantics=("parallel",),
            vmem_limit_bytes=vmem_limit),
        cost_estimate=pl.CostEstimate(flops=int(flops), transcendentals=0,
                                      bytes_accessed=bytes_accessed),
    )(*inputs)


# ----------------------------------------------------------------------------
# FourierUnit / SpectralTransform / FFC_BN_ACT forward on the packed slab layout
# ----------------------------------------------------------------------------
def fourier_unit_spatial(x, fup, nb, h, w, c):
    """FourierUnit: rfft2 -> (real,imag per-channel interleave) -> 1x1 conv+BN+ReLU
    (Pallas) -> irfft2.  x: (nb, h, w, c) f32, returns (nb, h, w, c) f32."""
    # TODO(synk): rfftn/irfftn have no Pallas primitive; they stay as XLA ops.
    ff = jnp.fft.rfftn(x, axes=(1, 2), norm='ortho')
    wf = ff.shape[2]
    st = jnp.stack([ff.real, ff.imag], axis=-1).reshape(nb, h, wf, 2 * c)
    c2p = _rup(2 * c)
    slab = jnp.pad(st.reshape(nb * h * wf, 2 * c),
                   ((0, 0), (0, c2p - 2 * c))).astype(jnp.bfloat16)
    y = fused_matmul([([slab], fup['wt'])], fup['scale'], fup['bias'])
    y = y[:, :2 * c].astype(jnp.float32).reshape(nb, h, wf, c, 2)
    yc = jax.lax.complex(y[..., 0], y[..., 1])
    return jnp.fft.irfftn(yc, s=(h, w), axes=(1, 2), norm='ortho')


def ffc_bn_act(x_slab, p, nb, h, w, id_slab=None):
    """One FFC_BN_ACT layer on the packed slab.  If id_slab is given (conv3),
    the layer activation is Identity and ReLU is applied after the residual."""
    in_cl, in_cg = p['in_cl'], p['in_cg']
    out_cl, out_cg, hidden = p['out_cl'], p['out_cg'], p['hidden']
    co = out_cl + out_cg
    cin_t = in_cl + in_cg

    a_in = im2col_3x3(x_slab, nb, h, w, cin_t) if p['ksize'] == 3 else x_slab

    post_A = post_D = None
    if id_slab is not None:
        lane = jnp.arange(id_slab.shape[-1])
        post_A = jnp.where(lane < out_cl, id_slab, 0).astype(jnp.bfloat16)
        post_D = jnp.where((lane >= out_cl) & (lane < co), id_slab, 0).astype(jnp.bfloat16)

    # kernel A: [ relu(bn_l(l2l+g2l) [+id_l]) | raw l2g | relu(bn1(conv1_spec(x_g))) ]
    A = fused_matmul([([a_in], p['wA'])], p['sA'], p['bA'],
                     relu_mask=p['mA'], post=post_A)

    # SpectralTransform global path: FFT glue + Pallas FourierUnit convs.
    x1 = A[:, co:co + hidden].astype(jnp.float32).reshape(nb, h, w, hidden)
    fu_sp = fourier_unit_spatial(x1, p['fu'], nb, h, w, hidden)
    # LFU: first c/4 channels, split h then w in two, stacked on channels,
    # FourierUnit on the quarter image, tiled back 2x2.
    xs = x1[..., :hidden // 4]
    xs = jnp.concatenate(jnp.split(xs, 2, axis=1), axis=-1)
    xs = jnp.concatenate(jnp.split(xs, 2, axis=2), axis=-1)
    lfu_sp = fourier_unit_spatial(xs, p['lfu'], nb, h // 2, w // 2, hidden)
    lfu_sp = jnp.tile(lfu_sp, (1, 2, 2, 1))

    hp = _rup(hidden)

    def _to_slab(t):
        s = t.reshape(nb * h * w, hidden)
        return jnp.pad(s, ((0, 0), (0, hp - hidden))).astype(jnp.bfloat16)

    # kernel D: [ out_l pass-through | relu(bn_g(l2g + conv2(x1+fu+lfu)) [+id_g]) ]
    out = fused_matmul([([A], p['wD1']),
                        ([_to_slab(fu_sp), _to_slab(lfu_sp)], p['wD2'])],
                       p['sD'], p['bD'], relu_mask=p['mD'], post=post_D)
    return out


def bottleneck_forward(x, params, nb, h, w):
    if not isinstance(x, tuple):
        # TODO(synk): ratio_gin==0 single-tensor input / scalar-zero global stream
        #             and the downsample / stride==2 paths are not implemented.
        raise NotImplementedError("Bottleneck kernel expects an (x_l, x_g) tuple input")
    x_l, x_g = x
    p1, p3 = params['conv1'], params['conv3']
    assert p3['out_cl'] == p1['in_cl'] and p3['out_cg'] == p1['in_cg'], \
        "residual stream layout must match the output layout (downsample is None)"

    x_slab = pack_streams_to_slab(x_l, x_g)
    id_slab = x_slab
    y = ffc_bn_act(x_slab, params['conv1'], nb, h, w)      # act = ReLU
    y = ffc_bn_act(y, params['conv2'], nb, h, w)            # act = ReLU
    # conv3: FFC_BN_ACT activation is Identity; relu_l/relu_g are applied only
    # AFTER the residual add and are fused into the conv3 kernels' epilogues.
    y = ffc_bn_act(y, params['conv3'], nb, h, w, id_slab=id_slab)

    out_cl, out_cg = p3['out_cl'], p3['out_cg']
    out_l = slab_channels_to_nchw(y, nb, h, w, 0, out_cl)
    out_g = slab_channels_to_nchw(y, nb, h, w, out_cl, out_cg)
    return out_l, out_g


# ----------------------------------------------------------------------------
# Deterministic parameter construction (shapes from the module __init__),
# packed block weights / folded BN prepared once, bf16.
# ----------------------------------------------------------------------------
def _winit(key, cout, cin, k):
    fan = cin * k * k
    return jax.random.normal(key, (cout, cin, k, k), jnp.float32) / jnp.sqrt(float(fan))


def _bn_fold(key, c):
    k1, k2 = jax.random.split(key)
    scale = 1.0 + 0.1 * jax.random.normal(k1, (c,), jnp.float32)  # gamma/sqrt(var+eps)
    bias = 0.05 * jax.random.normal(k2, (c,), jnp.float32)        # beta - mean*scale
    return scale, bias


def _prep_row(npad, base, segments):
    v = jnp.full((npad,), float(base), jnp.float32)
    for off, vals in segments:
        v = v.at[off:off + vals.shape[0]].set(vals)
    return v.reshape(1, npad)


def _prep_fu_weight(w4, c2):
    kpad = _rup(c2)
    W = jnp.zeros((kpad, kpad), jnp.float32)
    W = W.at[:c2, :c2].set(w4[:, :, 0, 0].T)
    return W.astype(jnp.bfloat16)


def make_layer_params(key, cin, cout, ksize):
    in_cg = cin // 2
    in_cl = cin - in_cg
    out_cg = cout // 2
    out_cl = cout - out_cg
    hidden = out_cg // 2
    co = out_cl + out_cg
    cin_t = in_cl + in_cg
    assert co + hidden <= LANE and cin_t <= LANE  # see TODO on >128-wide layers

    keys = jax.random.split(key, 12)
    w_l2l = _winit(keys[0], out_cl, in_cl, ksize)
    w_g2l = _winit(keys[1], out_cl, in_cg, ksize)
    w_l2g = _winit(keys[2], out_cg, in_cl, ksize)
    w_c1 = _winit(keys[3], hidden, in_cg, 1)              # SpectralTransform.conv1
    w_fu = _winit(keys[4], 2 * hidden, 2 * hidden, 1)     # FourierUnit conv
    w_lfu = _winit(keys[5], 2 * hidden, 2 * hidden, 1)    # LFU FourierUnit conv
    w_c2 = _winit(keys[6], out_cg, hidden, 1)             # SpectralTransform.conv2
    bnl_s, bnl_b = _bn_fold(keys[7], out_cl)
    bng_s, bng_b = _bn_fold(keys[8], out_cg)
    bn1_s, bn1_b = _bn_fold(keys[9], hidden)
    bnf_s, bnf_b = _bn_fold(keys[10], 2 * hidden)
    bnr_s, bnr_b = _bn_fold(keys[11], 2 * hidden)

    a_npad = LANE
    d_npad = LANE

    # ---- kernel A block weight: cols [0,out_cl)=l2l+g2l, [out_cl,co)=l2g,
    #      [co,co+hidden)=spectral conv1 (reads the global input channels).
    if ksize == 1:
        kpad = _rup(cin_t)
        W = jnp.zeros((kpad, a_npad), jnp.float32)
        W = W.at[0:in_cl, 0:out_cl].set(w_l2l[:, :, 0, 0].T)
        W = W.at[in_cl:cin_t, 0:out_cl].set(w_g2l[:, :, 0, 0].T)
        W = W.at[0:in_cl, out_cl:co].set(w_l2g[:, :, 0, 0].T)
        W = W.at[in_cl:cin_t, co:co + hidden].set(w_c1[:, :, 0, 0].T)
    else:
        kpad = _rup(9 * cin_t)
        W = jnp.zeros((kpad, a_npad), jnp.float32)
        for kh in range(3):
            for kw in range(3):
                r0 = (kh * 3 + kw) * cin_t
                W = W.at[r0:r0 + in_cl, 0:out_cl].set(w_l2l[:, :, kh, kw].T)
                W = W.at[r0 + in_cl:r0 + cin_t, 0:out_cl].set(w_g2l[:, :, kh, kw].T)
                W = W.at[r0:r0 + in_cl, out_cl:co].set(w_l2g[:, :, kh, kw].T)
        r0 = 4 * cin_t  # centre tap == un-shifted x_g -> fold the 1x1 spectral conv1
        W = W.at[r0 + in_cl:r0 + cin_t, co:co + hidden].set(w_c1[:, :, 0, 0].T)
    wA = W.astype(jnp.bfloat16)

    # ---- kernel D weights: masked-diag pass-through (out_l + raw l2g) plus
    #      SpectralTransform.conv2 applied to the x1 lanes / fu+lfu slabs.
    w2 = w_c2[:, :, 0, 0].T                                # (hidden, out_cg)
    W1 = jnp.zeros((a_npad, d_npad), jnp.float32)
    idx = jnp.arange(co)
    W1 = W1.at[idx, idx].set(1.0)
    W1 = W1.at[co:co + hidden, out_cl:co].set(w2)
    W2 = jnp.zeros((_rup(hidden), d_npad), jnp.float32)
    W2 = W2.at[0:hidden, out_cl:co].set(w2)

    ones = jnp.ones
    return dict(
        ksize=ksize, in_cl=in_cl, in_cg=in_cg,
        out_cl=out_cl, out_cg=out_cg, hidden=hidden,
        wA=wA, wD1=W1.astype(jnp.bfloat16), wD2=W2.astype(jnp.bfloat16),
        sA=_prep_row(a_npad, 1.0, [(0, bnl_s), (co, bn1_s)]),
        bA=_prep_row(a_npad, 0.0, [(0, bnl_b), (co, bn1_b)]),
        mA=_prep_row(a_npad, 0.0, [(0, ones(out_cl)), (co, ones(hidden))]),
        sD=_prep_row(d_npad, 1.0, [(out_cl, bng_s)]),
        bD=_prep_row(d_npad, 0.0, [(out_cl, bng_b)]),
        mD=_prep_row(d_npad, 0.0, [(0, ones(co))]),
        fu=dict(wt=_prep_fu_weight(w_fu, 2 * hidden),
                scale=_prep_row(_rup(2 * hidden), 1.0, [(0, bnf_s)]),
                bias=_prep_row(_rup(2 * hidden), 0.0, [(0, bnf_b)])),
        lfu=dict(wt=_prep_fu_weight(w_lfu, 2 * hidden),
                 scale=_prep_row(_rup(2 * hidden), 1.0, [(0, bnr_s)]),
                 bias=_prep_row(_rup(2 * hidden), 0.0, [(0, bnr_b)])),
    )


if __name__ == "__main__":
    # Bottleneck(inplanes=64, planes=16): width=16, output channels = 16*4 = 64
    inplanes, planes = 64, 16
    width = planes                     # base_width=64, groups=1
    N, H, W = 2, 8, 8

    key = jax.random.PRNGKey(0)
    kx, kparams = jax.random.split(key)
    k_l, k_g = jax.random.split(kx)
    # The Bottleneck is fed the (local, global) tuple; ratio 0.5 -> 32/32 channels.
    x_l = jax.random.normal(k_l, (N, inplanes // 2, H, W), jnp.float32)
    x_g = jax.random.normal(k_g, (N, inplanes // 2, H, W), jnp.float32)

    kp = jax.random.split(kparams, 3)
    params = dict(
        conv1=make_layer_params(kp[0], inplanes, width, 1),
        conv2=make_layer_params(kp[1], width, width, 3),
        conv3=make_layer_params(kp[2], width, planes * 4, 1),
    )

    fwd = jax.jit(lambda a, b: bottleneck_forward((a, b), params, N, H, W))
    out_l, out_g = fwd(x_l, x_g)
    jax.block_until_ready((out_l, out_g))

    assert out_l.shape == (N, planes * 4 // 2, H, W)
    assert out_g.shape == (N, planes * 4 // 2, H, W)
    assert bool(jnp.all(out_l >= 0)) and bool(jnp.all(out_g >= 0))
    assert bool(jnp.all(jnp.isfinite(out_l))) and bool(jnp.all(jnp.isfinite(out_g)))
    print("KERNEL_OK")
</pallas_src>

<mosaic_0001>
module attributes {stable_mosaic.version = 11 : i64} {
  func.func @kernel(%arg0: i32, %arg1: memref<128x128xbf16, #tpu.memory_space<vmem>>, %arg2: memref<128x128xbf16, #tpu.memory_space<vmem>>, %arg3: memref<1x128xf32, #tpu.memory_space<vmem>>, %arg4: memref<1x128xf32, #tpu.memory_space<vmem>>, %arg5: memref<1x128xf32, #tpu.memory_space<vmem>>, %arg6: memref<128x128xbf16, #tpu.memory_space<vmem>>) attributes {dimension_semantics = [#tpu.dimension_semantics<parallel>], iteration_bounds = array<i64: 1>, scalar_prefetch = 0 : i64, scratch_operands = 0 : i64, tpu.core_type = #tpu.core_type<tc>, window_params = [{transform_indices = @transform_0, window_bounds = array<i64: 128, 128>}, {pipeline_mode = #tpu.pipeline_mode<synchronous>, transform_indices = @transform_1, window_bounds = array<i64: 128, 128>}, {pipeline_mode = #tpu.pipeline_mode<synchronous>, transform_indices = @transform_2, window_bounds = array<i64: 1, 128>}, {pipeline_mode = #tpu.pipeline_mode<synchronous>, transform_indices = @transform_3, window_bounds = array<i64: 1, 128>}, {pipeline_mode = #tpu.pipeline_mode<synchronous>, transform_indices = @transform_4, window_bounds = array<i64: 1, 128>}, {transform_indices = @transform_5, window_bounds = array<i64: 128, 128>}]} {
    %c0 = arith.constant 0 : index
    %c0_0 = arith.constant 0 : index
    %0 = vector.load %arg1[%c0, %c0_0] : memref<128x128xbf16, #tpu.memory_space<vmem>>, vector<128x128xbf16>
    %c0_1 = arith.constant 0 : index
    %c0_2 = arith.constant 0 : index
    %1 = vector.load %arg2[%c0_1, %c0_2] : memref<128x128xbf16, #tpu.memory_space<vmem>>, vector<128x128xbf16>
    %cst = arith.constant dense<0.000000e+00> : vector<128x128xf32>
    %2 = tpu.matmul %0, %1, %cst {dimension_numbers = #tpu.dot_dimension_numbers<[1], [0], [0], [1], [0, 0, 1, 1], [], []>} : vector<128x128xbf16>, vector<128x128xbf16>, vector<128x128xf32> -> vector<128x128xf32>
    %c0_3 = arith.constant 0 : index
    %c0_4 = arith.constant 0 : index
    %3 = vector.load %arg3[%c0_3, %c0_4] : memref<1x128xf32, #tpu.memory_space<vmem>>, vector<1x128xf32>
    %4 = vector.broadcast %3 : vector<1x128xf32> to vector<128x128xf32>
    %5 = arith.mulf %2, %4 : vector<128x128xf32>
    %c0_5 = arith.constant 0 : index
    %c0_6 = arith.constant 0 : index
    %6 = vector.load %arg4[%c0_5, %c0_6] : memref<1x128xf32, #tpu.memory_space<vmem>>, vector<1x128xf32>
    %7 = vector.broadcast %6 : vector<1x128xf32> to vector<128x128xf32>
    %8 = arith.addf %5, %7 : vector<128x128xf32>
    %c0_7 = arith.constant 0 : index
    %c0_8 = arith.constant 0 : index
    %9 = vector.load %arg5[%c0_7, %c0_8] : memref<1x128xf32, #tpu.memory_space<vmem>>, vector<1x128xf32>
    %cst_9 = arith.constant 0.000000e+00 : f32
    %10 = vector.broadcast %cst_9 : f32 to vector<128x128xf32>
    %11 = arith.maximumf %8, %10 : vector<128x128xf32>
    %12 = vector.broadcast %9 : vector<1x128xf32> to vector<128x128xf32>
    %13 = arith.mulf %12, %11 : vector<128x128xf32>
    %cst_10 = arith.constant 1.000000e+00 : f32
    %14 = vector.broadcast %cst_10 : f32 to vector<1x128xf32>
    %15 = arith.subf %14, %9 : vector<1x128xf32>
    %16 = vector.broadcast %15 : vector<1x128xf32> to vector<128x128xf32>
    %17 = arith.mulf %16, %8 : vector<128x128xf32>
    %18 = arith.addf %13, %17 : vector<128x128xf32>
    %19 = arith.truncf %18 : vector<128x128xf32> to vector<128x128xbf16>
    %c0_11 = arith.constant 0 : index
    %c0_12 = arith.constant 0 : index
    %20 = vector.load %arg6[%c0_11, %c0_12] : memref<128x128xbf16, #tpu.memory_space<vmem>>, vector<128x128xbf16>
    tpu.vector_store %arg6[%c0_11, %c0_12], %19 {strides = array<i32>} : memref<128x128xbf16, #tpu.memory_space<vmem>>, vector<128x128xbf16>,
    return
  }
  func.func @transform_0(%arg0: i32) -> (i32, i32) {
    %c0_i32 = arith.constant 0 : i32
    %c0_i32_0 = arith.constant 0 : i32
    return %arg0, %c0_i32 : i32, i32
  }
  func.func @transform_1(%arg0: i32) -> (i32, i32) {
    %c0_i32 = arith.constant 0 : i32
    %c0_i32_0 = arith.constant 0 : i32
    %c0_i32_1 = arith.constant 0 : i32
    return %c0_i32, %c0_i32_0 : i32, i32
  }
  func.func @transform_2(%arg0: i32) -> (i32, i32) {
    %c0_i32 = arith.constant 0 : i32
    %c0_i32_0 = arith.constant 0 : i32
    %c0_i32_1 = arith.constant 0 : i32
    return %c0_i32, %c0_i32_0 : i32, i32
  }
  func.func @transform_3(%arg0: i32) -> (i32, i32) {
    %c0_i32 = arith.constant 0 : i32
    %c0_i32_0 = arith.constant 0 : i32
    %c0_i32_1 = arith.constant 0 : i32
    return %c0_i32, %c0_i32_0 : i32, i32
  }
  func.func @transform_4(%arg0: i32) -> (i32, i32) {
    %c0_i32 = arith.constant 0 : i32
    %c0_i32_0 = arith.constant 0 : i32
    %c0_i32_1 = arith.constant 0 : i32
    return %c0_i32, %c0_i32_0 : i32, i32
  }
  func.func @transform_5(%arg0: i32) -> (i32, i32) {
    %c0_i32 = arith.constant 0 : i32
    %c0_i32_0 = arith.constant 0 : i32
    return %arg0, %c0_i32 : i32, i32
  }
}

module attributes {stable_mosaic.version = 11 : i64} {
  func.func @kernel(%arg0: i32, %arg1: memref<24x128xbf16, #tpu.memory_space<vmem>>, %arg2: memref<128x128xbf16, #tpu.memory_space<vmem>>, %arg3: memref<1x128xf32, #tpu.memory_space<vmem>>, %arg4: memref<1x128xf32, #tpu.memory_space<vmem>>, %arg5: memref<24x128xbf16, #tpu.memory_space<vmem>>) attributes {dimension_semantics = [#tpu.dimension_semantics<parallel>], iteration_bounds = array<i64: 1>, scalar_prefetch = 0 : i64, scratch_operands = 0 : i64, tpu.core_type = #tpu.core_type<tc>, window_params = [{transform_indices = @transform_0, window_bounds = array<i64: 24, 128>}, {pipeline_mode = #tpu.pipeline_mode<synchronous>, transform_indices = @transform_1, window_bounds = array<i64: 128, 128>}, {pipeline_mode = #tpu.pipeline_mode<synchronous>, transform_indices = @transform_2, window_bounds = array<i64: 1, 128>}, {pipeline_mode = #tpu.pipeline_mode<synchronous>, transform_indices = @transform_3, window_bounds = array<i64: 1, 128>}, {transform_indices = @transform_4, window_bounds = array<i64: 24, 128>}]} {
    %c0 = arith.constant 0 : index
    %c0_0 = arith.constant 0 : index
    %0 = vector.load %arg1[%c0, %c0_0] : memref<24x128xbf16, #tpu.memory_space<vmem>>, vector<24x128xbf16>
    %c0_1 = arith.constant 0 : index
    %c0_2 = arith.constant 0 : index
    %1 = vector.load %arg2[%c0_1, %c0_2] : memref<128x128xbf16, #tpu.memory_space<vmem>>, vector<128x128xbf16>
    %cst = arith.constant dense<0.000000e+00> : vector<24x128xf32>
    %2 = tpu.matmul %0, %1, %cst {dimension_numbers = #tpu.dot_dimension_numbers<[1], [0], [0], [1], [0, 0, 1, 1], [], []>} : vector<24x128xbf16>, vector<128x128xbf16>, vector<24x128xf32> -> vector<24x128xf32>
    %c0_3 = arith.constant 0 : index
    %c0_4 = arith.constant 0 : index
    %3 = vector.load %arg3[%c0_3, %c0_4] : memref<1x128xf32, #tpu.memory_space<vmem>>, vector<1x128xf32>
    %4 = vector.broadcast %3 : vector<1x128xf32> to vector<24x128xf32>
    %5 = arith.mulf %2, %4 : vector<24x128xf32>
    %c0_5 = arith.constant 0 : index
    %c0_6 = arith.constant 0 : index
    %6 = vector.load %arg4[%c0_5, %c0_6] : memref<1x128xf32, #tpu.memory_space<vmem>>, vector<1x128xf32>
    %7 = vector.broadcast %6 : vector<1x128xf32> to vector<24x128xf32>
    %8 = arith.addf %5, %7 : vector<24x128xf32>
    %cst_7 = arith.constant 0.000000e+00 : f32
    %9 = vector.broadcast %cst_7 : f32 to vector<24x128xf32>
    %10 = arith.maximumf %8, %9 : vector<24x128xf32>
    %11 = arith.truncf %10 : vector<24x128xf32> to vector<24x128xbf16>
    %c0_8 = arith.constant 0 : index
    %c0_9 = arith.constant 0 : index
    %12 = vector.load %arg5[%c0_8, %c0_9] : memref<24x128xbf16, #tpu.memory_space<vmem>>, vector<24x128xbf16>
    tpu.vector_store %arg5[%c0_8, %c0_9], %11 {strides = array<i32>} : memref<24x128xbf16, #tpu.memory_space<vmem>>, vector<24x128xbf16>,
    return
  }
  func.func @transform_0(%arg0: i32) -> (i32, i32) {
    %c0_i32 = arith.constant 0 : i32
    %c0_i32_0 = arith.constant 0 : i32
    return %arg0, %c0_i32 : i32, i32
  }
  func.func @transform_1(%arg0: i32) -> (i32, i32) {
    %c0_i32 = arith.constant 0 : i32
    %c0_i32_0 = arith.constant 0 : i32
    %c0_i32_1 = arith.constant 0 : i32
    return %c0_i32, %c0_i32_0 : i32, i32
  }
  func.func @transform_2(%arg0: i32) -> (i32, i32) {
    %c0_i32 = arith.constant 0 : i32
    %c0_i32_0 = arith.constant 0 : i32
    %c0_i32_1 = arith.constant 0 : i32
    return %c0_i32, %c0_i32_0 : i32, i32
  }
  func.func @transform_3(%arg0: i32) -> (i32, i32) {
    %c0_i32 = arith.constant 0 : i32
    %c0_i32_0 = arith.constant 0 : i32
    %c0_i32_1 = arith.constant 0 : i32
    return %c0_i32, %c0_i32_0 : i32, i32
  }
  func.func @transform_4(%arg0: i32) -> (i32, i32) {
    %c0_i32 = arith.constant 0 : i32
    %c0_i32_0 = arith.constant 0 : i32
    return %arg0, %c0_i32 : i32, i32
  }
}

module attributes {stable_mosaic.version = 11 : i64} {
  func.func @kernel(%arg0: i32, %arg1: memref<80x128xbf16, #tpu.memory_space<vmem>>, %arg2: memref<128x128xbf16, #tpu.memory_space<vmem>>, %arg3: memref<1x128xf32, #tpu.memory_space<vmem>>, %arg4: memref<1x128xf32, #tpu.memory_space<vmem>>, %arg5: memref<80x128xbf16, #tpu.memory_space<vmem>>) attributes {dimension_semantics = [#tpu.dimension_semantics<parallel>], iteration_bounds = array<i64: 1>, scalar_prefetch = 0 : i64, scratch_operands = 0 : i64, tpu.core_type = #tpu.core_type<tc>, window_params = [{transform_indices = @transform_0, window_bounds = array<i64: 80, 128>}, {pipeline_mode = #tpu.pipeline_mode<synchronous>, transform_indices = @transform_1, window_bounds = array<i64: 128, 128>}, {pipeline_mode = #tpu.pipeline_mode<synchronous>, transform_indices = @transform_2, window_bounds = array<i64: 1, 128>}, {pipeline_mode = #tpu.pipeline_mode<synchronous>, transform_indices = @transform_3, window_bounds = array<i64: 1, 128>}, {transform_indices = @transform_4, window_bounds = array<i64: 80, 128>}]} {
    %c0 = arith.constant 0 : index
    %c0_0 = arith.constant 0 : index
    %0 = vector.load %arg1[%c0, %c0_0] : memref<80x128xbf16, #tpu.memory_space<vmem>>, vector<80x128xbf16>
    %c0_1 = arith.constant 0 : index
    %c0_2 = arith.constant 0 : index
    %1 = vector.load %arg2[%c0_1, %c0_2] : memref<128x128xbf16, #tpu.memory_space<vmem>>, vector<128x128xbf16>
    %cst = arith.constant dense<0.000000e+00> : vector<80x128xf32>
    %2 = tpu.matmul %0, %1, %cst {dimension_numbers = #tpu.dot_dimension_numbers<[1], [0], [0], [1], [0, 0, 1, 1], [], []>} : vector<80x128xbf16>, vector<128x128xbf16>, vector<80x128xf32> -> vector<80x128xf32>
    %c0_3 = arith.constant 0 : index
    %c0_4 = arith.constant 0 : index
    %3 = vector.load %arg3[%c0_3, %c0_4] : memref<1x128xf32, #tpu.memory_space<vmem>>, vector<1x128xf32>
    %4 = vector.broadcast %3 : vector<1x128xf32> to vector<80x128xf32>
    %5 = arith.mulf %2, %4 : vector<80x128xf32>
    %c0_5 = arith.constant 0 : index
    %c0_6 = arith.constant 0 : index
    %6 = vector.load %arg4[%c0_5, %c0_6] : memref<1x128xf32, #tpu.memory_space<vmem>>, vector<1x128xf32>
    %7 = vector.broadcast %6 : vector<1x128xf32> to vector<80x128xf32>
    %8 = arith.addf %5, %7 : vector<80x128xf32>
    %cst_7 = arith.constant 0.000000e+00 : f32
    %9 = vector.broadcast %cst_7 : f32 to vector<80x128xf32>
    %10 = arith.maximumf %8, %9 : vector<80x128xf32>
    %11 = arith.truncf %10 : vector<80x128xf32> to vector<80x128xbf16>
    %c0_8 = arith.constant 0 : index
    %c0_9 = arith.constant 0 : index
    %12 = vector.load %arg5[%c0_8, %c0_9] : memref<80x128xbf16, #tpu.memory_space<vmem>>, vector<80x128xbf16>
    tpu.vector_store %arg5[%c0_8, %c0_9], %11 {strides = array<i32>} : memref<80x128xbf16, #tpu.memory_space<vmem>>, vector<80x128xbf16>,
    return
  }
  func.func @transform_0(%arg0: i32) -> (i32, i32) {
    %c0_i32 = arith.constant 0 : i32
    %c0_i32_0 = arith.constant 0 : i32
    return %arg0, %c0_i32 : i32, i32
  }
  func.func @transform_1(%arg0: i32) -> (i32, i32) {
    %c0_i32 = arith.constant 0 : i32
    %c0_i32_0 = arith.constant 0 : i32
    %c0_i32_1 = arith.constant 0 : i32
    return %c0_i32, %c0_i32_0 : i32, i32
  }
  func.func @transform_2(%arg0: i32) -> (i32, i32) {
    %c0_i32 = arith.constant 0 : i32
    %c0_i32_0 = arith.constant 0 : i32
    %c0_i32_1 = arith.constant 0 : i32
    return %c0_i32, %c0_i32_0 : i32, i32
  }
  func.func @transform_3(%arg0: i32) -> (i32, i32) {
    %c0_i32 = arith.constant 0 : i32
    %c0_i32_0 = arith.constant 0 : i32
    %c0_i32_1 = arith.constant 0 : i32
    return %c0_i32, %c0_i32_0 : i32, i32
  }
  func.func @transform_4(%arg0: i32) -> (i32, i32) {
    %c0_i32 = arith.constant 0 : i32
    %c0_i32_0 = arith.constant 0 : i32
    return %arg0, %c0_i32 : i32, i32
  }
}

module attributes {stable_mosaic.version = 11 : i64} {
  func.func @kernel(%arg0: i32, %arg1: memref<128x128xbf16, #tpu.memory_space<vmem>>, %arg2: memref<128x128xbf16, #tpu.memory_space<vmem>>, %arg3: memref<128x128xbf16, #tpu.memory_space<vmem>>, %arg4: memref<128x128xbf16, #tpu.memory_space<vmem>>, %arg5: memref<128x128xbf16, #tpu.memory_space<vmem>>, %arg6: memref<1x128xf32, #tpu.memory_space<vmem>>, %arg7: memref<1x128xf32, #tpu.memory_space<vmem>>, %arg8: memref<1x128xf32, #tpu.memory_space<vmem>>, %arg9: memref<128x128xbf16, #tpu.memory_space<vmem>>) attributes {dimension_semantics = [#tpu.dimension_semantics<parallel>], iteration_bounds = array<i64: 1>, scalar_prefetch = 0 : i64, scratch_operands = 0 : i64, tpu.core_type = #tpu.core_type<tc>, window_params = [{transform_indices = @transform_0, window_bounds = array<i64: 128, 128>}, {transform_indices = @transform_1, window_bounds = array<i64: 128, 128>}, {transform_indices = @transform_2, window_bounds = array<i64: 128, 128>}, {pipeline_mode = #tpu.pipeline_mode<synchronous>, transform_indices = @transform_3, window_bounds = array<i64: 128, 128>}, {pipeline_mode = #tpu.pipeline_mode<synchronous>, transform_indices = @transform_4, window_bounds = array<i64: 128, 128>}, {pipeline_mode = #tpu.pipeline_mode<synchronous>, transform_indices = @transform_5, window_bounds = array<i64: 1, 128>}, {pipeline_mode = #tpu.pipeline_mode<synchronous>, transform_indices = @transform_6, window_bounds = array<i64: 1, 128>}, {pipeline_mode = #tpu.pipeline_mode<synchronous>, transform_indices = @transform_7, window_bounds = array<i64: 1, 128>}, {transform_indices = @transform_8, window_bounds = array<i64: 128, 128>}]} {
    %c0 = arith.constant 0 : index
    %c0_0 = arith.constant 0 : index
    %0 = vector.load %arg1[%c0, %c0_0] : memref<128x128xbf16, #tpu.memory_space<vmem>>, vector<128x128xbf16>
    %c0_1 = arith.constant 0 : index
    %c0_2 = arith.constant 0 : index
    %1 = vector.load %arg4[%c0_1, %c0_2] : memref<128x128xbf16, #tpu.memory_space<vmem>>, vector<128x128xbf16>
    %cst = arith.constant dense<0.000000e+00> : vector<128x128xf32>
    %2 = tpu.matmul %0, %1, %cst {dimension_numbers = #tpu.dot_dimension_numbers<[1], [0], [0], [1], [0, 0, 1, 1], [], []>} : vector<128x128xbf16>, vector<128x128xbf16>, vector<128x128xf32> -> vector<128x128xf32>
    %c0_3 = arith.constant 0 : index
    %c0_4 = arith.constant 0 : index
    %3 = vector.load %arg2[%c0_3, %c0_4] : memref<128x128xbf16, #tpu.memory_space<vmem>>, vector<128x128xbf16>
    %c0_5 = arith.constant 0 : index
    %c0_6 = arith.constant 0 : index
    %4 = vector.load %arg3[%c0_5, %c0_6] : memref<128x128xbf16, #tpu.memory_space<vmem>>, vector<128x128xbf16>
    %5 = arith.addf %3, %4 : vector<128x128xbf16>
    %c0_7 = arith.constant 0 : index
    %c0_8 = arith.constant 0 : index
    %6 = vector.load %arg5[%c0_7, %c0_8] : memref<128x128xbf16, #tpu.memory_space<vmem>>, vector<128x128xbf16>
    %cst_9 = arith.constant dense<0.000000e+00> : vector<128x128xf32>
    %7 = tpu.matmul %5, %6, %cst_9 {dimension_numbers = #tpu.dot_dimension_numbers<[1], [0], [0], [1], [0, 0, 1, 1], [], []>} : vector<128x128xbf16>, vector<128x128xbf16>, vector<128x128xf32> -> vector<128x128xf32>
    %8 = arith.addf %2, %7 : vector<128x128xf32>
    %c0_10 = arith.constant 0 : index
    %c0_11 = arith.constant 0 : index
    %9 = vector.load %arg6[%c0_10, %c0_11] : memref<1x128xf32, #tpu.memory_space<vmem>>, vector<1x128xf32>
    %10 = vector.broadcast %9 : vector<1x128xf32> to vector<128x128xf32>
    %11 = arith.mulf %8, %10 : vector<128x128xf32>
    %c0_12 = arith.constant 0 : index
    %c0_13 = arith.constant 0 : index
    %12 = vector.load %arg7[%c0_12, %c0_13] : memref<1x128xf32, #tpu.memory_space<vmem>>, vector<1x128xf32>
    %13 = vector.broadcast %12 : vector<1x128xf32> to vector<128x128xf32>
    %14 = arith.addf %11, %13 : vector<128x128xf32>
    %c0_14 = arith.constant 0 : index
    %c0_15 = arith.constant 0 : index
    %15 = vector.load %arg8[%c0_14, %c0_15] : memref<1x128xf32, #tpu.memory_space<vmem>>, vector<1x128xf32>
    %cst_16 = arith.constant 0.000000e+00 : f32
    %16 = vector.broadcast %cst_16 : f32 to vector<128x128xf32>
    %17 = arith.maximumf %14, %16 : vector<128x128xf32>
    %18 = vector.broadcast %15 : vector<1x128xf32> to vector<128x128xf32>
    %19 = arith.mulf %18, %17 : vector<128x128xf32>
    %cst_17 = arith.constant 1.000000e+00 : f32
    %20 = vector.broadcast %cst_17 : f32 to vector<1x128xf32>
    %21 = arith.subf %20, %15 : vector<1x128xf32>
    %22 = vector.broadcast %21 : vector<1x128xf32> to vector<128x128xf32>
    %23 = arith.mulf %22, %14 : vector<128x128xf32>
    %24 = arith.addf %19, %23 : vector<128x128xf32>
    %25 = arith.truncf %24 : vector<128x128xf32> to vector<128x128xbf16>
    %c0_18 = arith.constant 0 : index
    %c0_19 = arith.constant 0 : index
    %26 = vector.load %arg9[%c0_18, %c0_19] : memref<128x128xbf16, #tpu.memory_space<vmem>>, vector<128x128xbf16>
    tpu.vector_store %arg9[%c0_18, %c0_19], %25 {strides = array<i32>} : memref<128x128xbf16, #tpu.memory_space<vmem>>, vector<128x128xbf16>,
    return
  }
  func.func @transform_0(%arg0: i32) -> (i32, i32) {
    %c0_i32 = arith.constant 0 : i32
    %c0_i32_0 = arith.constant 0 : i32
    return %arg0, %c0_i32 : i32, i32
  }
  func.func @transform_1(%arg0: i32) -> (i32, i32) {
    %c0_i32 = arith.constant 0 : i32
    %c0_i32_0 = arith.constant 0 : i32
    return %arg0, %c0_i32 : i32, i32
  }
  func.func @transform_2(%arg0: i32) -> (i32, i32) {
    %c0_i32 = arith.constant 0 : i32
    %c0_i32_0 = arith.constant 0 : i32
    return %arg0, %c0_i32 : i32, i32
  }
  func.func @transform_3(%arg0: i32) -> (i32, i32) {
    %c0_i32 = arith.constant 0 : i32
    %c0_i32_0 = arith.constant 0 : i32
    %c0_i32_1 = arith.constant 0 : i32
    return %c0_i32, %c0_i32_0 : i32, i32
  }
  func.func @transform_4(%arg0: i32) -> (i32, i32) {
    %c0_i32 = arith.constant 0 : i32
    %c0_i32_0 = arith.constant 0 : i32
    %c0_i32_1 = arith.constant 0 : i32
    return %c0_i32, %c0_i32_0 : i32, i32
  }
  func.func @transform_5(%arg0: i32) -> (i32, i32) {
    %c0_i32 = arith.constant 0 : i32
    %c0_i32_0 = arith.constant 0 : i32
    %c0_i32_1 = arith.constant 0 : i32
    return %c0_i32, %c0_i32_0 : i32, i32
  }
  func.func @transform_6(%arg0: i32) -> (i32, i32) {
    %c0_i32 = arith.constant 0 : i32
    %c0_i32_0 = arith.constant 0 : i32
    %c0_i32_1 = arith.constant 0 : i32
    return %c0_i32, %c0_i32_0 : i32, i32
  }
  func.func @transform_7(%arg0: i32) -> (i32, i32) {
    %c0_i32 = arith.constant 0 : i32
    %c0_i32_0 = arith.constant 0 : i32
    %c0_i32_1 = arith.constant 0 : i32
    return %c0_i32, %c0_i32_0 : i32, i32
  }
  func.func @transform_8(%arg0: i32) -> (i32, i32) {
    %c0_i32 = arith.constant 0 : i32
    %c0_i32_0 = arith.constant 0 : i32
    return %arg0, %c0_i32 : i32, i32
  }
}

module attributes {stable_mosaic.version = 11 : i64} {
  func.func @kernel(%arg0: i32, %arg1: memref<128x256xbf16, #tpu.memory_space<vmem>>, %arg2: memref<256x128xbf16, #tpu.memory_space<vmem>>, %arg3: memref<1x128xf32, #tpu.memory_space<vmem>>, %arg4: memref<1x128xf32, #tpu.memory_space<vmem>>, %arg5: memref<1x128xf32, #tpu.memory_space<vmem>>, %arg6: memref<128x128xbf16, #tpu.memory_space<vmem>>) attributes {dimension_semantics = [#tpu.dimension_semantics<parallel>], iteration_bounds = array<i64: 1>, scalar_prefetch = 0 : i64, scratch_operands = 0 : i64, tpu.core_type = #tpu.core_type<tc>, window_params = [{transform_indices = @transform_0, window_bounds = array<i64: 128, 256>}, {pipeline_mode = #tpu.pipeline_mode<synchronous>, transform_indices = @transform_1, window_bounds = array<i64: 256, 128>}, {pipeline_mode = #tpu.pipeline_mode<synchronous>, transform_indices = @transform_2, window_bounds = array<i64: 1, 128>}, {pipeline_mode = #tpu.pipeline_mode<synchronous>, transform_indices = @transform_3, window_bounds = array<i64: 1, 128>}, {pipeline_mode = #tpu.pipeline_mode<synchronous>, transform_indices = @transform_4, window_bounds = array<i64: 1, 128>}, {transform_indices = @transform_5, window_bounds = array<i64: 128, 128>}]} {
    %c0 = arith.constant 0 : index
    %c0_0 = arith.constant 0 : index
    %0 = vector.load %arg1[%c0, %c0_0] : memref<128x256xbf16, #tpu.memory_space<vmem>>, vector<128x256xbf16>
    %c0_1 = arith.constant 0 : index
    %c0_2 = arith.constant 0 : index
    %1 = vector.load %arg2[%c0_1, %c0_2] : memref<256x128xbf16, #tpu.memory_space<vmem>>, vector<256x128xbf16>
    %cst = arith.constant dense<0.000000e+00> : vector<128x128xf32>
    %2 = tpu.matmul %0, %1, %cst {dimension_numbers = #tpu.dot_dimension_numbers<[1], [0], [0], [1], [0, 0, 1, 1], [], []>} : vector<128x256xbf16>, vector<256x128xbf16>, vector<128x128xf32> -> vector<128x128xf32>
    %c0_3 = arith.constant 0 : index
    %c0_4 = arith.constant 0 : index
    %3 = vector.load %arg3[%c0_3, %c0_4] : memref<1x128xf32, #tpu.memory_space<vmem>>, vector<1x128xf32>
    %4 = vector.broadcast %3 : vector<1x128xf32> to vector<128x128xf32>
    %5 = arith.mulf %2, %4 : vector<128x128xf32>
    %c0_5 = arith.constant 0 : index
    %c0_6 = arith.constant 0 : index
    %6 = vector.load %arg4[%c0_5, %c0_6] : memref<1x128xf32, #tpu.memory_space<vmem>>, vector<1x128xf32>
    %7 = vector.broadcast %6 : vector<1x128xf32> to vector<128x128xf32>
    %8 = arith.addf %5, %7 : vector<128x128xf32>
    %c0_7 = arith.constant 0 : index
    %c0_8 = arith.constant 0 : index
    %9 = vector.load %arg5[%c0_7, %c0_8] : memref<1x128xf32, #tpu.memory_space<vmem>>, vector<1x128xf32>
    %cst_9 = arith.constant 0.000000e+00 : f32
    %10 = vector.broadcast %cst_9 : f32 to vector<128x128xf32>
    %11 = arith.maximumf %8, %10 : vector<128x128xf32>
    %12 = vector.broadcast %9 : vector<1x128xf32> to vector<128x128xf32>
    %13 = arith.mulf %12, %11 : vector<128x128xf32>
    %cst_10 = arith.constant 1.000000e+00 : f32
    %14 = vector.broadcast %cst_10 : f32 to vector<1x128xf32>
    %15 = arith.subf %14, %9 : vector<1x128xf32>
    %16 = vector.broadcast %15 : vector<1x128xf32> to vector<128x128xf32>
    %17 = arith.mulf %16, %8 : vector<128x128xf32>
    %18 = arith.addf %13, %17 : vector<128x128xf32>
    %19 = arith.truncf %18 : vector<128x128xf32> to vector<128x128xbf16>
    %c0_11 = arith.constant 0 : index
    %c0_12 = arith.constant 0 : index
    %20 = vector.load %arg6[%c0_11, %c0_12] : memref<128x128xbf16, #tpu.memory_space<vmem>>, vector<128x128xbf16>
    tpu.vector_store %arg6[%c0_11, %c0_12], %19 {strides = array<i32>} : memref<128x128xbf16, #tpu.memory_space<vmem>>, vector<128x128xbf16>,
    return
  }
  func.func @transform_0(%arg0: i32) -> (i32, i32) {
    %c0_i32 = arith.constant 0 : i32
    %c0_i32_0 = arith.constant 0 : i32
    return %arg0, %c0_i32 : i32, i32
  }
  func.func @transform_1(%arg0: i32) -> (i32, i32) {
    %c0_i32 = arith.constant 0 : i32
    %c0_i32_0 = arith.constant 0 : i32
    %c0_i32_1 = arith.constant 0 : i32
    return %c0_i32, %c0_i32_0 : i32, i32
  }
  func.func @transform_2(%arg0: i32) -> (i32, i32) {
    %c0_i32 = arith.constant 0 : i32
    %c0_i32_0 = arith.constant 0 : i32
    %c0_i32_1 = arith.constant 0 : i32
    return %c0_i32, %c0_i32_0 : i32, i32
  }
  func.func @transform_3(%arg0: i32) -> (i32, i32) {
    %c0_i32 = arith.constant 0 : i32
    %c0_i32_0 = arith.constant 0 : i32
    %c0_i32_1 = arith.constant 0 : i32
    return %c0_i32, %c0_i32_0 : i32, i32
  }
  func.func @transform_4(%arg0: i32) -> (i32, i32) {
    %c0_i32 = arith.constant 0 : i32
    %c0_i32_0 = arith.constant 0 : i32
    %c0_i32_1 = arith.constant 0 : i32
    return %c0_i32, %c0_i32_0 : i32, i32
  }
  func.func @transform_5(%arg0: i32) -> (i32, i32) {
    %c0_i32 = arith.constant 0 : i32
    %c0_i32_0 = arith.constant 0 : i32
    return %arg0, %c0_i32 : i32, i32
  }
}

module attributes {stable_mosaic.version = 11 : i64} {
  func.func @kernel(%arg0: i32, %arg1: memref<128x128xbf16, #tpu.memory_space<vmem>>, %arg2: memref<128x128xbf16, #tpu.memory_space<vmem>>, %arg3: memref<1x128xf32, #tpu.memory_space<vmem>>, %arg4: memref<1x128xf32, #tpu.memory_space<vmem>>, %arg5: memref<1x128xf32, #tpu.memory_space<vmem>>, %arg6: memref<128x128xbf16, #tpu.memory_space<vmem>>, %arg7: memref<128x128xbf16, #tpu.memory_space<vmem>>) attributes {dimension_semantics = [#tpu.dimension_semantics<parallel>], iteration_bounds = array<i64: 1>, scalar_prefetch = 0 : i64, scratch_operands = 0 : i64, tpu.core_type = #tpu.core_type<tc>, window_params = [{transform_indices = @transform_0, window_bounds = array<i64: 128, 128>}, {pipeline_mode = #tpu.pipeline_mode<synchronous>, transform_indices = @transform_1, window_bounds = array<i64: 128, 128>}, {pipeline_mode = #tpu.pipeline_mode<synchronous>, transform_indices = @transform_2, window_bounds = array<i64: 1, 128>}, {pipeline_mode = #tpu.pipeline_mode<synchronous>, transform_indices = @transform_3, window_bounds = array<i64: 1, 128>}, {pipeline_mode = #tpu.pipeline_mode<synchronous>, transform_indices = @transform_4, window_bounds = array<i64: 1, 128>}, {transform_indices = @transform_5, window_bounds = array<i64: 128, 128>}, {transform_indices = @transform_6, window_bounds = array<i64: 128, 128>}]} {
    %c0 = arith.constant 0 : index
    %c0_0 = arith.constant 0 : index
    %0 = vector.load %arg1[%c0, %c0_0] : memref<128x128xbf16, #tpu.memory_space<vmem>>, vector<128x128xbf16>
    %c0_1 = arith.constant 0 : index
    %c0_2 = arith.constant 0 : index
    %1 = vector.load %arg2[%c0_1, %c0_2] : memref<128x128xbf16, #tpu.memory_space<vmem>>, vector<128x128xbf16>
    %cst = arith.constant dense<0.000000e+00> : vector<128x128xf32>
    %2 = tpu.matmul %0, %1, %cst {dimension_numbers = #tpu.dot_dimension_numbers<[1], [0], [0], [1], [0, 0, 1, 1], [], []>} : vector<128x128xbf16>, vector<128x128xbf16>, vector<128x128xf32> -> vector<128x128xf32>
    %c0_3 = arith.constant 0 : index
    %c0_4 = arith.constant 0 : index
    %3 = vector.load %arg3[%c0_3, %c0_4] : memref<1x128xf32, #tpu.memory_space<vmem>>, vector<1x128xf32>
    %4 = vector.broadcast %3 : vector<1x128xf32> to vector<128x128xf32>
    %5 = arith.mulf %2, %4 : vector<128x128xf32>
    %c0_5 = arith.constant 0 : index
    %c0_6 = arith.constant 0 : index
    %6 = vector.load %arg4[%c0_5, %c0_6] : memref<1x128xf32, #tpu.memory_space<vmem>>, vector<1x128xf32>
    %7 = vector.broadcast %6 : vector<1x128xf32> to vector<128x128xf32>
    %8 = arith.addf %5, %7 : vector<128x128xf32>
    %c0_7 = arith.constant 0 : index
    %c0_8 = arith.constant 0 : index
    %9 = vector.load %arg6[%c0_7, %c0_8] : memref<128x128xbf16, #tpu.memory_space<vmem>>, vector<128x128xbf16>
    %10 = arith.extf %9 : vector<128x128xbf16> to vector<128x128xf32>
    %11 = arith.addf %8, %10 : vector<128x128xf32>
    %c0_9 = arith.constant 0 : index
    %c0_10 = arith.constant 0 : index
    %12 = vector.load %arg5[%c0_9, %c0_10] : memref<1x128xf32, #tpu.memory_space<vmem>>, vector<1x128xf32>
    %cst_11 = arith.constant 0.000000e+00 : f32
    %13 = vector.broadcast %cst_11 : f32 to vector<128x128xf32>
    %14 = arith.maximumf %11, %13 : vector<128x128xf32>
    %15 = vector.broadcast %12 : vector<1x128xf32> to vector<128x128xf32>
    %16 = arith.mulf %15, %14 : vector<128x128xf32>
    %cst_12 = arith.constant 1.000000e+00 : f32
    %17 = vector.broadcast %cst_12 : f32 to vector<1x128xf32>
    %18 = arith.subf %17, %12 : vector<1x128xf32>
    %19 = vector.broadcast %18 : vector<1x128xf32> to vector<128x128xf32>
    %20 = arith.mulf %19, %11 : vector<128x128xf32>
    %21 = arith.addf %16, %20 : vector<128x128xf32>
    %22 = arith.truncf %21 : vector<128x128xf32> to vector<128x128xbf16>
    %c0_13 = arith.constant 0 : index
    %c0_14 = arith.constant 0 : index
    %23 = vector.load %arg7[%c0_13, %c0_14] : memref<128x128xbf16, #tpu.memory_space<vmem>>, vector<128x128xbf16>
    tpu.vector_store %arg7[%c0_13, %c0_14], %22 {strides = array<i32>} : memref<128x128xbf16, #tpu.memory_space<vmem>>, vector<128x128xbf16>,
    return
  }
  func.func @transform_0(%arg0: i32) -> (i32, i32) {
    %c0_i32 = arith.constant 0 : i32
    %c0_i32_0 = arith.constant 0 : i32
    return %arg0, %c0_i32 : i32, i32
  }
  func.func @transform_1(%arg0: i32) -> (i32, i32) {
    %c0_i32 = arith.constant 0 : i32
    %c0_i32_0 = arith.constant 0 : i32
    %c0_i32_1 = arith.constant 0 : i32
    return %c0_i32, %c0_i32_0 : i32, i32
  }
  func.func @transform_2(%arg0: i32) -> (i32, i32) {
    %c0_i32 = arith.constant 0 : i32
    %c0_i32_0 = arith.constant 0 : i32
    %c0_i32_1 = arith.constant 0 : i32
    return %c0_i32, %c0_i32_0 : i32, i32
  }
  func.func @transform_3(%arg0: i32) -> (i32, i32) {
    %c0_i32 = arith.constant 0 : i32
    %c0_i32_0 = arith.constant 0 : i32
    %c0_i32_1 = arith.constant 0 : i32
    return %c0_i32, %c0_i32_0 : i32, i32
  }
  func.func @transform_4(%arg0: i32) -> (i32, i32) {
    %c0_i32 = arith.constant 0 : i32
    %c0_i32_0 = arith.constant 0 : i32
    %c0_i32_1 = arith.constant 0 : i32
    return %c0_i32, %c0_i32_0 : i32, i32
  }
  func.func @transform_5(%arg0: i32) -> (i32, i32) {
    %c0_i32 = arith.constant 0 : i32
    %c0_i32_0 = arith.constant 0 : i32
    return %arg0, %c0_i32 : i32, i32
  }
  func.func @transform_6(%arg0: i32) -> (i32, i32) {
    %c0_i32 = arith.constant 0 : i32
    %c0_i32_0 = arith.constant 0 : i32
    return %arg0, %c0_i32 : i32, i32
  }
}

module attributes {stable_mosaic.version = 11 : i64} {
  func.func @kernel(%arg0: i32, %arg1: memref<128x128xbf16, #tpu.memory_space<vmem>>, %arg2: memref<128x128xbf16, #tpu.memory_space<vmem>>, %arg3: memref<128x128xbf16, #tpu.memory_space<vmem>>, %arg4: memref<128x128xbf16, #tpu.memory_space<vmem>>, %arg5: memref<128x128xbf16, #tpu.memory_space<vmem>>, %arg6: memref<1x128xf32, #tpu.memory_space<vmem>>, %arg7: memref<1x128xf32, #tpu.memory_space<vmem>>, %arg8: memref<1x128xf32, #tpu.memory_space<vmem>>, %arg9: memref<128x128xbf16, #tpu.memory_space<vmem>>, %arg10: memref<128x128xbf16, #tpu.memory_space<vmem>>) attributes {dimension_semantics = [#tpu.dimension_semantics<parallel>], iteration_bounds = array<i64: 1>, scalar_prefetch = 0 : i64, scratch_operands = 0 : i64, tpu.core_type = #tpu.core_type<tc>, window_params = [{transform_indices = @transform_0, window_bounds = array<i64: 128, 128>}, {transform_indices = @transform_1, window_bounds = array<i64: 128, 128>}, {transform_indices = @transform_2, window_bounds = array<i64: 128, 128>}, {pipeline_mode = #tpu.pipeline_mode<synchronous>, transform_indices = @transform_3, window_bounds = array<i64: 128, 128>}, {pipeline_mode = #tpu.pipeline_mode<synchronous>, transform_indices = @transform_4, window_bounds = array<i64: 128, 128>}, {pipeline_mode = #tpu.pipeline_mode<synchronous>, transform_indices = @transform_5, window_bounds = array<i64: 1, 128>}, {pipeline_mode = #tpu.pipeline_mode<synchronous>, transform_indices = @transform_6, window_bounds = array<i64: 1, 128>}, {pipeline_mode = #tpu.pipeline_mode<synchronous>, transform_indices = @transform_7, window_bounds = array<i64: 1, 128>}, {transform_indices = @transform_8, window_bounds = array<i64: 128, 128>}, {transform_indices = @transform_9, window_bounds = array<i64: 128, 128>}]} {
    %c0 = arith.constant 0 : index
    %c0_0 = arith.constant 0 : index
    %0 = vector.load %arg1[%c0, %c0_0] : memref<128x128xbf16, #tpu.memory_space<vmem>>, vector<128x128xbf16>
    %c0_1 = arith.constant 0 : index
    %c0_2 = arith.constant 0 : index
    %1 = vector.load %arg4[%c0_1, %c0_2] : memref<128x128xbf16, #tpu.memory_space<vmem>>, vector<128x128xbf16>
    %cst = arith.constant dense<0.000000e+00> : vector<128x128xf32>
    %2 = tpu.matmul %0, %1, %cst {dimension_numbers = #tpu.dot_dimension_numbers<[1], [0], [0], [1], [0, 0, 1, 1], [], []>} : vector<128x128xbf16>, vector<128x128xbf16>, vector<128x128xf32> -> vector<128x128xf32>
    %c0_3 = arith.constant 0 : index
    %c0_4 = arith.constant 0 : index
    %3 = vector.load %arg2[%c0_3, %c0_4] : memref<128x128xbf16, #tpu.memory_space<vmem>>, vector<128x128xbf16>
    %c0_5 = arith.constant 0 : index
    %c0_6 = arith.constant 0 : index
    %4 = vector.load %arg3[%c0_5, %c0_6] : memref<128x128xbf16, #tpu.memory_space<vmem>>, vector<128x128xbf16>
    %5 = arith.addf %3, %4 : vector<128x128xbf16>
    %c0_7 = arith.constant 0 : index
    %c0_8 = arith.constant 0 : index
    %6 = vector.load %arg5[%c0_7, %c0_8] : memref<128x128xbf16, #tpu.memory_space<vmem>>, vector<128x128xbf16>
    %cst_9 = arith.constant dense<0.000000e+00> : vector<128x128xf32>
    %7 = tpu.matmul %5, %6, %cst_9 {dimension_numbers = #tpu.dot_dimension_numbers<[1], [0], [0], [1], [0, 0, 1, 1], [], []>} : vector<128x128xbf16>, vector<128x128xbf16>, vector<128x128xf32> -> vector<128x128xf32>
    %8 = arith.addf %2, %7 : vector<128x128xf32>
    %c0_10 = arith.constant 0 : index
    %c0_11 = arith.constant 0 : index
    %9 = vector.load %arg6[%c0_10, %c0_11] : memref<1x128xf32, #tpu.memory_space<vmem>>, vector<1x128xf32>
    %10 = vector.broadcast %9 : vector<1x128xf32> to vector<128x128xf32>
    %11 = arith.mulf %8, %10 : vector<128x128xf32>
    %c0_12 = arith.constant 0 : index
    %c0_13 = arith.constant 0 : index
    %12 = vector.load %arg7[%c0_12, %c0_13] : memref<1x128xf32, #tpu.memory_space<vmem>>, vector<1x128xf32>
    %13 = vector.broadcast %12 : vector<1x128xf32> to vector<128x128xf32>
    %14 = arith.addf %11, %13 : vector<128x128xf32>
    %c0_14 = arith.constant 0 : index
    %c0_15 = arith.constant 0 : index
    %15 = vector.load %arg9[%c0_14, %c0_15] : memref<128x128xbf16, #tpu.memory_space<vmem>>, vector<128x128xbf16>
    %16 = arith.extf %15 : vector<128x128xbf16> to vector<128x128xf32>
    %17 = arith.addf %14, %16 : vector<128x128xf32>
    %c0_16 = arith.constant 0 : index
    %c0_17 = arith.constant 0 : index
    %18 = vector.load %arg8[%c0_16, %c0_17] : memref<1x128xf32, #tpu.memory_space<vmem>>, vector<1x128xf32>
    %cst_18 = arith.constant 0.000000e+00 : f32
    %19 = vector.broadcast %cst_18 : f32 to vector<128x128xf32>
    %20 = arith.maximumf %17, %19 : vector<128x128xf32>
    %21 = vector.broadcast %18 : vector<1x128xf32> to vector<128x128xf32>
    %22 = arith.mulf %21, %20 : vector<128x128xf32>
    %cst_19 = arith.constant 1.000000e+00 : f32
    %23 = vector.broadcast %cst_19 : f32 to vector<1x128xf32>
    %24 = arith.subf %23, %18 : vector<1x128xf32>
    %25 = vector.broadcast %24 : vector<1x128xf32> to vector<128x128xf32>
    %26 = arith.mulf %25, %17 : vector<128x128xf32>
    %27 = arith.addf %22, %26 : vector<128x128xf32>
    %28 = arith.truncf %27 : vector<128x128xf32> to vector<128x128xbf16>
    %c0_20 = arith.constant 0 : index
    %c0_21 = arith.constant 0 : index
    %29 = vector.load %arg10[%c0_20, %c0_21] : memref<128x128xbf16, #tpu.memory_space<vmem>>, vector<128x128xbf16>
    tpu.vector_store %arg10[%c0_20, %c0_21], %28 {strides = array<i32>} : memref<128x128xbf16, #tpu.memory_space<vmem>>, vector<128x128xbf16>,
    return
  }
  func.func @transform_0(%arg0: i32) -> (i32, i32) {
    %c0_i32 = arith.constant 0 : i32
    %c0_i32_0 = arith.constant 0 : i32
    return %arg0, %c0_i32 : i32, i32
  }
  func.func @transform_1(%arg0: i32) -> (i32, i32) {
    %c0_i32 = arith.constant 0 : i32
    %c0_i32_0 = arith.constant 0 : i32
    return %arg0, %c0_i32 : i32, i32
  }
  func.func @transform_2(%arg0: i32) -> (i32, i32) {
    %c0_i32 = arith.constant 0 : i32
    %c0_i32_0 = arith.constant 0 : i32
    return %arg0, %c0_i32 : i32, i32
  }
  func.func @transform_3(%arg0: i32) -> (i32, i32) {
    %c0_i32 = arith.constant 0 : i32
    %c0_i32_0 = arith.constant 0 : i32
    %c0_i32_1 = arith.constant 0 : i32
    return %c0_i32, %c0_i32_0 : i32, i32
  }
  func.func @transform_4(%arg0: i32) -> (i32, i32) {
    %c0_i32 = arith.constant 0 : i32
    %c0_i32_0 = arith.constant 0 : i32
    %c0_i32_1 = arith.constant 0 : i32
    return %c0_i32, %c0_i32_0 : i32, i32
  }
  func.func @transform_5(%arg0: i32) -> (i32, i32) {
    %c0_i32 = arith.constant 0 : i32
    %c0_i32_0 = arith.constant 0 : i32
    %c0_i32_1 = arith.constant 0 : i32
    return %c0_i32, %c0_i32_0 : i32, i32
  }
  func.func @transform_6(%arg0: i32) -> (i32, i32) {
    %c0_i32 = arith.constant 0 : i32
    %c0_i32_0 = arith.constant 0 : i32
    %c0_i32_1 = arith.constant 0 : i32
    return %c0_i32, %c0_i32_0 : i32, i32
  }
  func.func @transform_7(%arg0: i32) -> (i32, i32) {
    %c0_i32 = arith.constant 0 : i32
    %c0_i32_0 = arith.constant 0 : i32
    %c0_i32_1 = arith.constant 0 : i32
    return %c0_i32, %c0_i32_0 : i32, i32
  }
  func.func @transform_8(%arg0: i32) -> (i32, i32) {
    %c0_i32 = arith.constant 0 : i32
    %c0_i32_0 = arith.constant 0 : i32
    return %arg0, %c0_i32 : i32, i32
  }
  func.func @transform_9(%arg0: i32) -> (i32, i32) {
    %c0_i32 = arith.constant 0 : i32
    %c0_i32_0 = arith.constant 0 : i32
    return %arg0, %c0_i32 : i32, i32
  }
}

</mosaic_0001>

<llo_original>
// kernel: _lambda_.12
$region0: #{_lambda_.12}
  #allocation0 [shape = 'u32[]', space=smem, size = 0x4, offset = 0x4, fixed_abs, tag = 'smem constant byte address 0x4 - core index']
  #allocation1 [shape = 'u32[144,128]{1,0:T(1,128)}', space=vmem, size = 0x12000, scoped, tag = 'internal scratch']
  %s0 = inlined_call_operand.vmem [shape: bf16[128,128], index: 0, kind: input, shape index: {}]
  %s1 = inlined_call_operand.vmem [shape: bf16[128,128], index: 1, kind: input, shape index: {}]
  %s2 = inlined_call_operand.vmem [shape: f32[1,128], index: 2, kind: input, shape index: {}]
  %s3 = inlined_call_operand.vmem [shape: f32[1,128], index: 3, kind: input, shape index: {}]
  %s4 = inlined_call_operand.vmem [shape: f32[1,128], index: 4, kind: input, shape index: {}]
  %s5 = inlined_call_operand.vmem [shape: bf16[128,128], index: 5, kind: output, shape index: {}]
  %s6 = sld [smem:[#allocation0]]
  $region30: #{_lambda_.12} parent=0
    _
  %s8 = ssub.s32 1, %s6
  %s9 = scalar_select 0, %s8, %s6
  // Predicated region
  $region2: #{_lambda_.12} parent=0 // pred_check
    _
  $region3: #{_lambda_.12} parent=0 // pred_check_branch
    %11 = sbr.rel (0) target = $region5
  $region4: #{_lambda_.12} parent=0 // pred_region
    _
  $region5: #{_lambda_.12} parent=0 // pred_fallthru
    _
  // Predicated region
  $region6: #{_lambda_.12} parent=0 // pred_check
    _
  $region7: #{_lambda_.12} parent=0 // pred_check_branch
    %13 = sbr.rel (0) target = $region9
  $region8: #{_lambda_.12} parent=0 // pred_region
    _
  $region9: #{_lambda_.12} parent=0 // pred_fallthru
    _
  // Predicated region
  $region10: #{_lambda_.12} parent=0 // pred_check
    _
  $region11: #{_lambda_.12} parent=0 // pred_check_branch
    %15 = sbr.rel (0) target = $region13
  $region12: #{_lambda_.12} parent=0 // pred_region
    _
  $region13: #{_lambda_.12} parent=0 // pred_fallthru
    _
  // Predicated region
  $region14: #{_lambda_.12} parent=0 // pred_check
    _
  $region15: #{_lambda_.12} parent=0 // pred_check_branch
    %17 = sbr.rel (0) target = $region17
  $region16: #{_lambda_.12} parent=0 // pred_region
    _
  $region17: #{_lambda_.12} parent=0 // pred_fallthru
    _
  // Predicated region
  $region18: #{_lambda_.12} parent=0 // pred_check
    _
  $region19: #{_lambda_.12} parent=0 // pred_check_branch
    %19 = sbr.rel (0) target = $region21
  $region20: #{_lambda_.12} parent=0 // pred_region
    _
  $region21: #{_lambda_.12} parent=0 // pred_fallthru
    _
  %v21 = vld [vmem:[%s0] sm:$0xf]
  %v22 = vld [vmem:[%s0 + $0x4] sm:$0xf]
  %v23 = vld [vmem:[%s0 + $0x8] sm:$0xf]
  %v24 = vld [vmem:[%s0 + $0xc] sm:$0xf]
  %v25 = vld [vmem:[%s0 + $0x10] sm:$0xf]
  %v26 = vld [vmem:[%s0 + $0x14] sm:$0xf]
  %v27 = vld [vmem:[%s0 + $0x18] sm:$0xf]
  %v28 = vld [vmem:[%s0 + $0x1c] sm:$0xf]
  %v29 = vld [vmem:[%s0 + $0x20] sm:$0xf]
  %v30 = vld [vmem:[%s0 + $0x24] sm:$0xf]
  %v31 = vld [vmem:[%s0 + $0x28] sm:$0xf]
  %v32 = vld [vmem:[%s0 + $0x2c] sm:$0xf]
  %v33 = vld [vmem:[%s0 + $0x30] sm:$0xf]
  %v34 = vld [vmem:[%s0 + $0x34] sm:$0xf]
  %v35 = vld [vmem:[%s0 + $0x38] sm:$0xf]
  %v36 = vld [vmem:[%s0 + $0x3c] sm:$0xf]
  %v37 = vld [vmem:[%s1] sm:$0xf]
  %v38 = vld [vmem:[%s1 + $0x4] sm:$0xf]
  %v39 = vld [vmem:[%s1 + $0x8] sm:$0xf]
  %v40 = vld [vmem:[%s1 + $0xc] sm:$0xf]
  %v41 = vld [vmem:[%s1 + $0x10] sm:$0xf]
  %v42 = vld [vmem:[%s1 + $0x14] sm:$0xf]
  %v43 = vld [vmem:[%s1 + $0x18] sm:$0xf]
  %v44 = vld [vmem:[%s1 + $0x1c] sm:$0xf]
  %v45 = vld [vmem:[%s1 + $0x20] sm:$0xf]
  %v46 = vld [vmem:[%s1 + $0x24] sm:$0xf]
  %v47 = vld [vmem:[%s1 + $0x28] sm:$0xf]
  %v48 = vld [vmem:[%s1 + $0x2c] sm:$0xf]
  %v49 = vld [vmem:[%s1 + $0x30] sm:$0xf]
  %v50 = vld [vmem:[%s1 + $0x34] sm:$0xf]
  %v51 = vld [vmem:[%s1 + $0x38] sm:$0xf]
  %v52 = vld [vmem:[%s1 + $0x3c] sm:$0xf]
  %v69 = vunpack.c.l.b16 %v21
  %v70 = vunpack.c.l.b16 %v22
  %v71 = vunpack.c.l.b16 %v23
  %v72 = vunpack.c.l.b16 %v24
  %v73 = vunpack.c.l.b16 %v25
  %v74 = vunpack.c.l.b16 %v26
  %v75 = vunpack.c.l.b16 %v27
  %v76 = vunpack.c.l.b16 %v28
  %v77 = vunpack.c.l.b16 %v29
  %v78 = vunpack.c.l.b16 %v30
  %v79 = vunpack.c.l.b16 %v31
  %v80 = vunpack.c.l.b16 %v32
  %v81 = vunpack.c.l.b16 %v33
  %v82 = vunpack.c.l.b16 %v34
  %v83 = vunpack.c.l.b16 %v35
  %v84 = vunpack.c.l.b16 %v36
  %v85 = vpack.c.b16 %v70, %v69
  %v86 = vpack.c.b16 %v72, %v71
  %v87 = vpack.c.b16 %v74, %v73
  %v88 = vpack.c.b16 %v76, %v75
  %v89 = vpack.c.b16 %v78, %v77
  %v90 = vpack.c.b16 %v80, %v79
  %v91 = vpack.c.b16 %v82, %v81
  %v92 = vpack.c.b16 %v84, %v83
  %v117 = vunpack.c.l.b16 %v37
  %v118 = vunpack.c.l.b16 %v38
  %v119 = vunpack.c.l.b16 %v39
  %v120 = vunpack.c.l.b16 %v40
  %v121 = vunpack.c.l.b16 %v41
  %v122 = vunpack.c.l.b16 %v42
  %v123 = vunpack.c.l.b16 %v43
  %v124 = vunpack.c.l.b16 %v44
  %v125 = vunpack.c.l.b16 %v45
  %v126 = vunpack.c.l.b16 %v46
  %v127 = vunpack.c.l.b16 %v47
  %v128 = vunpack.c.l.b16 %v48
  %v129 = vunpack.c.l.b16 %v49
  %v130 = vunpack.c.l.b16 %v50
  %v131 = vunpack.c.l.b16 %v51
  %v132 = vunpack.c.l.b16 %v52
  %v133 = vpack.c.b16 %v118, %v117
  %v134 = vpack.c.b16 %v120, %v119
  %v135 = vpack.c.b16 %v122, %v121
  %v136 = vpack.c.b16 %v124, %v123
  %v137 = vpack.c.b16 %v126, %v125
  %v138 = vpack.c.b16 %v128, %v127
  %v139 = vpack.c.b16 %v130, %v129
  %v140 = vpack.c.b16 %v132, %v131
  %149 = vmatprep.subr.bf16.mxu0 0
  %150 = vmatpush1.bf16.msra.mxu0 %v140
  %151 = vmatprep.subr.bf16.mxu0 0
  %152 = vmatpush1.bf16.msra.mxu0 %v139
  %153 = vmatprep.subr.bf16.mxu0 0
  %154 = vmatpush1.bf16.msra.mxu0 %v138
  %155 = vmatprep.subr.bf16.mxu0 0
  %156 = vmatpush1.bf16.msra.mxu0 %v137
  %157 = vmatprep.subr.bf16.mxu0 0
  %158 = vmatpush1.bf16.msra.mxu0 %v136
  %159 = vmatprep.subr.bf16.mxu0 0
  %160 = vmatpush1.bf16.msra.mxu0 %v135
  %161 = vmatprep.subr.bf16.mxu0 0
  %162 = vmatpush1.bf16.msra.mxu0 %v134
  %163 = vmatprep.subr.bf16.mxu0 0
  %164 = vmatpush1.bf16.msra.mxu0 %v133
  %165 = vmatprep.subr.bf16.mxu0 0
  %166 = vmatpush2.bf16.msra.mxu0 0
  %167 = vmatprep.subr.bf16.mxu0 0
  %168 = vmatpush2.bf16.msra.mxu0 0
  %169 = vmatprep.subr.bf16.mxu0 0
  %170 = vmatpush2.bf16.msra.mxu0 0
  %171 = vmatprep.subr.bf16.mxu0 0
  %172 = vmatpush2.bf16.msra.mxu0 0
  %173 = vmatprep.subr.bf16.mxu0 0
  %174 = vmatpush2.bf16.msra.mxu0 0
  %175 = vmatprep.subr.bf16.mxu0 0
  %176 = vmatpush2.bf16.msra.mxu0 0
  %177 = vmatprep.subr.bf16.mxu0 0
  %178 = vmatpush2.bf16.msra.mxu0 0
  %179 = vmatprep.subr.bf16.mxu0 0
  %180 = vmatpush2.bf16.msra.mxu0 0
  %181 = vmatprep.mubr.bf16.mxu0 0
  %182 = vmatmul.mubr.bf16.gmra.mxu0 %v85
  %v183 = vpop.f32.mrf.mxu0
  %v184 = vadd.f32 0.0, %v183
  %v185 = vpop.f32.mrf.mxu0
  %v186 = vpop.f32.mrf.mxu0
  %v187 = vadd.f32 0.0, %v186
  %v188 = vpop.f32.mrf.mxu0
  %189 = vmatprep.mubr.bf16.mxu0 0
  %190 = vmatmul.mubr.bf16.gmra.mxu0 %v86
  %v191 = vpop.f32.mrf.mxu0
  %v192 = vadd.f32 0.0, %v191
  %v193 = vpop.f32.mrf.mxu0
  %v194 = vpop.f32.mrf.mxu0
  %v195 = vadd.f32 0.0, %v194
  %v196 = vpop.f32.mrf.mxu0
  %197 = vmatprep.mubr.bf16.mxu0 0
  %198 = vmatmul.mubr.bf16.gmra.mxu0 %v87
  %v199 = vpop.f32.mrf.mxu0
  %v200 = vadd.f32 0.0, %v199
  %v201 = vpop.f32.mrf.mxu0
  %v202 = vpop.f32.mrf.mxu0
  %v203 = vadd.f32 0.0, %v202
  %v204 = vpop.f32.mrf.mxu0
  %205 = vmatprep.mubr.bf16.mxu0 0
  %206 = vmatmul.mubr.bf16.gmra.mxu0 %v88
  %v207 = vpop.f32.mrf.mxu0
  %v208 = vadd.f32 0.0, %v207
  %v209 = vpop.f32.mrf.mxu0
  %v210 = vpop.f32.mrf.mxu0
  %v211 = vadd.f32 0.0, %v210
  %v212 = vpop.f32.mrf.mxu0
  %213 = vmatprep.mubr.bf16.mxu0 0
  %214 = vmatmul.mubr.bf16.gmra.mxu0 %v89
  %v215 = vpop.f32.mrf.mxu0
  %v216 = vadd.f32 0.0, %v215
  %v217 = vpop.f32.mrf.mxu0
  %v218 = vpop.f32.mrf.mxu0
  %v219 = vadd.f32 0.0, %v218
  %v220 = vpop.f32.mrf.mxu0
  %221 = vmatprep.mubr.bf16.mxu0 0
  %222 = vmatmul.mubr.bf16.gmra.mxu0 %v90
  %v223 = vpop.f32.mrf.mxu0
  %v224 = vadd.f32 0.0, %v223
  %v225 = vpop.f32.mrf.mxu0
  %v226 = vpop.f32.mrf.mxu0
  %v227 = vadd.f32 0.0, %v226
  %v228 = vpop.f32.mrf.mxu0
  %229 = vmatprep.mubr.bf16.mxu0 0
  %230 = vmatmul.mubr.bf16.gmra.mxu0 %v91
  %v231 = vpop.f32.mrf.mxu0
  %v232 = vadd.f32 0.0, %v231
  %v233 = vpop.f32.mrf.mxu0
  %v234 = vpop.f32.mrf.mxu0
  %v235 = vadd.f32 0.0, %v234
  %v236 = vpop.f32.mrf.mxu0
  %237 = vmatprep.mubr.bf16.mxu0 0
  %238 = vmatmul.mubr.bf16.gmra.mxu0 %v92
  %v239 = vpop.f32.mrf.mxu0
  %v240 = vadd.f32 0.0, %v239
  %v241 = vpop.f32.mrf.mxu0
  %v242 = vpop.f32.mrf.mxu0
  %v243 = vadd.f32 0.0, %v242
  %v244 = vpop.f32.mrf.mxu0
  %245 = vdwg.mxu0
  %v246 = vld [vmem:[%s2] sm:$0x1]
  %v248 = vlaneseq
  %v249 = vshrl.u32 %v248, 7
  %v250 = vsub.s32 0, %v249
  %v251 = vrot.slane %v246, %v250
  %v253 = vmul.f32 %v184, %v251
  %v254 = vmul.f32 %v187, %v251
  %v255 = vmul.f32 %v192, %v251
  %v256 = vmul.f32 %v195, %v251
  %v257 = vmul.f32 %v200, %v251
  %v258 = vmul.f32 %v203, %v251
  %v259 = vmul.f32 %v208, %v251
  %v260 = vmul.f32 %v211, %v251
  %v261 = vmul.f32 %v216, %v251
  %v262 = vmul.f32 %v219, %v251
  %v263 = vmul.f32 %v224, %v251
  %v264 = vmul.f32 %v227, %v251
  %v265 = vmul.f32 %v232, %v251
  %v266 = vmul.f32 %v235, %v251
  %v267 = vmul.f32 %v240, %v251
  %v268 = vmul.f32 %v243, %v251
  %v269 = vld [vmem:[%s3] sm:$0x1]
  %v271 = vlaneseq
  %v272 = vshrl.u32 %v271, 7
  %v273 = vsub.s32 0, %v272
  %v274 = vrot.slane %v269, %v273
  %v276 = vadd.f32 %v253, %v274
  %v277 = vadd.f32 %v254, %v274
  %v278 = vadd.f32 %v255, %v274
  %v279 = vadd.f32 %v256, %v274
  %v280 = vadd.f32 %v257, %v274
  %v281 = vadd.f32 %v258, %v274
  %v282 = vadd.f32 %v259, %v274
  %v283 = vadd.f32 %v260, %v274
  %v284 = vadd.f32 %v261, %v274
  %v285 = vadd.f32 %v262, %v274
  %v286 = vadd.f32 %v263, %v274
  %v287 = vadd.f32 %v264, %v274
  %v288 = vadd.f32 %v265, %v274
  %v289 = vadd.f32 %v266, %v274
  %v290 = vadd.f32 %v267, %v274
  %v291 = vadd.f32 %v268, %v274
  %v292 = vld [vmem:[%s4] sm:$0x1]
  %v293 = vmax.f32 %v276, 0.0
  %v294 = vmax.f32 %v277, 0.0
  %v295 = vmax.f32 %v278, 0.0
  %v296 = vmax.f32 %v279, 0.0
  %v297 = vmax.f32 %v280, 0.0
  %v298 = vmax.f32 %v281, 0.0
  %v299 = vmax.f32 %v282, 0.0
  %v300 = vmax.f32 %v283, 0.0
  %v301 = vmax.f32 %v284, 0.0
  %v302 = vmax.f32 %v285, 0.0
  %v303 = vmax.f32 %v286, 0.0
  %v304 = vmax.f32 %v287, 0.0
  %v305 = vmax.f32 %v288, 0.0
  %v306 = vmax.f32 %v289, 0.0
  %v307 = vmax.f32 %v290, 0.0
  %v308 = vmax.f32 %v291, 0.0
  %v310 = vlaneseq
  %v311 = vshrl.u32 %v310, 7
  %v312 = vsub.s32 0, %v311
  %v313 = vrot.slane %v292, %v312
  %v315 = vmul.f32 %v313, %v293
  %v316 = vmul.f32 %v313, %v294
  %v317 = vmul.f32 %v313, %v295
  %v318 = vmul.f32 %v313, %v296
  %v319 = vmul.f32 %v313, %v297
  %v320 = vmul.f32 %v313, %v298
  %v321 = vmul.f32 %v313, %v299
  %v322 = vmul.f32 %v313, %v300
  %v323 = vmul.f32 %v313, %v301
  %v324 = vmul.f32 %v313, %v302
  %v325 = vmul.f32 %v313, %v303
  %v326 = vmul.f32 %v313, %v304
  %v327 = vmul.f32 %v313, %v305
  %v328 = vmul.f32 %v313, %v306
  %v329 = vmul.f32 %v313, %v307
  %v330 = vmul.f32 %v313, %v308
  %v331 = vsub.f32 1.0, %v292
  %v333 = vlaneseq
  %v334 = vshrl.u32 %v333, 7
  %v335 = vsub.s32 0, %v334
  %v336 = vrot.slane %v331, %v335
  %v338 = vmul.f32 %v336, %v276
  %v339 = vmul.f32 %v336, %v277
  %v340 = vmul.f32 %v336, %v278
  %v341 = vmul.f32 %v336, %v279
  %v342 = vmul.f32 %v336, %v280
  %v343 = vmul.f32 %v336, %v281
  %v344 = vmul.f32 %v336, %v282
  %v345 = vmul.f32 %v336, %v283
  %v346 = vmul.f32 %v336, %v284
  %v347 = vmul.f32 %v336, %v285
  %v348 = vmul.f32 %v336, %v286
  %v349 = vmul.f32 %v336, %v287
  %v350 = vmul.f32 %v336, %v288
  %v351 = vmul.f32 %v336, %v289
  %v352 = vmul.f32 %v336, %v290
  %v353 = vmul.f32 %v336, %v291
  %v354 = vadd.f32 %v315, %v338
  %v355 = vadd.f32 %v316, %v339
  %v356 = vadd.f32 %v317, %v340
  %v357 = vadd.f32 %v318, %v341
  %v358 = vadd.f32 %v319, %v342
  %v359 = vadd.f32 %v320, %v343
  %v360 = vadd.f32 %v321, %v344
  %v361 = vadd.f32 %v322, %v345
  %v362 = vadd.f32 %v323, %v346
  %v363 = vadd.f32 %v324, %v347
  %v364 = vadd.f32 %v325, %v348
  %v365 = vadd.f32 %v326, %v349
  %v366 = vadd.f32 %v327, %v350
  %v367 = vadd.f32 %v328, %v351
  %v368 = vadd.f32 %v329, %v352
  %v369 = vadd.f32 %v330, %v353
  %v370 = vpack.c.bf16 %v355, %v354
  %v371 = vpack.c.bf16 %v357, %v356
  %v372 = vpack.c.bf16 %v359, %v358
  %v373 = vpack.c.bf16 %v361, %v360
  %v374 = vpack.c.bf16 %v363, %v362
  %v375 = vpack.c.bf16 %v365, %v364
  %v376 = vpack.c.bf16 %v367, %v366
  %v377 = vpack.c.bf16 %v369, %v368
  %v386 = vunpack.c.l.b16 %v370
  %v387 = vunpack.c.h.b16 %v370
  %v388 = vunpack.c.l.b16 %v371
  %v389 = vunpack.c.h.b16 %v371
  %v390 = vunpack.c.l.b16 %v372
  %v391 = vunpack.c.h.b16 %v372
  %v392 = vunpack.c.l.b16 %v373
  %v393 = vunpack.c.h.b16 %v373
  %v394 = vunpack.c.l.b16 %v374
  %v395 = vunpack.c.h.b16 %v374
  %v396 = vunpack.c.l.b16 %v375
  %v397 = vunpack.c.h.b16 %v375
  %v398 = vunpack.c.l.b16 %v376
  %v399 = vunpack.c.h.b16 %v376
  %v400 = vunpack.c.l.b16 %v377
  %v401 = vunpack.c.h.b16 %v377
  %v402 = vpack.c.b16 %v386, %v386
  %v403 = vpack.c.b16 %v387, %v387
  %v404 = vpack.c.b16 %v388, %v388
  %v405 = vpack.c.b16 %v389, %v389
  %v406 = vpack.c.b16 %v390, %v390
  %v407 = vpack.c.b16 %v391, %v391
  %v408 = vpack.c.b16 %v392, %v392
  %v409 = vpack.c.b16 %v393, %v393
  %v410 = vpack.c.b16 %v394, %v394
  %v411 = vpack.c.b16 %v395, %v395
  %v412 = vpack.c.b16 %v396, %v396
  %v413 = vpack.c.b16 %v397, %v397
  %v414 = vpack.c.b16 %v398, %v398
  %v415 = vpack.c.b16 %v399, %v399
  %v416 = vpack.c.b16 %v400, %v400
  %v417 = vpack.c.b16 %v401, %v401
  %434 = vst [vmem:[%s5] sm:$0xf] %v402
  %435 = vst [vmem:[%s5 + $0x4] sm:$0xf] %v403
  %436 = vst [vmem:[%s5 + $0x8] sm:$0xf] %v404
  %437 = vst [vmem:[%s5 + $0xc] sm:$0xf] %v405
  %438 = vst [vmem:[%s5 + $0x10] sm:$0xf] %v406
  %439 = vst [vmem:[%s5 + $0x14] sm:$0xf] %v407
  %440 = vst [vmem:[%s5 + $0x18] sm:$0xf] %v408
  %441 = vst [vmem:[%s5 + $0x1c] sm:$0xf] %v409
  %442 = vst [vmem:[%s5 + $0x20] sm:$0xf] %v410
  %443 = vst [vmem:[%s5 + $0x24] sm:$0xf] %v411
  %444 = vst [vmem:[%s5 + $0x28] sm:$0xf] %v412
  %445 = vst [vmem:[%s5 + $0x2c] sm:$0xf] %v413
  %446 = vst [vmem:[%s5 + $0x30] sm:$0xf] %v414
  %447 = vst [vmem:[%s5 + $0x34] sm:$0xf] %v415
  %448 = vst [vmem:[%s5 + $0x38] sm:$0xf] %v416
  %449 = vst [vmem:[%s5 + $0x3c] sm:$0xf] %v417
  // Predicated region
  $region22: #{_lambda_.12} parent=0 // pred_check
    _
  $region23: #{_lambda_.12} parent=0 // pred_check_branch
    %451 = sbr.rel (0) target = $region25
  $region24: #{_lambda_.12} parent=0 // pred_region
    _
  $region25: #{_lambda_.12} parent=0 // pred_fallthru
    _
  // Predicated region
  $region26: #{_lambda_.12} parent=0 // pred_check
    _
  $region27: #{_lambda_.12} parent=0 // pred_check_branch
    %453 = sbr.rel (0) target = $region29
  $region28: #{_lambda_.12} parent=0 // pred_region
    _
  $region29: #{_lambda_.12} parent=0 // pred_fallthru
    _

// kernel: _lambda_.14
$region0: #{_lambda_.14}
  #allocation0 [shape = 'u32[]', space=smem, size = 0x4, offset = 0x4, fixed_abs, tag = 'smem constant byte address 0x4 - core index']
  #allocation1 [shape = 'u32[144,128]{1,0:T(1,128)}', space=vmem, size = 0x12000, scoped, tag = 'internal scratch']
  %s0 = inlined_call_operand.vmem [shape: bf16[24,128], index: 0, kind: input, shape index: {}]
  %s1 = inlined_call_operand.vmem [shape: bf16[128,128], index: 1, kind: input, shape index: {}]
  %s2 = inlined_call_operand.vmem [shape: f32[1,128], index: 2, kind: input, shape index: {}]
  %s3 = inlined_call_operand.vmem [shape: f32[1,128], index: 3, kind: input, shape index: {}]
  %s4 = inlined_call_operand.vmem [shape: bf16[24,128], index: 4, kind: output, shape index: {}]
  %s5 = sld [smem:[#allocation0]]
  $region26: #{_lambda_.14} parent=0
    _
  %s7 = ssub.s32 1, %s5
  %s8 = scalar_select 0, %s7, %s5
  // Predicated region
  $region2: #{_lambda_.14} parent=0 // pred_check
    _
  $region3: #{_lambda_.14} parent=0 // pred_check_branch
    %10 = sbr.rel (0) target = $region5
  $region4: #{_lambda_.14} parent=0 // pred_region
    _
  $region5: #{_lambda_.14} parent=0 // pred_fallthru
    _
  // Predicated region
  $region6: #{_lambda_.14} parent=0 // pred_check
    _
  $region7: #{_lambda_.14} parent=0 // pred_check_branch
    %12 = sbr.rel (0) target = $region9
  $region8: #{_lambda_.14} parent=0 // pred_region
    _
  $region9: #{_lambda_.14} parent=0 // pred_fallthru
    _
  // Predicated region
  $region10: #{_lambda_.14} parent=0 // pred_check
    _
  $region11: #{_lambda_.14} parent=0 // pred_check_branch
    %14 = sbr.rel (0) target = $region13
  $region12: #{_lambda_.14} parent=0 // pred_region
    _
  $region13: #{_lambda_.14} parent=0 // pred_fallthru
    _
  // Predicated region
  $region14: #{_lambda_.14} parent=0 // pred_check
    _
  $region15: #{_lambda_.14} parent=0 // pred_check_branch
    %16 = sbr.rel (0) target = $region17
  $region16: #{_lambda_.14} parent=0 // pred_region
    _
  $region17: #{_lambda_.14} parent=0 // pred_fallthru
    _
  %v18 = vld [vmem:[%s0] sm:$0xf]
  %v19 = vld [vmem:[%s0 + $0x4] sm:$0xf]
  %v20 = vld [vmem:[%s0 + $0x8] sm:$0xf]
  %v21 = vld [vmem:[%s1] sm:$0xf]
  %v22 = vld [vmem:[%s1 + $0x4] sm:$0xf]
  %v23 = vld [vmem:[%s1 + $0x8] sm:$0xf]
  %v24 = vld [vmem:[%s1 + $0xc] sm:$0xf]
  %v25 = vld [vmem:[%s1 + $0x10] sm:$0xf]
  %v26 = vld [vmem:[%s1 + $0x14] sm:$0xf]
  %v27 = vld [vmem:[%s1 + $0x18] sm:$0xf]
  %v28 = vld [vmem:[%s1 + $0x1c] sm:$0xf]
  %v29 = vld [vmem:[%s1 + $0x20] sm:$0xf]
  %v30 = vld [vmem:[%s1 + $0x24] sm:$0xf]
  %v31 = vld [vmem:[%s1 + $0x28] sm:$0xf]
  %v32 = vld [vmem:[%s1 + $0x2c] sm:$0xf]
  %v33 = vld [vmem:[%s1 + $0x30] sm:$0xf]
  %v34 = vld [vmem:[%s1 + $0x34] sm:$0xf]
  %v35 = vld [vmem:[%s1 + $0x38] sm:$0xf]
  %v36 = vld [vmem:[%s1 + $0x3c] sm:$0xf]
  %v40 = vunpack.c.l.b16 %v18
  %v41 = vunpack.c.l.b16 %v19
  %v42 = vunpack.c.l.b16 %v20
  %v43 = vpack.c.b16 %v41, %v40
  %v44 = vpack.c.b16 %v42, %v42
  %v63 = vunpack.c.l.b16 %v21
  %v64 = vunpack.c.l.b16 %v22
  %v65 = vunpack.c.l.b16 %v23
  %v66 = vunpack.c.l.b16 %v24
  %v67 = vunpack.c.l.b16 %v25
  %v68 = vunpack.c.l.b16 %v26
  %v69 = vunpack.c.l.b16 %v27
  %v70 = vunpack.c.l.b16 %v28
  %v71 = vunpack.c.l.b16 %v29
  %v72 = vunpack.c.l.b16 %v30
  %v73 = vunpack.c.l.b16 %v31
  %v74 = vunpack.c.l.b16 %v32
  %v75 = vunpack.c.l.b16 %v33
  %v76 = vunpack.c.l.b16 %v34
  %v77 = vunpack.c.l.b16 %v35
  %v78 = vunpack.c.l.b16 %v36
  %v79 = vpack.c.b16 %v64, %v63
  %v80 = vpack.c.b16 %v66, %v65
  %v81 = vpack.c.b16 %v68, %v67
  %v82 = vpack.c.b16 %v70, %v69
  %v83 = vpack.c.b16 %v72, %v71
  %v84 = vpack.c.b16 %v74, %v73
  %v85 = vpack.c.b16 %v76, %v75
  %v86 = vpack.c.b16 %v78, %v77
  %95 = vmatprep.subr.bf16.mxu0 0
  %96 = vmatpush1.bf16.msra.mxu0 %v86
  %97 = vmatprep.subr.bf16.mxu0 0
  %98 = vmatpush1.bf16.msra.mxu0 %v85
  %99 = vmatprep.subr.bf16.mxu0 0
  %100 = vmatpush1.bf16.msra.mxu0 %v84
  %101 = vmatprep.subr.bf16.mxu0 0
  %102 = vmatpush1.bf16.msra.mxu0 %v83
  %103 = vmatprep.subr.bf16.mxu0 0
  %104 = vmatpush1.bf16.msra.mxu0 %v82
  %105 = vmatprep.subr.bf16.mxu0 0
  %106 = vmatpush1.bf16.msra.mxu0 %v81
  %107 = vmatprep.subr.bf16.mxu0 0
  %108 = vmatpush1.bf16.msra.mxu0 %v80
  %109 = vmatprep.subr.bf16.mxu0 0
  %110 = vmatpush1.bf16.msra.mxu0 %v79
  %111 = vmatprep.subr.bf16.mxu0 0
  %112 = vmatpush2.bf16.msra.mxu0 0
  %113 = vmatprep.subr.bf16.mxu0 0
  %114 = vmatpush2.bf16.msra.mxu0 0
  %115 = vmatprep.subr.bf16.mxu0 0
  %116 = vmatpush2.bf16.msra.mxu0 0
  %117 = vmatprep.subr.bf16.mxu0 0
  %118 = vmatpush2.bf16.msra.mxu0 0
  %119 = vmatprep.subr.bf16.mxu0 0
  %120 = vmatpush2.bf16.msra.mxu0 0
  %121 = vmatprep.subr.bf16.mxu0 0
  %122 = vmatpush2.bf16.msra.mxu0 0
  %123 = vmatprep.subr.bf16.mxu0 0
  %124 = vmatpush2.bf16.msra.mxu0 0
  %125 = vmatprep.subr.bf16.mxu0 0
  %126 = vmatpush2.bf16.msra.mxu0 0
  %127 = vmatprep.mubr.bf16.mxu0 0
  %128 = vmatmul.mubr.bf16.gmra.mxu0 %v43
  %v129 = vpop.f32.mrf.mxu0
  %v130 = vadd.f32 0.0, %v129
  %v131 = vpop.f32.mrf.mxu0
  %v132 = vpop.f32.mrf.mxu0
  %v133 = vadd.f32 0.0, %v132
  %v134 = vpop.f32.mrf.mxu0
  %135 = vmatprep.mubr.bf16.mxu0 0
  %136 = vmatmul.mubr.bf16.gmra.mxu0 %v44
  %v137 = vpop.f32.mrf.mxu0
  %v138 = vadd.f32 0.0, %v137
  %v139 = vpop.f32.mrf.mxu0
  %v140 = vpop.f32.mrf.mxu0
  %v141 = vpop.f32.mrf.mxu0
  %142 = vdwg.mxu0
  %v143 = vld [vmem:[%s2] sm:$0x1]
  %v145 = vlaneseq
  %v146 = vshrl.u32 %v145, 7
  %v147 = vsub.s32 0, %v146
  %v148 = vrot.slane %v143, %v147
  %v150 = vmul.f32 %v130, %v148
  %v151 = vmul.f32 %v133, %v148
  %v152 = vmul.f32 %v138, %v148
  %v153 = vld [vmem:[%s3] sm:$0x1]
  %v155 = vlaneseq
  %v156 = vshrl.u32 %v155, 7
  %v157 = vsub.s32 0, %v156
  %v158 = vrot.slane %v153, %v157
  %v160 = vadd.f32 %v150, %v158
  %v161 = vadd.f32 %v151, %v158
  %v162 = vadd.f32 %v152, %v158
  %v163 = vmax.f32 %v160, 0.0
  %v164 = vmax.f32 %v161, 0.0
  %v165 = vmax.f32 %v162, 0.0
  %v166 = vpack.c.bf16 %v164, %v163
  %v167 = vpack.c.bf16 %v165, %v165
  %v170 = vunpack.c.l.b16 %v166
  %v171 = vunpack.c.h.b16 %v166
  %v172 = vunpack.c.l.b16 %v167
  %v173 = vpack.c.b16 %v170, %v170
  %v174 = vpack.c.b16 %v171, %v171
  %v175 = vpack.c.b16 %v172, %v172
  %179 = vst [vmem:[%s4] sm:$0xf] %v173
  %180 = vst [vmem:[%s4 + $0x4] sm:$0xf] %v174
  %181 = vst [vmem:[%s4 + $0x8] sm:$0xf] %v175
  // Predicated region
  $region18: #{_lambda_.14} parent=0 // pred_check
    _
  $region19: #{_lambda_.14} parent=0 // pred_check_branch
    %183 = sbr.rel (0) target = $region21
  $region20: #{_lambda_.14} parent=0 // pred_region
    _
  $region21: #{_lambda_.14} parent=0 // pred_fallthru
    _
  // Predicated region
  $region22: #{_lambda_.14} parent=0 // pred_check
    _
  $region23: #{_lambda_.14} parent=0 // pred_check_branch
    %185 = sbr.rel (0) target = $region25
  $region24: #{_lambda_.14} parent=0 // pred_region
    _
  $region25: #{_lambda_.14} parent=0 // pred_fallthru
    _

// kernel: reverse.10
$region0: #{reverse.10}
  %s0 = inlined_call_operand.vmem [shape: f32[2,4,8,3], index: 0, kind: input, shape index: {}]
  %s1 = inlined_call_operand.vmem [shape: f32[2,4,8,3], index: 1, kind: output, shape index: {}]
  $region1: #{reverse.10} parent=0
    #allocation0 [shape = 'u8[65536]{0}', space=vmem, size = 0x10000, scoped, tag = 'operand span for operand 0']
    #allocation1 [shape = 'u8[32768]{0}', space=vmem, size = 0x8000, scoped, tag = 'packed  for operand 0']
    #allocation2 [shape = 'u8[32768]{0}', space=vmem, size = 0x8000, scoped, tag = 'operand span for operand 1']
    #allocation3 [shape = 'u8[16384]{0}', space=vmem, size = 0x4000, scoped, tag = 'packed  for operand 1']
    %s2 = scalar_lea.vmem [#allocation1], 4
    // Predicated region
    $region2: #{reverse.10} parent=1 // pred_check
      _
    $region3: #{reverse.10} parent=1 // pred_check_branch
      %4 = sbr.rel (0) target = $region5
    $region4: #{reverse.10} parent=1 // pred_region
      // Predicated region
      $region6: #{reverse.10} parent=4 // pred_check
        _
      $region7: #{reverse.10} parent=4 // pred_check_branch
        %6 = sbr.rel target = $region9
      $region8: #{reverse.10} parent=4 // pred_region
        // Predicated region
        $region21: #{reverse.10} parent=8 // pred_check
          _
        $region22: #{reverse.10} parent=8 // pred_check_branch
          %36 = sbr.rel (0) target = $region24
        $region23: #{reverse.10} parent=8 // pred_region
          loop: start=0, step=1, limit=1
          $region25: #{reverse.10} parent=23 // loop_pre_header
            _
          $region26: #{reverse.10} parent=23 // loop_header
            %s38 = sphi 0, %s42
            %p39 = scmp.ge.s32.totalorder %s38, 1
            %s43 = sphi %s0, %s0
            %s44 = sphi %s2, %s2
          $region27: #{reverse.10} parent=23 // loop_header_branch
            %41 = sbr.rel (%p39) target = $region31
          $region28: #{reverse.10} parent=23 // loop_body
            _
          $region29: #{reverse.10} parent=23 // loop_footer
            %s42 = sadd.s32 1, %s38
          $region30: #{reverse.10} parent=23 // loop_footer_branch
            %37 = sbr.rel target = $region26
          $region31: #{reverse.10} parent=23 // loop_exit
            _
          %s46 = ssub.s32 16, 1
          loop: start=0, step=1, limit=1
          $region32: #{reverse.10} parent=23 // loop_pre_header
            _
          $region33: #{reverse.10} parent=23 // loop_header
            %s48 = sphi 0, %s52
            %p49 = scmp.ge.s32.totalorder %s48, 1
            %s53 = sphi %s0, %s0
            %s54 = sphi %s2, %s2
          $region34: #{reverse.10} parent=23 // loop_header_branch
            %51 = sbr.rel (%p49) target = $region38
          $region35: #{reverse.10} parent=23 // loop_body
            %v55 = vld [vmem:[%s53] sm:%s46]
            %56 = vst [vmem:[%s54] sm:%s46] %v55
            %v57 = vld [vmem:[%s53 + $0x4] sm:%s46]
            %58 = vst [vmem:[%s54 + $0x8] sm:%s46] %v57
            %v59 = vld [vmem:[%s53 + $0x8] sm:%s46]
            %60 = vst [vmem:[%s54 + $0x10] sm:%s46] %v59
            %v61 = vld [vmem:[%s53 + $0xc] sm:%s46]
            %62 = vst [vmem:[%s54 + $0x18] sm:%s46] %v61
            %v63 = vld [vmem:[%s53 + $0x10] sm:%s46]
            %64 = vst [vmem:[%s54 + $0x20] sm:%s46] %v63
            %v65 = vld [vmem:[%s53 + $0x14] sm:%s46]
            %66 = vst [vmem:[%s54 + $0x28] sm:%s46] %v65
            %v67 = vld [vmem:[%s53 + $0x18] sm:%s46]
            %68 = vst [vmem:[%s54 + $0x30] sm:%s46] %v67
            %v69 = vld [vmem:[%s53 + $0x1c] sm:%s46]
            %70 = vst [vmem:[%s54 + $0x38] sm:%s46] %v69
          $region36: #{reverse.10} parent=23 // loop_footer
            %s52 = sadd.s32 1, %s48
          $region37: #{reverse.10} parent=23 // loop_footer_branch
            %47 = sbr.rel target = $region33
          $region38: #{reverse.10} parent=23 // loop_exit
            _
        $region24: #{reverse.10} parent=8 // pred_fallthru
          _
      $region9: #{reverse.10} parent=4 // pred_fallthru
        _
      // Predicated region
      $region10: #{reverse.10} parent=4 // pred_check
        _
      $region11: #{reverse.10} parent=4 // pred_check_branch
        %8 = sbr.rel (0) target = $region13
      $region12: #{reverse.10} parent=4 // pred_region
        %s10 = ssub.s32 16, 1
        loop: start=0, step=1, limit=1
        $region14: #{reverse.10} parent=12 // loop_pre_header
          _
        $region15: #{reverse.10} parent=12 // loop_header
          %s12 = sphi 0, %s16
          %p13 = scmp.ge.s32.totalorder %s12, 1
          %s17 = sphi %s0, %s0
          %s18 = sphi %s2, %s2
        $region16: #{reverse.10} parent=12 // loop_header_branch
          %15 = sbr.rel (%p13) target = $region20
        $region17: #{reverse.10} parent=12 // loop_body
          %v19 = vld [vmem:[%s17] sm:%s10]
          %20 = vst [vmem:[%s18] sm:%s10] %v19
          %v21 = vld [vmem:[%s17 + $0x4] sm:%s10]
          %22 = vst [vmem:[%s18 + $0x8] sm:%s10] %v21
          %v23 = vld [vmem:[%s17 + $0x8] sm:%s10]
          %24 = vst [vmem:[%s18 + $0x10] sm:%s10] %v23
          %v25 = vld [vmem:[%s17 + $0xc] sm:%s10]
          %26 = vst [vmem:[%s18 + $0x18] sm:%s10] %v25
          %v27 = vld [vmem:[%s17 + $0x10] sm:%s10]
          %28 = vst [vmem:[%s18 + $0x20] sm:%s10] %v27
          %v29 = vld [vmem:[%s17 + $0x14] sm:%s10]
          %30 = vst [vmem:[%s18 + $0x28] sm:%s10] %v29
          %v31 = vld [vmem:[%s17 + $0x18] sm:%s10]
          %32 = vst [vmem:[%s18 + $0x30] sm:%s10] %v31
          %v33 = vld [vmem:[%s17 + $0x1c] sm:%s10]
          %34 = vst [vmem:[%s18 + $0x38] sm:%s10] %v33
        $region18: #{reverse.10} parent=12 // loop_footer
          %s16 = sadd.s32 1, %s12
        $region19: #{reverse.10} parent=12 // loop_footer_branch
          %11 = sbr.rel target = $region15
        $region20: #{reverse.10} parent=12 // loop_exit
          _
      $region13: #{reverse.10} parent=4 // pred_fallthru
        _
    $region5: #{reverse.10} parent=1 // pred_fallthru
      _
    %71 = vnop
    %s73 = sshll.u32 1, 4
    %s74 = ssub.s32 %s73, 1
    %s75 = smul.addr 4, 15
    %s76 = scalar_lea.vmem [#allocation1], %s75
    %v77 = vld [vmem:[%s76] sm:%s74]
    %s78 = scalar_lea.vmem [#allocation0], 120
    %79 = vst [vmem:[%s78] sm:%s74] %v77
    %s80 = smul.addr 4, 14
    %s81 = scalar_lea.vmem [#allocation1], %s80
    %v82 = vld [vmem:[%s81] sm:%s74]
    %s83 = scalar_lea.vmem [#allocation0], 112
    %84 = vst [vmem:[%s83] sm:%s74] %v82
    %s85 = smul.addr 4, 13
    %s86 = scalar_lea.vmem [#allocation1], %s85
    %v87 = vld [vmem:[%s86] sm:%s74]
    %s88 = scalar_lea.vmem [#allocation0], 104
    %89 = vst [vmem:[%s88] sm:%s74] %v87
    %s90 = smul.addr 4, 12
    %s91 = scalar_lea.vmem [#allocation1], %s90
    %v92 = vld [vmem:[%s91] sm:%s74]
    %s93 = scalar_lea.vmem [#allocation0], 96
    %94 = vst [vmem:[%s93] sm:%s74] %v92
    %s95 = smul.addr 4, 11
    %s96 = scalar_lea.vmem [#allocation1], %s95
    %v97 = vld [vmem:[%s96] sm:%s74]
    %s98 = scalar_lea.vmem [#allocation0], 88
    %99 = vst [vmem:[%s98] sm:%s74] %v97
    %s100 = smul.addr 4, 10
    %s101 = scalar_lea.vmem [#allocation1], %s100
    %v102 = vld [vmem:[%s101] sm:%s74]
    %s103 = scalar_lea.vmem [#allocation0], 80
    %104 = vst [vmem:[%s103] sm:%s74] %v102
    %s105 = smul.addr 4, 9
    %s106 = scalar_lea.vmem [#allocation1], %s105
    %v107 = vld [vmem:[%s106] sm:%s74]
    %s108 = scalar_lea.vmem [#allocation0], 72
    %109 = vst [vmem:[%s108] sm:%s74] %v107
    %s110 = smul.addr 4, 8
    %s111 = scalar_lea.vmem [#allocation1], %s110
    %v112 = vld [vmem:[%s111] sm:%s74]
    %s113 = scalar_lea.vmem [#allocation0], 64
    %114 = vst [vmem:[%s113] sm:%s74] %v112
    %s115 = smul.addr 4, 7
    %s116 = scalar_lea.vmem [#allocation1], %s115
    %v117 = vld [vmem:[%s116] sm:%s74]
    %s118 = scalar_lea.vmem [#allocation0], 56
    %119 = vst [vmem:[%s118] sm:%s74] %v117
    %s120 = smul.addr 4, 6
    %s121 = scalar_lea.vmem [#allocation1], %s120
    %v122 = vld [vmem:[%s121] sm:%s74]
    %s123 = scalar_lea.vmem [#allocation0], 48
    %124 = vst [vmem:[%s123] sm:%s74] %v122
    %s125 = smul.addr 4, 5
    %s126 = scalar_lea.vmem [#allocation1], %s125
    %v127 = vld [vmem:[%s126] sm:%s74]
    %s128 = scalar_lea.vmem [#allocation0], 40
    %129 = vst [vmem:[%s128] sm:%s74] %v127
    %s130 = smul.addr 4, 4
    %s131 = scalar_lea.vmem [#allocation1], %s130
    %v132 = vld [vmem:[%s131] sm:%s74]
    %s133 = scalar_lea.vmem [#allocation0], 32
    %134 = vst [vmem:[%s133] sm:%s74] %v132
    %s135 = smul.addr 4, 3
    %s136 = scalar_lea.vmem [#allocation1], %s135
    %v137 = vld [vmem:[%s136] sm:%s74]
    %s138 = scalar_lea.vmem [#allocation0], 24
    %139 = vst [vmem:[%s138] sm:%s74] %v137
    %s140 = smul.addr 4, 2
    %s141 = scalar_lea.vmem [#allocation1], %s140
    %v142 = vld [vmem:[%s141] sm:%s74]
    %s143 = scalar_lea.vmem [#allocation0], 16
    %144 = vst [vmem:[%s143] sm:%s74] %v142
    %s145 = scalar_lea.vmem [#allocation1], 4
    %v146 = vld [vmem:[%s145] sm:%s74]
    %s147 = scalar_lea.vmem [#allocation0], 8
    %148 = vst [vmem:[%s147] sm:%s74] %v146
    %v149 = vld [vmem:[#allocation1] sm:%s74]
    %150 = vst [vmem:[#allocation0] sm:%s74] %v149
    %s151 = scalar_lea.vmem [#allocation0], 7
    %v152 = vld [vmem:[%s151] ss:$-1 sm:$0xff]
    %v153 = vrot.slane %v152, 5
    %154 = vst [vmem:[#allocation2] sm:$0xff] %v153
    %s155 = scalar_lea.vmem [#allocation0], 8
    %s156 = scalar_lea.vmem %s155, 7 [#allocation0]
    %v157 = vld [vmem:[%s156] ss:$-1 sm:$0xff]
    %v158 = vrot.slane %v157, 5
    %v159 = vlaneseq
    %v160 = vshrl.u32 %v159, 7
    %vm161 = vcmp.lt.s32.totalorder %v160, 3
    %162 = vst.msk [vmem:[#allocation2] sm:$0xff] %vm161, %v158
    %s163 = scalar_lea.vmem [#allocation2], 8
    %s164 = scalar_lea.vmem [#allocation0], 16
    %s165 = scalar_lea.vmem %s164, 7 [#allocation0]
    %v166 = vld [vmem:[%s165] ss:$-1 sm:$0xff]
    %v167 = vrot.slane %v166, 5
    %168 = vst [vmem:[%s163] sm:$0xff] %v167
    %s169 = scalar_lea.vmem %s164, 8 [#allocation0]
    %s170 = scalar_lea.vmem %s169, 7 [#allocation0]
    %v171 = vld [vmem:[%s170] ss:$-1 sm:$0xff]
    %v172 = vrot.slane %v171, 5
    %v173 = vlaneseq
    %v174 = vshrl.u32 %v173, 7
    %vm175 = vcmp.lt.s32.totalorder %v174, 3
    %176 = vst.msk [vmem:[%s163] sm:$0xff] %vm175, %v172
    %s177 = scalar_lea.vmem [#allocation2], 16
    %s178 = scalar_lea.vmem [#allocation0], 32
    %s179 = scalar_lea.vmem %s178, 7 [#allocation0]
    %v180 = vld [vmem:[%s179] ss:$-1 sm:$0xff]
    %v181 = vrot.slane %v180, 5
    %182 = vst [vmem:[%s177] sm:$0xff] %v181
    %s183 = scalar_lea.vmem %s178, 8 [#allocation0]
    %s184 = scalar_lea.vmem %s183, 7 [#allocation0]
    %v185 = vld [vmem:[%s184] ss:$-1 sm:$0xff]
    %v186 = vrot.slane %v185, 5
    %v187 = vlaneseq
    %v188 = vshrl.u32 %v187, 7
    %vm189 = vcmp.lt.s32.totalorder %v188, 3
    %190 = vst.msk [vmem:[%s177] sm:$0xff] %vm189, %v186
    %s191 = scalar_lea.vmem [#allocation2], 24
    %s192 = scalar_lea.vmem [#allocation0], 48
    %s193 = scalar_lea.vmem %s192, 7 [#allocation0]
    %v194 = vld [vmem:[%s193] ss:$-1 sm:$0xff]
    %v195 = vrot.slane %v194, 5
    %196 = vst [vmem:[%s191] sm:$0xff] %v195
    %s197 = scalar_lea.vmem %s192, 8 [#allocation0]
    %s198 = scalar_lea.vmem %s197, 7 [#allocation0]
    %v199 = vld [vmem:[%s198] ss:$-1 sm:$0xff]
    %v200 = vrot.slane %v199, 5
    %v201 = vlaneseq
    %v202 = vshrl.u32 %v201, 7
    %vm203 = vcmp.lt.s32.totalorder %v202, 3
    %204 = vst.msk [vmem:[%s191] sm:$0xff] %vm203, %v200
    %s205 = scalar_lea.vmem [#allocation2], 32
    %s206 = scalar_lea.vmem [#allocation0], 64
    %s207 = scalar_lea.vmem %s206, 7 [#allocation0]
    %v208 = vld [vmem:[%s207] ss:$-1 sm:$0xff]
    %v209 = vrot.slane %v208, 5
    %210 = vst [vmem:[%s205] sm:$0xff] %v209
    %s211 = scalar_lea.vmem %s206, 8 [#allocation0]
    %s212 = scalar_lea.vmem %s211, 7 [#allocation0]
    %v213 = vld [vmem:[%s212] ss:$-1 sm:$0xff]
    %v214 = vrot.slane %v213, 5
    %v215 = vlaneseq
    %v216 = vshrl.u32 %v215, 7
    %vm217 = vcmp.lt.s32.totalorder %v216, 3
    %218 = vst.msk [vmem:[%s205] sm:$0xff] %vm217, %v214
    %s219 = scalar_lea.vmem [#allocation2], 40
    %s220 = scalar_lea.vmem [#allocation0], 80
    %s221 = scalar_lea.vmem %s220, 7 [#allocation0]
    %v222 = vld [vmem:[%s221] ss:$-1 sm:$0xff]
    %v223 = vrot.slane %v222, 5
    %224 = vst [vmem:[%s219] sm:$0xff] %v223
    %s225 = scalar_lea.vmem %s220, 8 [#allocation0]
    %s226 = scalar_lea.vmem %s225, 7 [#allocation0]
    %v227 = vld [vmem:[%s226] ss:$-1 sm:$0xff]
    %v228 = vrot.slane %v227, 5
    %v229 = vlaneseq
    %v230 = vshrl.u32 %v229, 7
    %vm231 = vcmp.lt.s32.totalorder %v230, 3
    %232 = vst.msk [vmem:[%s219] sm:$0xff] %vm231, %v228
    %s233 = scalar_lea.vmem [#allocation2], 48
    %s234 = scalar_lea.vmem [#allocation0], 96
    %s235 = scalar_lea.vmem %s234, 7 [#allocation0]
    %v236 = vld [vmem:[%s235] ss:$-1 sm:$0xff]
    %v237 = vrot.slane %v236, 5
    %238 = vst [vmem:[%s233] sm:$0xff] %v237
    %s239 = scalar_lea.vmem %s234, 8 [#allocation0]
    %s240 = scalar_lea.vmem %s239, 7 [#allocation0]
    %v241 = vld [vmem:[%s240] ss:$-1 sm:$0xff]
    %v242 = vrot.slane %v241, 5
    %v243 = vlaneseq
    %v244 = vshrl.u32 %v243, 7
    %vm245 = vcmp.lt.s32.totalorder %v244, 3
    %246 = vst.msk [vmem:[%s233] sm:$0xff] %vm245, %v242
    %s247 = scalar_lea.vmem [#allocation2], 56
    %s248 = scalar_lea.vmem [#allocation0], 112
    %s249 = scalar_lea.vmem %s248, 7 [#allocation0]
    %v250 = vld [vmem:[%s249] ss:$-1 sm:$0xff]
    %v251 = vrot.slane %v250, 5
    %252 = vst [vmem:[%s247] sm:$0xff] %v251
    %s253 = scalar_lea.vmem %s248, 8 [#allocation0]
    %s254 = scalar_lea.vmem %s253, 7 [#allocation0]
    %v255 = vld [vmem:[%s254] ss:$-1 sm:$0xff]
    %v256 = vrot.slane %v255, 5
    %v257 = vlaneseq
    %v258 = vshrl.u32 %v257, 7
    %vm259 = vcmp.lt.s32.totalorder %v258, 3
    %260 = vst.msk [vmem:[%s247] sm:$0xff] %vm259, %v256
    %s262 = sshll.u32 1, 4
    %s263 = ssub.s32 %s262, 1
    %v265 = vld [vmem:[#allocation2] sm:%s263]
    %s266 = sshll.u32 1, 4
    %s267 = ssub.s32 %s266, 1
    %268 = vst [vmem:[#allocation3] sm:%s267] %v265
    %s269 = scalar_lea.vmem [#allocation2], 8
    %v270 = vld [vmem:[%s269] sm:%s263]
    %s271 = sshll.u32 1, 4
    %s272 = ssub.s32 %s271, 1
    %s273 = scalar_lea.vmem [#allocation3], 4
    %274 = vst [vmem:[%s273] sm:%s272] %v270
    %s275 = scalar_lea.vmem [#allocation2], 16
    %v276 = vld [vmem:[%s275] sm:%s263]
    %s277 = sshll.u32 1, 4
    %s278 = ssub.s32 %s277, 1
    %s279 = smul.addr 4, 2
    %s280 = scalar_lea.vmem [#allocation3], %s279
    %281 = vst [vmem:[%s280] sm:%s278] %v276
    %s282 = scalar_lea.vmem [#allocation2], 24
    %v283 = vld [vmem:[%s282] sm:%s263]
    %s284 = sshll.u32 1, 4
    %s285 = ssub.s32 %s284, 1
    %s286 = smul.addr 4, 3
    %s287 = scalar_lea.vmem [#allocation3], %s286
    %288 = vst [vmem:[%s287] sm:%s285] %v283
    %s289 = scalar_lea.vmem [#allocation2], 32
    %v290 = vld [vmem:[%s289] sm:%s263]
    %s291 = sshll.u32 1, 4
    %s292 = ssub.s32 %s291, 1
    %s293 = smul.addr 4, 4
    %s294 = scalar_lea.vmem [#allocation3], %s293
    %295 = vst [vmem:[%s294] sm:%s292] %v290
    %s296 = scalar_lea.vmem [#allocation2], 40
    %v297 = vld [vmem:[%s296] sm:%s263]
    %s298 = sshll.u32 1, 4
    %s299 = ssub.s32 %s298, 1
    %s300 = smul.addr 4, 5
    %s301 = scalar_lea.vmem [#allocation3], %s300
    %302 = vst [vmem:[%s301] sm:%s299] %v297
    %s303 = scalar_lea.vmem [#allocation2], 48
    %v304 = vld [vmem:[%s303] sm:%s263]
    %s305 = sshll.u32 1, 4
    %s306 = ssub.s32 %s305, 1
    %s307 = smul.addr 4, 6
    %s308 = scalar_lea.vmem [#allocation3], %s307
    %309 = vst [vmem:[%s308] sm:%s306] %v304
    %s310 = scalar_lea.vmem [#allocation2], 56
    %v311 = vld [vmem:[%s310] sm:%s263]
    %s312 = sshll.u32 1, 4
    %s313 = ssub.s32 %s312, 1
    %s314 = smul.addr 4, 7
    %s315 = scalar_lea.vmem [#allocation3], %s314
    %316 = vst [vmem:[%s315] sm:%s313] %v311
    // Predicated region
    $region39: #{reverse.10} parent=1 // pred_check
      _
    $region40: #{reverse.10} parent=1 // pred_check_branch
      %318 = sbr.rel (0) target = $region42
    $region41: #{reverse.10} parent=1 // pred_region
      // Predicated region
      $region43: #{reverse.10} parent=41 // pred_check
        _
      $region44: #{reverse.10} parent=41 // pred_check_branch
        %320 = sbr.rel target = $region46
      $region45: #{reverse.10} parent=41 // pred_region
        // Predicated region
        $region58: #{reverse.10} parent=45 // pred_check
          _
        $region59: #{reverse.10} parent=45 // pred_check_branch
          %350 = sbr.rel (0) target = $region61
        $region60: #{reverse.10} parent=45 // pred_region
          loop: start=0, step=1, limit=1
          $region62: #{reverse.10} parent=60 // loop_pre_header
            _
          $region63: #{reverse.10} parent=60 // loop_header
            %s352 = sphi 0, %s356
            %p353 = scmp.ge.s32.totalorder %s352, 1
            %s357 = sphi [#allocation3], [#allocation3]
            %s358 = sphi %s1, %s1
          $region64: #{reverse.10} parent=60 // loop_header_branch
            %355 = sbr.rel (%p353) target = $region68
          $region65: #{reverse.10} parent=60 // loop_body
            _
          $region66: #{reverse.10} parent=60 // loop_footer
            %s356 = sadd.s32 1, %s352
          $region67: #{reverse.10} parent=60 // loop_footer_branch
            %351 = sbr.rel target = $region63
          $region68: #{reverse.10} parent=60 // loop_exit
            _
          %s360 = ssub.s32 16, 1
          loop: start=0, step=1, limit=1
          $region69: #{reverse.10} parent=60 // loop_pre_header
            _
          $region70: #{reverse.10} parent=60 // loop_header
            %s362 = sphi 0, %s366
            %p363 = scmp.ge.s32.totalorder %s362, 1
            %s367 = sphi [#allocation3], [#allocation3]
            %s368 = sphi %s1, %s1
          $region71: #{reverse.10} parent=60 // loop_header_branch
            %365 = sbr.rel (%p363) target = $region75
          $region72: #{reverse.10} parent=60 // loop_body
            %v369 = vld [vmem:[%s367] sm:%s360]
            %370 = vst [vmem:[%s368] sm:%s360] %v369
            %v371 = vld [vmem:[%s367 + $0x4] sm:%s360]
            %372 = vst [vmem:[%s368 + $0x4] sm:%s360] %v371
            %v373 = vld [vmem:[%s367 + $0x8] sm:%s360]
            %374 = vst [vmem:[%s368 + $0x8] sm:%s360] %v373
            %v375 = vld [vmem:[%s367 + $0xc] sm:%s360]
            %376 = vst [vmem:[%s368 + $0xc] sm:%s360] %v375
            %v377 = vld [vmem:[%s367 + $0x10] sm:%s360]
            %378 = vst [vmem:[%s368 + $0x10] sm:%s360] %v377
            %v379 = vld [vmem:[%s367 + $0x14] sm:%s360]
            %380 = vst [vmem:[%s368 + $0x14] sm:%s360] %v379
            %v381 = vld [vmem:[%s367 + $0x18] sm:%s360]
            %382 = vst [vmem:[%s368 + $0x18] sm:%s360] %v381
            %v383 = vld [vmem:[%s367 + $0x1c] sm:%s360]
            %384 = vst [vmem:[%s368 + $0x1c] sm:%s360] %v383
          $region73: #{reverse.10} parent=60 // loop_footer
            %s366 = sadd.s32 1, %s362
          $region74: #{reverse.10} parent=60 // loop_footer_branch
            %361 = sbr.rel target = $region70
          $region75: #{reverse.10} parent=60 // loop_exit
            _
        $region61: #{reverse.10} parent=45 // pred_fallthru
          _
      $region46: #{reverse.10} parent=41 // pred_fallthru
        _
      // Predicated region
      $region47: #{reverse.10} parent=41 // pred_check
        _
      $region48: #{reverse.10} parent=41 // pred_check_branch
        %322 = sbr.rel (0) target = $region50
      $region49: #{reverse.10} parent=41 // pred_region
        %s324 = ssub.s32 16, 1
        loop: start=0, step=1, limit=1
        $region51: #{reverse.10} parent=49 // loop_pre_header
          _
        $region52: #{reverse.10} parent=49 // loop_header
          %s326 = sphi 0, %s330
          %p327 = scmp.ge.s32.totalorder %s326, 1
          %s331 = sphi [#allocation3], [#allocation3]
          %s332 = sphi %s1, %s1
        $region53: #{reverse.10} parent=49 // loop_header_branch
          %329 = sbr.rel (%p327) target = $region57
        $region54: #{reverse.10} parent=49 // loop_body
          %v333 = vld [vmem:[%s331] sm:%s324]
          %334 = vst [vmem:[%s332] sm:%s324] %v333
          %v335 = vld [vmem:[%s331 + $0x4] sm:%s324]
          %336 = vst [vmem:[%s332 + $0x4] sm:%s324] %v335
          %v337 = vld [vmem:[%s331 + $0x8] sm:%s324]
          %338 = vst [vmem:[%s332 + $0x8] sm:%s324] %v337
          %v339 = vld [vmem:[%s331 + $0xc] sm:%s324]
          %340 = vst [vmem:[%s332 + $0xc] sm:%s324] %v339
          %v341 = vld [vmem:[%s331 + $0x10] sm:%s324]
          %342 = vst [vmem:[%s332 + $0x10] sm:%s324] %v341
          %v343 = vld [vmem:[%s331 + $0x14] sm:%s324]
          %344 = vst [vmem:[%s332 + $0x14] sm:%s324] %v343
          %v345 = vld [vmem:[%s331 + $0x18] sm:%s324]
          %346 = vst [vmem:[%s332 + $0x18] sm:%s324] %v345
          %v347 = vld [vmem:[%s331 + $0x1c] sm:%s324]
          %348 = vst [vmem:[%s332 + $0x1c] sm:%s324] %v347
        $region55: #{reverse.10} parent=49 // loop_footer
          %s330 = sadd.s32 1, %s326
        $region56: #{reverse.10} parent=49 // loop_footer_branch
          %325 = sbr.rel target = $region52
        $region57: #{reverse.10} parent=49 // loop_exit
          _
      $region50: #{reverse.10} parent=41 // pred_fallthru
        _
    $region42: #{reverse.10} parent=1 // pred_fallthru
      _
    %385 = vnop

// kernel: _lambda_.13
$region0: #{_lambda_.13}
  #allocation0 [shape = 'u32[]', space=smem, size = 0x4, offset = 0x4, fixed_abs, tag = 'smem constant byte address 0x4 - core index']
  #allocation1 [shape = 'u32[144,128]{1,0:T(1,128)}', space=vmem, size = 0x12000, scoped, tag = 'internal scratch']
  %s0 = inlined_call_operand.vmem [shape: bf16[80,128], index: 0, kind: input, shape index: {}]
  %s1 = inlined_call_operand.vmem [shape: bf16[128,128], index: 1, kind: input, shape index: {}]
  %s2 = inlined_call_operand.vmem [shape: f32[1,128], index: 2, kind: input, shape index: {}]
  %s3 = inlined_call_operand.vmem [shape: f32[1,128], index: 3, kind: input, shape index: {}]
  %s4 = inlined_call_operand.vmem [shape: bf16[80,128], index: 4, kind: output, shape index: {}]
  %s5 = sld [smem:[#allocation0]]
  $region26: #{_lambda_.13} parent=0
    _
  %s7 = ssub.s32 1, %s5
  %s8 = scalar_select 0, %s7, %s5
  // Predicated region
  $region2: #{_lambda_.13} parent=0 // pred_check
    _
  $region3: #{_lambda_.13} parent=0 // pred_check_branch
    %10 = sbr.rel (0) target = $region5
  $region4: #{_lambda_.13} parent=0 // pred_region
    _
  $region5: #{_lambda_.13} parent=0 // pred_fallthru
    _
  // Predicated region
  $region6: #{_lambda_.13} parent=0 // pred_check
    _
  $region7: #{_lambda_.13} parent=0 // pred_check_branch
    %12 = sbr.rel (0) target = $region9
  $region8: #{_lambda_.13} parent=0 // pred_region
    _
  $region9: #{_lambda_.13} parent=0 // pred_fallthru
    _
  // Predicated region
  $region10: #{_lambda_.13} parent=0 // pred_check
    _
  $region11: #{_lambda_.13} parent=0 // pred_check_branch
    %14 = sbr.rel (0) target = $region13
  $region12: #{_lambda_.13} parent=0 // pred_region
    _
  $region13: #{_lambda_.13} parent=0 // pred_fallthru
    _
  // Predicated region
  $region14: #{_lambda_.13} parent=0 // pred_check
    _
  $region15: #{_lambda_.13} parent=0 // pred_check_branch
    %16 = sbr.rel (0) target = $region17
  $region16: #{_lambda_.13} parent=0 // pred_region
    _
  $region17: #{_lambda_.13} parent=0 // pred_fallthru
    _
  %v18 = vld [vmem:[%s0] sm:$0xf]
  %v19 = vld [vmem:[%s0 + $0x4] sm:$0xf]
  %v20 = vld [vmem:[%s0 + $0x8] sm:$0xf]
  %v21 = vld [vmem:[%s0 + $0xc] sm:$0xf]
  %v22 = vld [vmem:[%s0 + $0x10] sm:$0xf]
  %v23 = vld [vmem:[%s0 + $0x14] sm:$0xf]
  %v24 = vld [vmem:[%s0 + $0x18] sm:$0xf]
  %v25 = vld [vmem:[%s0 + $0x1c] sm:$0xf]
  %v26 = vld [vmem:[%s0 + $0x20] sm:$0xf]
  %v27 = vld [vmem:[%s0 + $0x24] sm:$0xf]
  %v28 = vld [vmem:[%s1] sm:$0xf]
  %v29 = vld [vmem:[%s1 + $0x4] sm:$0xf]
  %v30 = vld [vmem:[%s1 + $0x8] sm:$0xf]
  %v31 = vld [vmem:[%s1 + $0xc] sm:$0xf]
  %v32 = vld [vmem:[%s1 + $0x10] sm:$0xf]
  %v33 = vld [vmem:[%s1 + $0x14] sm:$0xf]
  %v34 = vld [vmem:[%s1 + $0x18] sm:$0xf]
  %v35 = vld [vmem:[%s1 + $0x1c] sm:$0xf]
  %v36 = vld [vmem:[%s1 + $0x20] sm:$0xf]
  %v37 = vld [vmem:[%s1 + $0x24] sm:$0xf]
  %v38 = vld [vmem:[%s1 + $0x28] sm:$0xf]
  %v39 = vld [vmem:[%s1 + $0x2c] sm:$0xf]
  %v40 = vld [vmem:[%s1 + $0x30] sm:$0xf]
  %v41 = vld [vmem:[%s1 + $0x34] sm:$0xf]
  %v42 = vld [vmem:[%s1 + $0x38] sm:$0xf]
  %v43 = vld [vmem:[%s1 + $0x3c] sm:$0xf]
  %v54 = vunpack.c.l.b16 %v18
  %v55 = vunpack.c.l.b16 %v19
  %v56 = vunpack.c.l.b16 %v20
  %v57 = vunpack.c.l.b16 %v21
  %v58 = vunpack.c.l.b16 %v22
  %v59 = vunpack.c.l.b16 %v23
  %v60 = vunpack.c.l.b16 %v24
  %v61 = vunpack.c.l.b16 %v25
  %v62 = vunpack.c.l.b16 %v26
  %v63 = vunpack.c.l.b16 %v27
  %v64 = vpack.c.b16 %v55, %v54
  %v65 = vpack.c.b16 %v57, %v56
  %v66 = vpack.c.b16 %v59, %v58
  %v67 = vpack.c.b16 %v61, %v60
  %v68 = vpack.c.b16 %v63, %v62
  %v90 = vunpack.c.l.b16 %v28
  %v91 = vunpack.c.l.b16 %v29
  %v92 = vunpack.c.l.b16 %v30
  %v93 = vunpack.c.l.b16 %v31
  %v94 = vunpack.c.l.b16 %v32
  %v95 = vunpack.c.l.b16 %v33
  %v96 = vunpack.c.l.b16 %v34
  %v97 = vunpack.c.l.b16 %v35
  %v98 = vunpack.c.l.b16 %v36
  %v99 = vunpack.c.l.b16 %v37
  %v100 = vunpack.c.l.b16 %v38
  %v101 = vunpack.c.l.b16 %v39
  %v102 = vunpack.c.l.b16 %v40
  %v103 = vunpack.c.l.b16 %v41
  %v104 = vunpack.c.l.b16 %v42
  %v105 = vunpack.c.l.b16 %v43
  %v106 = vpack.c.b16 %v91, %v90
  %v107 = vpack.c.b16 %v93, %v92
  %v108 = vpack.c.b16 %v95, %v94
  %v109 = vpack.c.b16 %v97, %v96
  %v110 = vpack.c.b16 %v99, %v98
  %v111 = vpack.c.b16 %v101, %v100
  %v112 = vpack.c.b16 %v103, %v102
  %v113 = vpack.c.b16 %v105, %v104
  %122 = vmatprep.subr.bf16.mxu0 0
  %123 = vmatpush1.bf16.msra.mxu0 %v113
  %124 = vmatprep.subr.bf16.mxu0 0
  %125 = vmatpush1.bf16.msra.mxu0 %v112
  %126 = vmatprep.subr.bf16.mxu0 0
  %127 = vmatpush1.bf16.msra.mxu0 %v111
  %128 = vmatprep.subr.bf16.mxu0 0
  %129 = vmatpush1.bf16.msra.mxu0 %v110
  %130 = vmatprep.subr.bf16.mxu0 0
  %131 = vmatpush1.bf16.msra.mxu0 %v109
  %132 = vmatprep.subr.bf16.mxu0 0
  %133 = vmatpush1.bf16.msra.mxu0 %v108
  %134 = vmatprep.subr.bf16.mxu0 0
  %135 = vmatpush1.bf16.msra.mxu0 %v107
  %136 = vmatprep.subr.bf16.mxu0 0
  %137 = vmatpush1.bf16.msra.mxu0 %v106
  %138 = vmatprep.subr.bf16.mxu0 0
  %139 = vmatpush2.bf16.msra.mxu0 0
  %140 = vmatprep.subr.bf16.mxu0 0
  %141 = vmatpush2.bf16.msra.mxu0 0
  %142 = vmatprep.subr.bf16.mxu0 0
  %143 = vmatpush2.bf16.msra.mxu0 0
  %144 = vmatprep.subr.bf16.mxu0 0
  %145 = vmatpush2.bf16.msra.mxu0 0
  %146 = vmatprep.subr.bf16.mxu0 0
  %147 = vmatpush2.bf16.msra.mxu0 0
  %148 = vmatprep.subr.bf16.mxu0 0
  %149 = vmatpush2.bf16.msra.mxu0 0
  %150 = vmatprep.subr.bf16.mxu0 0
  %151 = vmatpush2.bf16.msra.mxu0 0
  %152 = vmatprep.subr.bf16.mxu0 0
  %153 = vmatpush2.bf16.msra.mxu0 0
  %154 = vmatprep.mubr.bf16.mxu0 0
  %155 = vmatmul.mubr.bf16.gmra.mxu0 %v64
  %v156 = vpop.f32.mrf.mxu0
  %v157 = vadd.f32 0.0, %v156
  %v158 = vpop.f32.mrf.mxu0
  %v159 = vpop.f32.mrf.mxu0
  %v160 = vadd.f32 0.0, %v159
  %v161 = vpop.f32.mrf.mxu0
  %162 = vmatprep.mubr.bf16.mxu0 0
  %163 = vmatmul.mubr.bf16.gmra.mxu0 %v65
  %v164 = vpop.f32.mrf.mxu0
  %v165 = vadd.f32 0.0, %v164
  %v166 = vpop.f32.mrf.mxu0
  %v167 = vpop.f32.mrf.mxu0
  %v168 = vadd.f32 0.0, %v167
  %v169 = vpop.f32.mrf.mxu0
  %170 = vmatprep.mubr.bf16.mxu0 0
  %171 = vmatmul.mubr.bf16.gmra.mxu0 %v66
  %v172 = vpop.f32.mrf.mxu0
  %v173 = vadd.f32 0.0, %v172
  %v174 = vpop.f32.mrf.mxu0
  %v175 = vpop.f32.mrf.mxu0
  %v176 = vadd.f32 0.0, %v175
  %v177 = vpop.f32.mrf.mxu0
  %178 = vmatprep.mubr.bf16.mxu0 0
  %179 = vmatmul.mubr.bf16.gmra.mxu0 %v67
  %v180 = vpop.f32.mrf.mxu0
  %v181 = vadd.f32 0.0, %v180
  %v182 = vpop.f32.mrf.mxu0
  %v183 = vpop.f32.mrf.mxu0
  %v184 = vadd.f32 0.0, %v183
  %v185 = vpop.f32.mrf.mxu0
  %186 = vmatprep.mubr.bf16.mxu0 0
  %187 = vmatmul.mubr.bf16.gmra.mxu0 %v68
  %v188 = vpop.f32.mrf.mxu0
  %v189 = vadd.f32 0.0, %v188
  %v190 = vpop.f32.mrf.mxu0
  %v191 = vpop.f32.mrf.mxu0
  %v192 = vadd.f32 0.0, %v191
  %v193 = vpop.f32.mrf.mxu0
  %194 = vdwg.mxu0
  %v195 = vld [vmem:[%s2] sm:$0x1]
  %v197 = vlaneseq
  %v198 = vshrl.u32 %v197, 7
  %v199 = vsub.s32 0, %v198
  %v200 = vrot.slane %v195, %v199
  %v202 = vmul.f32 %v157, %v200
  %v203 = vmul.f32 %v160, %v200
  %v204 = vmul.f32 %v165, %v200
  %v205 = vmul.f32 %v168, %v200
  %v206 = vmul.f32 %v173, %v200
  %v207 = vmul.f32 %v176, %v200
  %v208 = vmul.f32 %v181, %v200
  %v209 = vmul.f32 %v184, %v200
  %v210 = vmul.f32 %v189, %v200
  %v211 = vmul.f32 %v192, %v200
  %v212 = vld [vmem:[%s3] sm:$0x1]
  %v214 = vlaneseq
  %v215 = vshrl.u32 %v214, 7
  %v216 = vsub.s32 0, %v215
  %v217 = vrot.slane %v212, %v216
  %v219 = vadd.f32 %v202, %v217
  %v220 = vadd.f32 %v203, %v217
  %v221 = vadd.f32 %v204, %v217
  %v222 = vadd.f32 %v205, %v217
  %v223 = vadd.f32 %v206, %v217
  %v224 = vadd.f32 %v207, %v217
  %v225 = vadd.f32 %v208, %v217
  %v226 = vadd.f32 %v209, %v217
  %v227 = vadd.f32 %v210, %v217
  %v228 = vadd.f32 %v211, %v217
  %v229 = vmax.f32 %v219, 0.0
  %v230 = vmax.f32 %v220, 0.0
  %v231 = vmax.f32 %v221, 0.0
  %v232 = vmax.f32 %v222, 0.0
  %v233 = vmax.f32 %v223, 0.0
  %v234 = vmax.f32 %v224, 0.0
  %v235 = vmax.f32 %v225, 0.0
  %v236 = vmax.f32 %v226, 0.0
  %v237 = vmax.f32 %v227, 0.0
  %v238 = vmax.f32 %v228, 0.0
  %v239 = vpack.c.bf16 %v230, %v229
  %v240 = vpack.c.bf16 %v232, %v231
  %v241 = vpack.c.bf16 %v234, %v233
  %v242 = vpack.c.bf16 %v236, %v235
  %v243 = vpack.c.bf16 %v238, %v237
  %v249 = vunpack.c.l.b16 %v239
  %v250 = vunpack.c.h.b16 %v239
  %v251 = vunpack.c.l.b16 %v240
  %v252 = vunpack.c.h.b16 %v240
  %v253 = vunpack.c.l.b16 %v241
  %v254 = vunpack.c.h.b16 %v241
  %v255 = vunpack.c.l.b16 %v242
  %v256 = vunpack.c.h.b16 %v242
  %v257 = vunpack.c.l.b16 %v243
  %v258 = vunpack.c.h.b16 %v243
  %v259 = vpack.c.b16 %v249, %v249
  %v260 = vpack.c.b16 %v250, %v250
  %v261 = vpack.c.b16 %v251, %v251
  %v262 = vpack.c.b16 %v252, %v252
  %v263 = vpack.c.b16 %v253, %v253
  %v264 = vpack.c.b16 %v254, %v254
  %v265 = vpack.c.b16 %v255, %v255
  %v266 = vpack.c.b16 %v256, %v256
  %v267 = vpack.c.b16 %v257, %v257
  %v268 = vpack.c.b16 %v258, %v258
  %279 = vst [vmem:[%s4] sm:$0xf] %v259
  %280 = vst [vmem:[%s4 + $0x4] sm:$0xf] %v260
  %281 = vst [vmem:[%s4 + $0x8] sm:$0xf] %v261
  %282 = vst [vmem:[%s4 + $0xc] sm:$0xf] %v262
  %283 = vst [vmem:[%s4 + $0x10] sm:$0xf] %v263
  %284 = vst [vmem:[%s4 + $0x14] sm:$0xf] %v264
  %285 = vst [vmem:[%s4 + $0x18] sm:$0xf] %v265
  %286 = vst [vmem:[%s4 + $0x1c] sm:$0xf] %v266
  %287 = vst [vmem:[%s4 + $0x20] sm:$0xf] %v267
  %288 = vst [vmem:[%s4 + $0x24] sm:$0xf] %v268
  // Predicated region
  $region18: #{_lambda_.13} parent=0 // pred_check
    _
  $region19: #{_lambda_.13} parent=0 // pred_check_branch
    %290 = sbr.rel (0) target = $region21
  $region20: #{_lambda_.13} parent=0 // pred_region
    _
  $region21: #{_lambda_.13} parent=0 // pred_fallthru
    _
  // Predicated region
  $region22: #{_lambda_.13} parent=0 // pred_check
    _
  $region23: #{_lambda_.13} parent=0 // pred_check_branch
    %292 = sbr.rel (0) target = $region25
  $region24: #{_lambda_.13} parent=0 // pred_region
    _
  $region25: #{_lambda_.13} parent=0 // pred_fallthru
    _

// kernel: _lambda_.15
$region0: #{_lambda_.15}
  #allocation0 [shape = 'u32[]', space=smem, size = 0x4, offset = 0x4, fixed_abs, tag = 'smem constant byte address 0x4 - core index']
  #allocation1 [shape = 'u32[144,128]{1,0:T(1,128)}', space=vmem, size = 0x12000, scoped, tag = 'internal scratch']
  %s0 = inlined_call_operand.vmem [shape: bf16[128,128], index: 0, kind: input, shape index: {}]
  %s1 = inlined_call_operand.vmem [shape: bf16[128,128], index: 1, kind: input, shape index: {}]
  %s2 = inlined_call_operand.vmem [shape: bf16[128,128], index: 2, kind: input, shape index: {}]
  %s3 = inlined_call_operand.vmem [shape: bf16[128,128], index: 3, kind: input, shape index: {}]
  %s4 = inlined_call_operand.vmem [shape: bf16[128,128], index: 4, kind: input, shape index: {}]
  %s5 = inlined_call_operand.vmem [shape: f32[1,128], index: 5, kind: input, shape index: {}]
  %s6 = inlined_call_operand.vmem [shape: f32[1,128], index: 6, kind: input, shape index: {}]
  %s7 = inlined_call_operand.vmem [shape: f32[1,128], index: 7, kind: input, shape index: {}]
  %s8 = inlined_call_operand.vmem [shape: bf16[128,128], index: 8, kind: output, shape index: {}]
  %s9 = sld [smem:[#allocation0]]
  $region42: #{_lambda_.15} parent=0
    _
  %s11 = ssub.s32 1, %s9
  %s12 = scalar_select 0, %s11, %s9
  // Predicated region
  $region2: #{_lambda_.15} parent=0 // pred_check
    _
  $region3: #{_lambda_.15} parent=0 // pred_check_branch
    %14 = sbr.rel (0) target = $region5
  $region4: #{_lambda_.15} parent=0 // pred_region
    _
  $region5: #{_lambda_.15} parent=0 // pred_fallthru
    _
  // Predicated region
  $region6: #{_lambda_.15} parent=0 // pred_check
    _
  $region7: #{_lambda_.15} parent=0 // pred_check_branch
    %16 = sbr.rel (0) target = $region9
  $region8: #{_lambda_.15} parent=0 // pred_region
    _
  $region9: #{_lambda_.15} parent=0 // pred_fallthru
    _
  // Predicated region
  $region10: #{_lambda_.15} parent=0 // pred_check
    _
  $region11: #{_lambda_.15} parent=0 // pred_check_branch
    %18 = sbr.rel (0) target = $region13
  $region12: #{_lambda_.15} parent=0 // pred_region
    _
  $region13: #{_lambda_.15} parent=0 // pred_fallthru
    _
  // Predicated region
  $region14: #{_lambda_.15} parent=0 // pred_check
    _
  $region15: #{_lambda_.15} parent=0 // pred_check_branch
    %20 = sbr.rel (0) target = $region17
  $region16: #{_lambda_.15} parent=0 // pred_region
    _
  $region17: #{_lambda_.15} parent=0 // pred_fallthru
    _
  // Predicated region
  $region18: #{_lambda_.15} parent=0 // pred_check
    _
  $region19: #{_lambda_.15} parent=0 // pred_check_branch
    %22 = sbr.rel (0) target = $region21
  $region20: #{_lambda_.15} parent=0 // pred_region
    _
  $region21: #{_lambda_.15} parent=0 // pred_fallthru
    _
  // Predicated region
  $region22: #{_lambda_.15} parent=0 // pred_check
    _
  $region23: #{_lambda_.15} parent=0 // pred_check_branch
    %24 = sbr.rel (0) target = $region25
  $region24: #{_lambda_.15} parent=0 // pred_region
    _
  $region25: #{_lambda_.15} parent=0 // pred_fallthru
    _
  // Predicated region
  $region26: #{_lambda_.15} parent=0 // pred_check
    _
  $region27: #{_lambda_.15} parent=0 // pred_check_branch
    %26 = sbr.rel (0) target = $region29
  $region28: #{_lambda_.15} parent=0 // pred_region
    _
  $region29: #{_lambda_.15} parent=0 // pred_fallthru
    _
  // Predicated region
  $region30: #{_lambda_.15} parent=0 // pred_check
    _
  $region31: #{_lambda_.15} parent=0 // pred_check_branch
    %28 = sbr.rel (0) target = $region33
  $region32: #{_lambda_.15} parent=0 // pred_region
    _
  $region33: #{_lambda_.15} parent=0 // pred_fallthru
    _
  %v30 = vld [vmem:[%s0] sm:$0xf]
  %v31 = vld [vmem:[%s0 + $0x4] sm:$0xf]
  %v32 = vld [vmem:[%s0 + $0x8] sm:$0xf]
  %v33 = vld [vmem:[%s0 + $0xc] sm:$0xf]
  %v34 = vld [vmem:[%s0 + $0x10] sm:$0xf]
  %v35 = vld [vmem:[%s0 + $0x14] sm:$0xf]
  %v36 = vld [vmem:[%s0 + $0x18] sm:$0xf]
  %v37 = vld [vmem:[%s0 + $0x1c] sm:$0xf]
  %v38 = vld [vmem:[%s0 + $0x20] sm:$0xf]
  %v39 = vld [vmem:[%s0 + $0x24] sm:$0xf]
  %v40 = vld [vmem:[%s0 + $0x28] sm:$0xf]
  %v41 = vld [vmem:[%s0 + $0x2c] sm:$0xf]
  %v42 = vld [vmem:[%s0 + $0x30] sm:$0xf]
  %v43 = vld [vmem:[%s0 + $0x34] sm:$0xf]
  %v44 = vld [vmem:[%s0 + $0x38] sm:$0xf]
  %v45 = vld [vmem:[%s0 + $0x3c] sm:$0xf]
  %v46 = vld [vmem:[%s3] sm:$0xf]
  %v47 = vld [vmem:[%s3 + $0x4] sm:$0xf]
  %v48 = vld [vmem:[%s3 + $0x8] sm:$0xf]
  %v49 = vld [vmem:[%s3 + $0xc] sm:$0xf]
  %v50 = vld [vmem:[%s3 + $0x10] sm:$0xf]
  %v51 = vld [vmem:[%s3 + $0x14] sm:$0xf]
  %v52 = vld [vmem:[%s3 + $0x18] sm:$0xf]
  %v53 = vld [vmem:[%s3 + $0x1c] sm:$0xf]
  %v54 = vld [vmem:[%s3 + $0x20] sm:$0xf]
  %v55 = vld [vmem:[%s3 + $0x24] sm:$0xf]
  %v56 = vld [vmem:[%s3 + $0x28] sm:$0xf]
  %v57 = vld [vmem:[%s3 + $0x2c] sm:$0xf]
  %v58 = vld [vmem:[%s3 + $0x30] sm:$0xf]
  %v59 = vld [vmem:[%s3 + $0x34] sm:$0xf]
  %v60 = vld [vmem:[%s3 + $0x38] sm:$0xf]
  %v61 = vld [vmem:[%s3 + $0x3c] sm:$0xf]
  %v62 = vld [vmem:[%s1] sm:$0xf]
  %v63 = vld [vmem:[%s1 + $0x4] sm:$0xf]
  %v64 = vld [vmem:[%s1 + $0x8] sm:$0xf]
  %v65 = vld [vmem:[%s1 + $0xc] sm:$0xf]
  %v66 = vld [vmem:[%s1 + $0x10] sm:$0xf]
  %v67 = vld [vmem:[%s1 + $0x14] sm:$0xf]
  %v68 = vld [vmem:[%s1 + $0x18] sm:$0xf]
  %v69 = vld [vmem:[%s1 + $0x1c] sm:$0xf]
  %v70 = vld [vmem:[%s1 + $0x20] sm:$0xf]
  %v71 = vld [vmem:[%s1 + $0x24] sm:$0xf]
  %v72 = vld [vmem:[%s1 + $0x28] sm:$0xf]
  %v73 = vld [vmem:[%s1 + $0x2c] sm:$0xf]
  %v74 = vld [vmem:[%s1 + $0x30] sm:$0xf]
  %v75 = vld [vmem:[%s1 + $0x34] sm:$0xf]
  %v76 = vld [vmem:[%s1 + $0x38] sm:$0xf]
  %v77 = vld [vmem:[%s1 + $0x3c] sm:$0xf]
  %v78 = vld [vmem:[%s2] sm:$0xf]
  %v79 = vld [vmem:[%s2 + $0x4] sm:$0xf]
  %v80 = vld [vmem:[%s2 + $0x8] sm:$0xf]
  %v81 = vld [vmem:[%s2 + $0xc] sm:$0xf]
  %v82 = vld [vmem:[%s2 + $0x10] sm:$0xf]
  %v83 = vld [vmem:[%s2 + $0x14] sm:$0xf]
  %v84 = vld [vmem:[%s2 + $0x18] sm:$0xf]
  %v85 = vld [vmem:[%s2 + $0x1c] sm:$0xf]
  %v86 = vld [vmem:[%s2 + $0x20] sm:$0xf]
  %v87 = vld [vmem:[%s2 + $0x24] sm:$0xf]
  %v88 = vld [vmem:[%s2 + $0x28] sm:$0xf]
  %v89 = vld [vmem:[%s2 + $0x2c] sm:$0xf]
  %v90 = vld [vmem:[%s2 + $0x30] sm:$0xf]
  %v91 = vld [vmem:[%s2 + $0x34] sm:$0xf]
  %v92 = vld [vmem:[%s2 + $0x38] sm:$0xf]
  %v93 = vld [vmem:[%s2 + $0x3c] sm:$0xf]
  %v94 = vadd.bf16 %v62, %v78
  %v95 = vadd.bf16 %v63, %v79
  %v96 = vadd.bf16 %v64, %v80
  %v97 = vadd.bf16 %v65, %v81
  %v98 = vadd.bf16 %v66, %v82
  %v99 = vadd.bf16 %v67, %v83
  %v100 = vadd.bf16 %v68, %v84
  %v101 = vadd.bf16 %v69, %v85
  %v102 = vadd.bf16 %v70, %v86
  %v103 = vadd.bf16 %v71, %v87
  %v104 = vadd.bf16 %v72, %v88
  %v105 = vadd.bf16 %v73, %v89
  %v106 = vadd.bf16 %v74, %v90
  %v107 = vadd.bf16 %v75, %v91
  %v108 = vadd.bf16 %v76, %v92
  %v109 = vadd.bf16 %v77, %v93
  %v110 = vld [vmem:[%s4] sm:$0xf]
  %v111 = vld [vmem:[%s4 + $0x4] sm:$0xf]
  %v112 = vld [vmem:[%s4 + $0x8] sm:$0xf]
  %v113 = vld [vmem:[%s4 + $0xc] sm:$0xf]
  %v114 = vld [vmem:[%s4 + $0x10] sm:$0xf]
  %v115 = vld [vmem:[%s4 + $0x14] sm:$0xf]
  %v116 = vld [vmem:[%s4 + $0x18] sm:$0xf]
  %v117 = vld [vmem:[%s4 + $0x1c] sm:$0xf]
  %v118 = vld [vmem:[%s4 + $0x20] sm:$0xf]
  %v119 = vld [vmem:[%s4 + $0x24] sm:$0xf]
  %v120 = vld [vmem:[%s4 + $0x28] sm:$0xf]
  %v121 = vld [vmem:[%s4 + $0x2c] sm:$0xf]
  %v122 = vld [vmem:[%s4 + $0x30] sm:$0xf]
  %v123 = vld [vmem:[%s4 + $0x34] sm:$0xf]
  %v124 = vld [vmem:[%s4 + $0x38] sm:$0xf]
  %v125 = vld [vmem:[%s4 + $0x3c] sm:$0xf]
  %v142 = vunpack.c.l.b16 %v94
  %v143 = vunpack.c.l.b16 %v95
  %v144 = vunpack.c.l.b16 %v96
  %v145 = vunpack.c.l.b16 %v97
  %v146 = vunpack.c.l.b16 %v98
  %v147 = vunpack.c.l.b16 %v99
  %v148 = vunpack.c.l.b16 %v100
  %v149 = vunpack.c.l.b16 %v101
  %v150 = vunpack.c.l.b16 %v102
  %v151 = vunpack.c.l.b16 %v103
  %v152 = vunpack.c.l.b16 %v104
  %v153 = vunpack.c.l.b16 %v105
  %v154 = vunpack.c.l.b16 %v106
  %v155 = vunpack.c.l.b16 %v107
  %v156 = vunpack.c.l.b16 %v108
  %v157 = vunpack.c.l.b16 %v109
  %v158 = vpack.c.b16 %v143, %v142
  %v159 = vpack.c.b16 %v145, %v144
  %v160 = vpack.c.b16 %v147, %v146
  %v161 = vpack.c.b16 %v149, %v148
  %v162 = vpack.c.b16 %v151, %v150
  %v163 = vpack.c.b16 %v153, %v152
  %v164 = vpack.c.b16 %v155, %v154
  %v165 = vpack.c.b16 %v157, %v156
  %v190 = vunpack.c.l.b16 %v110
  %v191 = vunpack.c.l.b16 %v111
  %v192 = vunpack.c.l.b16 %v112
  %v193 = vunpack.c.l.b16 %v113
  %v194 = vunpack.c.l.b16 %v114
  %v195 = vunpack.c.l.b16 %v115
  %v196 = vunpack.c.l.b16 %v116
  %v197 = vunpack.c.l.b16 %v117
  %v198 = vunpack.c.l.b16 %v118
  %v199 = vunpack.c.l.b16 %v119
  %v200 = vunpack.c.l.b16 %v120
  %v201 = vunpack.c.l.b16 %v121
  %v202 = vunpack.c.l.b16 %v122
  %v203 = vunpack.c.l.b16 %v123
  %v204 = vunpack.c.l.b16 %v124
  %v205 = vunpack.c.l.b16 %v125
  %v206 = vpack.c.b16 %v191, %v190
  %v207 = vpack.c.b16 %v193, %v192
  %v208 = vpack.c.b16 %v195, %v194
  %v209 = vpack.c.b16 %v197, %v196
  %v210 = vpack.c.b16 %v199, %v198
  %v211 = vpack.c.b16 %v201, %v200
  %v212 = vpack.c.b16 %v203, %v202
  %v213 = vpack.c.b16 %v205, %v204
  %222 = vmatprep.subr.bf16.mxu0 0
  %223 = vmatpush1.bf16.msra.mxu0 %v213
  %224 = vmatprep.subr.bf16.mxu0 0
  %225 = vmatpush1.bf16.msra.mxu0 %v212
  %226 = vmatprep.subr.bf16.mxu0 0
  %227 = vmatpush1.bf16.msra.mxu0 %v211
  %228 = vmatprep.subr.bf16.mxu0 0
  %229 = vmatpush1.bf16.msra.mxu0 %v210
  %230 = vmatprep.subr.bf16.mxu0 0
  %231 = vmatpush1.bf16.msra.mxu0 %v209
  %232 = vmatprep.subr.bf16.mxu0 0
  %233 = vmatpush1.bf16.msra.mxu0 %v208
  %234 = vmatprep.subr.bf16.mxu0 0
  %235 = vmatpush1.bf16.msra.mxu0 %v207
  %236 = vmatprep.subr.bf16.mxu0 0
  %237 = vmatpush1.bf16.msra.mxu0 %v206
  %238 = vmatprep.subr.bf16.mxu0 0
  %239 = vmatpush2.bf16.msra.mxu0 0
  %240 = vmatprep.subr.bf16.mxu0 0
  %241 = vmatpush2.bf16.msra.mxu0 0
  %242 = vmatprep.subr.bf16.mxu0 0
  %243 = vmatpush2.bf16.msra.mxu0 0
  %244 = vmatprep.subr.bf16.mxu0 0
  %245 = vmatpush2.bf16.msra.mxu0 0
  %246 = vmatprep.subr.bf16.mxu0 0
  %247 = vmatpush2.bf16.msra.mxu0 0
  %248 = vmatprep.subr.bf16.mxu0 0
  %249 = vmatpush2.bf16.msra.mxu0 0
  %250 = vmatprep.subr.bf16.mxu0 0
  %251 = vmatpush2.bf16.msra.mxu0 0
  %252 = vmatprep.subr.bf16.mxu0 0
  %253 = vmatpush2.bf16.msra.mxu0 0
  %254 = vmatprep.mubr.bf16.mxu0 0
  %255 = vmatmul.mubr.bf16.gmra.mxu0 %v158
  %v256 = vpop.f32.mrf.mxu0
  %v257 = vadd.f32 0.0, %v256
  %v258 = vpop.f32.mrf.mxu0
  %v259 = vpop.f32.mrf.mxu0
  %v260 = vadd.f32 0.0, %v259
  %v261 = vpop.f32.mrf.mxu0
  %262 = vmatprep.mubr.bf16.mxu0 0
  %263 = vmatmul.mubr.bf16.gmra.mxu0 %v159
  %v264 = vpop.f32.mrf.mxu0
  %v265 = vadd.f32 0.0, %v264
  %v266 = vpop.f32.mrf.mxu0
  %v267 = vpop.f32.mrf.mxu0
  %v268 = vadd.f32 0.0, %v267
  %v269 = vpop.f32.mrf.mxu0
  %270 = vmatprep.mubr.bf16.mxu0 0
  %271 = vmatmul.mubr.bf16.gmra.mxu0 %v160
  %v272 = vpop.f32.mrf.mxu0
  %v273 = vadd.f32 0.0, %v272
  %v274 = vpop.f32.mrf.mxu0
  %v275 = vpop.f32.mrf.mxu0
  %v276 = vadd.f32 0.0, %v275
  %v277 = vpop.f32.mrf.mxu0
  %278 = vmatprep.mubr.bf16.mxu0 0
  %279 = vmatmul.mubr.bf16.gmra.mxu0 %v161
  %v280 = vpop.f32.mrf.mxu0
  %v281 = vadd.f32 0.0, %v280
  %v282 = vpop.f32.mrf.mxu0
  %v283 = vpop.f32.mrf.mxu0
  %v284 = vadd.f32 0.0, %v283
  %v285 = vpop.f32.mrf.mxu0
  %286 = vmatprep.mubr.bf16.mxu0 0
  %287 = vmatmul.mubr.bf16.gmra.mxu0 %v162
  %v288 = vpop.f32.mrf.mxu0
  %v289 = vadd.f32 0.0, %v288
  %v290 = vpop.f32.mrf.mxu0
  %v291 = vpop.f32.mrf.mxu0
  %v292 = vadd.f32 0.0, %v291
  %v293 = vpop.f32.mrf.mxu0
  %294 = vmatprep.mubr.bf16.mxu0 0
  %295 = vmatmul.mubr.bf16.gmra.mxu0 %v163
  %v296 = vpop.f32.mrf.mxu0
  %v297 = vadd.f32 0.0, %v296
  %v298 = vpop.f32.mrf.mxu0
  %v299 = vpop.f32.mrf.mxu0
  %v300 = vadd.f32 0.0, %v299
  %v301 = vpop.f32.mrf.mxu0
  %302 = vmatprep.mubr.bf16.mxu0 0
  %303 = vmatmul.mubr.bf16.gmra.mxu0 %v164
  %v304 = vpop.f32.mrf.mxu0
  %v305 = vadd.f32 0.0, %v304
  %v306 = vpop.f32.mrf.mxu0
  %v307 = vpop.f32.mrf.mxu0
  %v308 = vadd.f32 0.0, %v307
  %v309 = vpop.f32.mrf.mxu0
  %310 = vmatprep.mubr.bf16.mxu0 0
  %311 = vmatmul.mubr.bf16.gmra.mxu0 %v165
  %v312 = vpop.f32.mrf.mxu0
  %v313 = vadd.f32 0.0, %v312
  %v314 = vpop.f32.mrf.mxu0
  %v315 = vpop.f32.mrf.mxu0
  %v316 = vadd.f32 0.0, %v315
  %v317 = vpop.f32.mrf.mxu0
  %318 = vdwg.mxu0
  %v335 = vunpack.c.l.b16 %v30
  %v336 = vunpack.c.l.b16 %v31
  %v337 = vunpack.c.l.b16 %v32
  %v338 = vunpack.c.l.b16 %v33
  %v339 = vunpack.c.l.b16 %v34
  %v340 = vunpack.c.l.b16 %v35
  %v341 = vunpack.c.l.b16 %v36
  %v342 = vunpack.c.l.b16 %v37
  %v343 = vunpack.c.l.b16 %v38
  %v344 = vunpack.c.l.b16 %v39
  %v345 = vunpack.c.l.b16 %v40
  %v346 = vunpack.c.l.b16 %v41
  %v347 = vunpack.c.l.b16 %v42
  %v348 = vunpack.c.l.b16 %v43
  %v349 = vunpack.c.l.b16 %v44
  %v350 = vunpack.c.l.b16 %v45
  %v351 = vpack.c.b16 %v336, %v335
  %v352 = vpack.c.b16 %v338, %v337
  %v353 = vpack.c.b16 %v340, %v339
  %v354 = vpack.c.b16 %v342, %v341
  %v355 = vpack.c.b16 %v344, %v343
  %v356 = vpack.c.b16 %v346, %v345
  %v357 = vpack.c.b16 %v348, %v347
  %v358 = vpack.c.b16 %v350, %v349
  %v383 = vunpack.c.l.b16 %v46
  %v384 = vunpack.c.l.b16 %v47
  %v385 = vunpack.c.l.b16 %v48
  %v386 = vunpack.c.l.b16 %v49
  %v387 = vunpack.c.l.b16 %v50
  %v388 = vunpack.c.l.b16 %v51
  %v389 = vunpack.c.l.b16 %v52
  %v390 = vunpack.c.l.b16 %v53
  %v391 = vunpack.c.l.b16 %v54
  %v392 = vunpack.c.l.b16 %v55
  %v393 = vunpack.c.l.b16 %v56
  %v394 = vunpack.c.l.b16 %v57
  %v395 = vunpack.c.l.b16 %v58
  %v396 = vunpack.c.l.b16 %v59
  %v397 = vunpack.c.l.b16 %v60
  %v398 = vunpack.c.l.b16 %v61
  %v399 = vpack.c.b16 %v384, %v383
  %v400 = vpack.c.b16 %v386, %v385
  %v401 = vpack.c.b16 %v388, %v387
  %v402 = vpack.c.b16 %v390, %v389
  %v403 = vpack.c.b16 %v392, %v391
  %v404 = vpack.c.b16 %v394, %v393
  %v405 = vpack.c.b16 %v396, %v395
  %v406 = vpack.c.b16 %v398, %v397
  %415 = vmatprep.subr.bf16.mxu0 0
  %416 = vmatpush1.bf16.msra.mxu0 %v406
  %417 = vmatprep.subr.bf16.mxu0 0
  %418 = vmatpush1.bf16.msra.mxu0 %v405
  %419 = vmatprep.subr.bf16.mxu0 0
  %420 = vmatpush1.bf16.msra.mxu0 %v404
  %421 = vmatprep.subr.bf16.mxu0 0
  %422 = vmatpush1.bf16.msra.mxu0 %v403
  %423 = vmatprep.subr.bf16.mxu0 0
  %424 = vmatpush1.bf16.msra.mxu0 %v402
  %425 = vmatprep.subr.bf16.mxu0 0
  %426 = vmatpush1.bf16.msra.mxu0 %v401
  %427 = vmatprep.subr.bf16.mxu0 0
  %428 = vmatpush1.bf16.msra.mxu0 %v400
  %429 = vmatprep.subr.bf16.mxu0 0
  %430 = vmatpush1.bf16.msra.mxu0 %v399
  %431 = vmatprep.subr.bf16.mxu0 0
  %432 = vmatpush2.bf16.msra.mxu0 0
  %433 = vmatprep.subr.bf16.mxu0 0
  %434 = vmatpush2.bf16.msra.mxu0 0
  %435 = vmatprep.subr.bf16.mxu0 0
  %436 = vmatpush2.bf16.msra.mxu0 0
  %437 = vmatprep.subr.bf16.mxu0 0
  %438 = vmatpush2.bf16.msra.mxu0 0
  %439 = vmatprep.subr.bf16.mxu0 0
  %440 = vmatpush2.bf16.msra.mxu0 0
  %441 = vmatprep.subr.bf16.mxu0 0
  %442 = vmatpush2.bf16.msra.mxu0 0
  %443 = vmatprep.subr.bf16.mxu0 0
  %444 = vmatpush2.bf16.msra.mxu0 0
  %445 = vmatprep.subr.bf16.mxu0 0
  %446 = vmatpush2.bf16.msra.mxu0 0
  %447 = vmatprep.mubr.bf16.mxu0 0
  %448 = vmatmul.mubr.bf16.gmra.mxu0 %v351
  %v449 = vpop.f32.mrf.mxu0
  %v450 = vadd.f32 %v257, %v449
  %v451 = vpop.f32.mrf.mxu0
  %v452 = vpop.f32.mrf.mxu0
  %v453 = vadd.f32 %v260, %v452
  %v454 = vpop.f32.mrf.mxu0
  %455 = vmatprep.mubr.bf16.mxu0 0
  %456 = vmatmul.mubr.bf16.gmra.mxu0 %v352
  %v457 = vpop.f32.mrf.mxu0
  %v458 = vadd.f32 %v265, %v457
  %v459 = vpop.f32.mrf.mxu0
  %v460 = vpop.f32.mrf.mxu0
  %v461 = vadd.f32 %v268, %v460
  %v462 = vpop.f32.mrf.mxu0
  %463 = vmatprep.mubr.bf16.mxu0 0
  %464 = vmatmul.mubr.bf16.gmra.mxu0 %v353
  %v465 = vpop.f32.mrf.mxu0
  %v466 = vadd.f32 %v273, %v465
  %v467 = vpop.f32.mrf.mxu0
  %v468 = vpop.f32.mrf.mxu0
  %v469 = vadd.f32 %v276, %v468
  %v470 = vpop.f32.mrf.mxu0
  %471 = vmatprep.mubr.bf16.mxu0 0
  %472 = vmatmul.mubr.bf16.gmra.mxu0 %v354
  %v473 = vpop.f32.mrf.mxu0
  %v474 = vadd.f32 %v281, %v473
  %v475 = vpop.f32.mrf.mxu0
  %v476 = vpop.f32.mrf.mxu0
  %v477 = vadd.f32 %v284, %v476
  %v478 = vpop.f32.mrf.mxu0
  %479 = vmatprep.mubr.bf16.mxu0 0
  %480 = vmatmul.mubr.bf16.gmra.mxu0 %v355
  %v481 = vpop.f32.mrf.mxu0
  %v482 = vadd.f32 %v289, %v481
  %v483 = vpop.f32.mrf.mxu0
  %v484 = vpop.f32.mrf.mxu0
  %v485 = vadd.f32 %v292, %v484
  %v486 = vpop.f32.mrf.mxu0
  %487 = vmatprep.mubr.bf16.mxu0 0
  %488 = vmatmul.mubr.bf16.gmra.mxu0 %v356
  %v489 = vpop.f32.mrf.mxu0
  %v490 = vadd.f32 %v297, %v489
  %v491 = vpop.f32.mrf.mxu0
  %v492 = vpop.f32.mrf.mxu0
  %v493 = vadd.f32 %v300, %v492
  %v494 = vpop.f32.mrf.mxu0
  %495 = vmatprep.mubr.bf16.mxu0 0
  %496 = vmatmul.mubr.bf16.gmra.mxu0 %v357
  %v497 = vpop.f32.mrf.mxu0
  %v498 = vadd.f32 %v305, %v497
  %v499 = vpop.f32.mrf.mxu0
  %v500 = vpop.f32.mrf.mxu0
  %v501 = vadd.f32 %v308, %v500
  %v502 = vpop.f32.mrf.mxu0
  %503 = vmatprep.mubr.bf16.mxu0 0
  %504 = vmatmul.mubr.bf16.gmra.mxu0 %v358
  %v505 = vpop.f32.mrf.mxu0
  %v506 = vadd.f32 %v313, %v505
  %v507 = vpop.f32.mrf.mxu0
  %v508 = vpop.f32.mrf.mxu0
  %v509 = vadd.f32 %v316, %v508
  %v510 = vpop.f32.mrf.mxu0
  %511 = vdwg.mxu0
  %v512 = vld [vmem:[%s5] sm:$0x1]
  %v514 = vlaneseq
  %v515 = vshrl.u32 %v514, 7
  %v516 = vsub.s32 0, %v515
  %v517 = vrot.slane %v512, %v516
  %v519 = vmul.f32 %v450, %v517
  %v520 = vmul.f32 %v453, %v517
  %v521 = vmul.f32 %v458, %v517
  %v522 = vmul.f32 %v461, %v517
  %v523 = vmul.f32 %v466, %v517
  %v524 = vmul.f32 %v469, %v517
  %v525 = vmul.f32 %v474, %v517
  %v526 = vmul.f32 %v477, %v517
  %v527 = vmul.f32 %v482, %v517
  %v528 = vmul.f32 %v485, %v517
  %v529 = vmul.f32 %v490, %v517
  %v530 = vmul.f32 %v493, %v517
  %v531 = vmul.f32 %v498, %v517
  %v532 = vmul.f32 %v501, %v517
  %v533 = vmul.f32 %v506, %v517
  %v534 = vmul.f32 %v509, %v517
  %v535 = vld [vmem:[%s6] sm:$0x1]
  %v537 = vlaneseq
  %v538 = vshrl.u32 %v537, 7
  %v539 = vsub.s32 0, %v538
  %v540 = vrot.slane %v535, %v539
  %v542 = vadd.f32 %v519, %v540
  %v543 = vadd.f32 %v520, %v540
  %v544 = vadd.f32 %v521, %v540
  %v545 = vadd.f32 %v522, %v540
  %v546 = vadd.f32 %v523, %v540
  %v547 = vadd.f32 %v524, %v540
  %v548 = vadd.f32 %v525, %v540
  %v549 = vadd.f32 %v526, %v540
  %v550 = vadd.f32 %v527, %v540
  %v551 = vadd.f32 %v528, %v540
  %v552 = vadd.f32 %v529, %v540
  %v553 = vadd.f32 %v530, %v540
  %v554 = vadd.f32 %v531, %v540
  %v555 = vadd.f32 %v532, %v540
  %v556 = vadd.f32 %v533, %v540
  %v557 = vadd.f32 %v534, %v540
  %v558 = vld [vmem:[%s7] sm:$0x1]
  %v559 = vmax.f32 %v542, 0.0
  %v560 = vmax.f32 %v543, 0.0
  %v561 = vmax.f32 %v544, 0.0
  %v562 = vmax.f32 %v545, 0.0
  %v563 = vmax.f32 %v546, 0.0
  %v564 = vmax.f32 %v547, 0.0
  %v565 = vmax.f32 %v548, 0.0
  %v566 = vmax.f32 %v549, 0.0
  %v567 = vmax.f32 %v550, 0.0
  %v568 = vmax.f32 %v551, 0.0
  %v569 = vmax.f32 %v552, 0.0
  %v570 = vmax.f32 %v553, 0.0
  %v571 = vmax.f32 %v554, 0.0
  %v572 = vmax.f32 %v555, 0.0
  %v573 = vmax.f32 %v556, 0.0
  %v574 = vmax.f32 %v557, 0.0
  %v576 = vlaneseq
  %v577 = vshrl.u32 %v576, 7
  %v578 = vsub.s32 0, %v577
  %v579 = vrot.slane %v558, %v578
  %v581 = vmul.f32 %v579, %v559
  %v582 = vmul.f32 %v579, %v560
  %v583 = vmul.f32 %v579, %v561
  %v584 = vmul.f32 %v579, %v562
  %v585 = vmul.f32 %v579, %v563
  %v586 = vmul.f32 %v579, %v564
  %v587 = vmul.f32 %v579, %v565
  %v588 = vmul.f32 %v579, %v566
  %v589 = vmul.f32 %v579, %v567
  %v590 = vmul.f32 %v579, %v568
  %v591 = vmul.f32 %v579, %v569
  %v592 = vmul.f32 %v579, %v570
  %v593 = vmul.f32 %v579, %v571
  %v594 = vmul.f32 %v579, %v572
  %v595 = vmul.f32 %v579, %v573
  %v596 = vmul.f32 %v579, %v574
  %v597 = vsub.f32 1.0, %v558
  %v599 = vlaneseq
  %v600 = vshrl.u32 %v599, 7
  %v601 = vsub.s32 0, %v600
  %v602 = vrot.slane %v597, %v601
  %v604 = vmul.f32 %v602, %v542
  %v605 = vmul.f32 %v602, %v543
  %v606 = vmul.f32 %v602, %v544
  %v607 = vmul.f32 %v602, %v545
  %v608 = vmul.f32 %v602, %v546
  %v609 = vmul.f32 %v602, %v547
  %v610 = vmul.f32 %v602, %v548
  %v611 = vmul.f32 %v602, %v549
  %v612 = vmul.f32 %v602, %v550
  %v613 = vmul.f32 %v602, %v551
  %v614 = vmul.f32 %v602, %v552
  %v615 = vmul.f32 %v602, %v553
  %v616 = vmul.f32 %v602, %v554
  %v617 = vmul.f32 %v602, %v555
  %v618 = vmul.f32 %v602, %v556
  %v619 = vmul.f32 %v602, %v557
  %v620 = vadd.f32 %v581, %v604
  %v621 = vadd.f32 %v582, %v605
  %v622 = vadd.f32 %v583, %v606
  %v623 = vadd.f32 %v584, %v607
  %v624 = vadd.f32 %v585, %v608
  %v625 = vadd.f32 %v586, %v609
  %v626 = vadd.f32 %v587, %v610
  %v627 = vadd.f32 %v588, %v611
  %v628 = vadd.f32 %v589, %v612
  %v629 = vadd.f32 %v590, %v613
  %v630 = vadd.f32 %v591, %v614
  %v631 = vadd.f32 %v592, %v615
  %v632 = vadd.f32 %v593, %v616
  %v633 = vadd.f32 %v594, %v617
  %v634 = vadd.f32 %v595, %v618
  %v635 = vadd.f32 %v596, %v619
  %v636 = vpack.c.bf16 %v621, %v620
  %v637 = vpack.c.bf16 %v623, %v622
  %v638 = vpack.c.bf16 %v625, %v624
  %v639 = vpack.c.bf16 %v627, %v626
  %v640 = vpack.c.bf16 %v629, %v628
  %v641 = vpack.c.bf16 %v631, %v630
  %v642 = vpack.c.bf16 %v633, %v632
  %v643 = vpack.c.bf16 %v635, %v634
  %v652 = vunpack.c.l.b16 %v636
  %v653 = vunpack.c.h.b16 %v636
  %v654 = vunpack.c.l.b16 %v637
  %v655 = vunpack.c.h.b16 %v637
  %v656 = vunpack.c.l.b16 %v638
  %v657 = vunpack.c.h.b16 %v638
  %v658 = vunpack.c.l.b16 %v639
  %v659 = vunpack.c.h.b16 %v639
  %v660 = vunpack.c.l.b16 %v640
  %v661 = vunpack.c.h.b16 %v640
  %v662 = vunpack.c.l.b16 %v641
  %v663 = vunpack.c.h.b16 %v641
  %v664 = vunpack.c.l.b16 %v642
  %v665 = vunpack.c.h.b16 %v642
  %v666 = vunpack.c.l.b16 %v643
  %v667 = vunpack.c.h.b16 %v643
  %v668 = vpack.c.b16 %v652, %v652
  %v669 = vpack.c.b16 %v653, %v653
  %v670 = vpack.c.b16 %v654, %v654
  %v671 = vpack.c.b16 %v655, %v655
  %v672 = vpack.c.b16 %v656, %v656
  %v673 = vpack.c.b16 %v657, %v657
  %v674 = vpack.c.b16 %v658, %v658
  %v675 = vpack.c.b16 %v659, %v659
  %v676 = vpack.c.b16 %v660, %v660
  %v677 = vpack.c.b16 %v661, %v661
  %v678 = vpack.c.b16 %v662, %v662
  %v679 = vpack.c.b16 %v663, %v663
  %v680 = vpack.c.b16 %v664, %v664
  %v681 = vpack.c.b16 %v665, %v665
  %v682 = vpack.c.b16 %v666, %v666
  %v683 = vpack.c.b16 %v667, %v667
  %700 = vst [vmem:[%s8] sm:$0xf] %v668
  %701 = vst [vmem:[%s8 + $0x4] sm:$0xf] %v669
  %702 = vst [vmem:[%s8 + $0x8] sm:$0xf] %v670
  %703 = vst [vmem:[%s8 + $0xc] sm:$0xf] %v671
  %704 = vst [vmem:[%s8 + $0x10] sm:$0xf] %v672
  %705 = vst [vmem:[%s8 + $0x14] sm:$0xf] %v673
  %706 = vst [vmem:[%s8 + $0x18] sm:$0xf] %v674
  %707 = vst [vmem:[%s8 + $0x1c] sm:$0xf] %v675
  %708 = vst [vmem:[%s8 + $0x20] sm:$0xf] %v676
  %709 = vst [vmem:[%s8 + $0x24] sm:$0xf] %v677
  %710 = vst [vmem:[%s8 + $0x28] sm:$0xf] %v678
  %711 = vst [vmem:[%s8 + $0x2c] sm:$0xf] %v679
  %712 = vst [vmem:[%s8 + $0x30] sm:$0xf] %v680
  %713 = vst [vmem:[%s8 + $0x34] sm:$0xf] %v681
  %714 = vst [vmem:[%s8 + $0x38] sm:$0xf] %v682
  %715 = vst [vmem:[%s8 + $0x3c] sm:$0xf] %v683
  // Predicated region
  $region34: #{_lambda_.15} parent=0 // pred_check
    _
  $region35: #{_lambda_.15} parent=0 // pred_check_branch
    %717 = sbr.rel (0) target = $region37
  $region36: #{_lambda_.15} parent=0 // pred_region
    _
  $region37: #{_lambda_.15} parent=0 // pred_fallthru
    _
  // Predicated region
  $region38: #{_lambda_.15} parent=0 // pred_check
    _
  $region39: #{_lambda_.15} parent=0 // pred_check_branch
    %719 = sbr.rel (0) target = $region41
  $region40: #{_lambda_.15} parent=0 // pred_region
    _
  $region41: #{_lambda_.15} parent=0 // pred_fallthru
    _

// kernel: _lambda_.16
$region0: #{_lambda_.16}
  #allocation0 [shape = 'u32[]', space=smem, size = 0x4, offset = 0x4, fixed_abs, tag = 'smem constant byte address 0x4 - core index']
  #allocation1 [shape = 'u32[144,128]{1,0:T(1,128)}', space=vmem, size = 0x12000, scoped, tag = 'internal scratch']
  %s0 = inlined_call_operand.vmem [shape: bf16[128,256], index: 0, kind: input, shape index: {}]
  %s1 = inlined_call_operand.vmem [shape: bf16[256,128], index: 1, kind: input, shape index: {}]
  %s2 = inlined_call_operand.vmem [shape: f32[1,128], index: 2, kind: input, shape index: {}]
  %s3 = inlined_call_operand.vmem [shape: f32[1,128], index: 3, kind: input, shape index: {}]
  %s4 = inlined_call_operand.vmem [shape: f32[1,128], index: 4, kind: input, shape index: {}]
  %s5 = inlined_call_operand.vmem [shape: bf16[128,128], index: 5, kind: output, shape index: {}]
  %s6 = sld [smem:[#allocation0]]
  $region30: #{_lambda_.16} parent=0
    _
  %s8 = ssub.s32 1, %s6
  %s9 = scalar_select 0, %s8, %s6
  // Predicated region
  $region2: #{_lambda_.16} parent=0 // pred_check
    _
  $region3: #{_lambda_.16} parent=0 // pred_check_branch
    %11 = sbr.rel (0) target = $region5
  $region4: #{_lambda_.16} parent=0 // pred_region
    _
  $region5: #{_lambda_.16} parent=0 // pred_fallthru
    _
  // Predicated region
  $region6: #{_lambda_.16} parent=0 // pred_check
    _
  $region7: #{_lambda_.16} parent=0 // pred_check_branch
    %13 = sbr.rel (0) target = $region9
  $region8: #{_lambda_.16} parent=0 // pred_region
    _
  $region9: #{_lambda_.16} parent=0 // pred_fallthru
    _
  // Predicated region
  $region10: #{_lambda_.16} parent=0 // pred_check
    _
  $region11: #{_lambda_.16} parent=0 // pred_check_branch
    %15 = sbr.rel (0) target = $region13
  $region12: #{_lambda_.16} parent=0 // pred_region
    _
  $region13: #{_lambda_.16} parent=0 // pred_fallthru
    _
  // Predicated region
  $region14: #{_lambda_.16} parent=0 // pred_check
    _
  $region15: #{_lambda_.16} parent=0 // pred_check_branch
    %17 = sbr.rel (0) target = $region17
  $region16: #{_lambda_.16} parent=0 // pred_region
    _
  $region17: #{_lambda_.16} parent=0 // pred_fallthru
    _
  // Predicated region
  $region18: #{_lambda_.16} parent=0 // pred_check
    _
  $region19: #{_lambda_.16} parent=0 // pred_check_branch
    %19 = sbr.rel (0) target = $region21
  $region20: #{_lambda_.16} parent=0 // pred_region
    _
  $region21: #{_lambda_.16} parent=0 // pred_fallthru
    _
  %v21 = vld [vmem:[%s0] sm:$0xff]
  %v22 = vld [vmem:[%s0 + $0x8] sm:$0xff]
  %v23 = vld [vmem:[%s0 + $0x10] sm:$0xff]
  %v24 = vld [vmem:[%s0 + $0x18] sm:$0xff]
  %v25 = vld [vmem:[%s0 + $0x20] sm:$0xff]
  %v26 = vld [vmem:[%s0 + $0x28] sm:$0xff]
  %v27 = vld [vmem:[%s0 + $0x30] sm:$0xff]
  %v28 = vld [vmem:[%s0 + $0x38] sm:$0xff]
  %v29 = vld [vmem:[%s0 + $0x40] sm:$0xff]
  %v30 = vld [vmem:[%s0 + $0x48] sm:$0xff]
  %v31 = vld [vmem:[%s0 + $0x50] sm:$0xff]
  %v32 = vld [vmem:[%s0 + $0x58] sm:$0xff]
  %v33 = vld [vmem:[%s0 + $0x60] sm:$0xff]
  %v34 = vld [vmem:[%s0 + $0x68] sm:$0xff]
  %v35 = vld [vmem:[%s0 + $0x70] sm:$0xff]
  %v36 = vld [vmem:[%s0 + $0x78] sm:$0xff]
  %v37 = vld [vmem:[%s1] sm:$0xf]
  %v38 = vld [vmem:[%s1 + $0x4] sm:$0xf]
  %v39 = vld [vmem:[%s1 + $0x8] sm:$0xf]
  %v40 = vld [vmem:[%s1 + $0xc] sm:$0xf]
  %v41 = vld [vmem:[%s1 + $0x10] sm:$0xf]
  %v42 = vld [vmem:[%s1 + $0x14] sm:$0xf]
  %v43 = vld [vmem:[%s1 + $0x18] sm:$0xf]
  %v44 = vld [vmem:[%s1 + $0x1c] sm:$0xf]
  %v45 = vld [vmem:[%s1 + $0x20] sm:$0xf]
  %v46 = vld [vmem:[%s1 + $0x24] sm:$0xf]
  %v47 = vld [vmem:[%s1 + $0x28] sm:$0xf]
  %v48 = vld [vmem:[%s1 + $0x2c] sm:$0xf]
  %v49 = vld [vmem:[%s1 + $0x30] sm:$0xf]
  %v50 = vld [vmem:[%s1 + $0x34] sm:$0xf]
  %v51 = vld [vmem:[%s1 + $0x38] sm:$0xf]
  %v52 = vld [vmem:[%s1 + $0x3c] sm:$0xf]
  %v53 = vld [vmem:[%s1 + $0x40] sm:$0xf]
  %v54 = vld [vmem:[%s1 + $0x44] sm:$0xf]
  %v55 = vld [vmem:[%s1 + $0x48] sm:$0xf]
  %v56 = vld [vmem:[%s1 + $0x4c] sm:$0xf]
  %v57 = vld [vmem:[%s1 + $0x50] sm:$0xf]
  %v58 = vld [vmem:[%s1 + $0x54] sm:$0xf]
  %v59 = vld [vmem:[%s1 + $0x58] sm:$0xf]
  %v60 = vld [vmem:[%s1 + $0x5c] sm:$0xf]
  %v61 = vld [vmem:[%s1 + $0x60] sm:$0xf]
  %v62 = vld [vmem:[%s1 + $0x64] sm:$0xf]
  %v63 = vld [vmem:[%s1 + $0x68] sm:$0xf]
  %v64 = vld [vmem:[%s1 + $0x6c] sm:$0xf]
  %v65 = vld [vmem:[%s1 + $0x70] sm:$0xf]
  %v66 = vld [vmem:[%s1 + $0x74] sm:$0xf]
  %v67 = vld [vmem:[%s1 + $0x78] sm:$0xf]
  %v68 = vld [vmem:[%s1 + $0x7c] sm:$0xf]
  %v85 = vunpack.c.l.b16 %v21
  %v86 = vunpack.c.h.b16 %v21
  %v87 = vunpack.c.l.b16 %v22
  %v88 = vunpack.c.h.b16 %v22
  %v89 = vunpack.c.l.b16 %v23
  %v90 = vunpack.c.h.b16 %v23
  %v91 = vunpack.c.l.b16 %v24
  %v92 = vunpack.c.h.b16 %v24
  %v93 = vunpack.c.l.b16 %v25
  %v94 = vunpack.c.h.b16 %v25
  %v95 = vunpack.c.l.b16 %v26
  %v96 = vunpack.c.h.b16 %v26
  %v97 = vunpack.c.l.b16 %v27
  %v98 = vunpack.c.h.b16 %v27
  %v99 = vunpack.c.l.b16 %v28
  %v100 = vunpack.c.h.b16 %v28
  %v101 = vunpack.c.l.b16 %v29
  %v102 = vunpack.c.h.b16 %v29
  %v103 = vunpack.c.l.b16 %v30
  %v104 = vunpack.c.h.b16 %v30
  %v105 = vunpack.c.l.b16 %v31
  %v106 = vunpack.c.h.b16 %v31
  %v107 = vunpack.c.l.b16 %v32
  %v108 = vunpack.c.h.b16 %v32
  %v109 = vunpack.c.l.b16 %v33
  %v110 = vunpack.c.h.b16 %v33
  %v111 = vunpack.c.l.b16 %v34
  %v112 = vunpack.c.h.b16 %v34
  %v113 = vunpack.c.l.b16 %v35
  %v114 = vunpack.c.h.b16 %v35
  %v115 = vunpack.c.l.b16 %v36
  %v116 = vunpack.c.h.b16 %v36
  %v117 = vpack.c.b16 %v87, %v85
  %v118 = vpack.c.b16 %v88, %v86
  %v119 = vpack.c.b16 %v91, %v89
  %v120 = vpack.c.b16 %v92, %v90
  %v121 = vpack.c.b16 %v95, %v93
  %v122 = vpack.c.b16 %v96, %v94
  %v123 = vpack.c.b16 %v99, %v97
  %v124 = vpack.c.b16 %v100, %v98
  %v125 = vpack.c.b16 %v103, %v101
  %v126 = vpack.c.b16 %v104, %v102
  %v127 = vpack.c.b16 %v107, %v105
  %v128 = vpack.c.b16 %v108, %v106
  %v129 = vpack.c.b16 %v111, %v109
  %v130 = vpack.c.b16 %v112, %v110
  %v131 = vpack.c.b16 %v115, %v113
  %v132 = vpack.c.b16 %v116, %v114
  %v181 = vunpack.c.l.b16 %v37
  %v182 = vunpack.c.l.b16 %v38
  %v183 = vunpack.c.l.b16 %v39
  %v184 = vunpack.c.l.b16 %v40
  %v185 = vunpack.c.l.b16 %v41
  %v186 = vunpack.c.l.b16 %v42
  %v187 = vunpack.c.l.b16 %v43
  %v188 = vunpack.c.l.b16 %v44
  %v189 = vunpack.c.l.b16 %v45
  %v190 = vunpack.c.l.b16 %v46
  %v191 = vunpack.c.l.b16 %v47
  %v192 = vunpack.c.l.b16 %v48
  %v193 = vunpack.c.l.b16 %v49
  %v194 = vunpack.c.l.b16 %v50
  %v195 = vunpack.c.l.b16 %v51
  %v196 = vunpack.c.l.b16 %v52
  %v197 = vunpack.c.l.b16 %v53
  %v198 = vunpack.c.l.b16 %v54
  %v199 = vunpack.c.l.b16 %v55
  %v200 = vunpack.c.l.b16 %v56
  %v201 = vunpack.c.l.b16 %v57
  %v202 = vunpack.c.l.b16 %v58
  %v203 = vunpack.c.l.b16 %v59
  %v204 = vunpack.c.l.b16 %v60
  %v205 = vunpack.c.l.b16 %v61
  %v206 = vunpack.c.l.b16 %v62
  %v207 = vunpack.c.l.b16 %v63
  %v208 = vunpack.c.l.b16 %v64
  %v209 = vunpack.c.l.b16 %v65
  %v210 = vunpack.c.l.b16 %v66
  %v211 = vunpack.c.l.b16 %v67
  %v212 = vunpack.c.l.b16 %v68
  %v213 = vpack.c.b16 %v182, %v181
  %v214 = vpack.c.b16 %v184, %v183
  %v215 = vpack.c.b16 %v186, %v185
  %v216 = vpack.c.b16 %v188, %v187
  %v217 = vpack.c.b16 %v190, %v189
  %v218 = vpack.c.b16 %v192, %v191
  %v219 = vpack.c.b16 %v194, %v193
  %v220 = vpack.c.b16 %v196, %v195
  %v221 = vpack.c.b16 %v198, %v197
  %v222 = vpack.c.b16 %v200, %v199
  %v223 = vpack.c.b16 %v202, %v201
  %v224 = vpack.c.b16 %v204, %v203
  %v225 = vpack.c.b16 %v206, %v205
  %v226 = vpack.c.b16 %v208, %v207
  %v227 = vpack.c.b16 %v210, %v209
  %v228 = vpack.c.b16 %v212, %v211
  %245 = vmatprep.subr.bf16.mxu0 0
  %246 = vmatpush1.bf16.msra.mxu0 %v220
  %247 = vmatprep.subr.bf16.mxu0 0
  %248 = vmatpush1.bf16.msra.mxu0 %v219
  %249 = vmatprep.subr.bf16.mxu0 0
  %250 = vmatpush1.bf16.msra.mxu0 %v218
  %251 = vmatprep.subr.bf16.mxu0 0
  %252 = vmatpush1.bf16.msra.mxu0 %v217
  %253 = vmatprep.subr.bf16.mxu0 0
  %254 = vmatpush1.bf16.msra.mxu0 %v216
  %255 = vmatprep.subr.bf16.mxu0 0
  %256 = vmatpush1.bf16.msra.mxu0 %v215
  %257 = vmatprep.subr.bf16.mxu0 0
  %258 = vmatpush1.bf16.msra.mxu0 %v214
  %259 = vmatprep.subr.bf16.mxu0 0
  %260 = vmatpush1.bf16.msra.mxu0 %v213
  %261 = vmatprep.subr.bf16.mxu0 0
  %262 = vmatpush2.bf16.msra.mxu0 %v228
  %263 = vmatprep.subr.bf16.mxu0 0
  %264 = vmatpush2.bf16.msra.mxu0 %v227
  %265 = vmatprep.subr.bf16.mxu0 0
  %266 = vmatpush2.bf16.msra.mxu0 %v226
  %267 = vmatprep.subr.bf16.mxu0 0
  %268 = vmatpush2.bf16.msra.mxu0 %v225
  %269 = vmatprep.subr.bf16.mxu0 0
  %270 = vmatpush2.bf16.msra.mxu0 %v224
  %271 = vmatprep.subr.bf16.mxu0 0
  %272 = vmatpush2.bf16.msra.mxu0 %v223
  %273 = vmatprep.subr.bf16.mxu0 0
  %274 = vmatpush2.bf16.msra.mxu0 %v222
  %275 = vmatprep.subr.bf16.mxu0 0
  %276 = vmatpush2.bf16.msra.mxu0 %v221
  %277 = vmatprep.mubr.bf16.mxu0 %v118
  %278 = vmatmul.mubr.bf16.gmra.mxu0 %v117
  %v279 = vpop.f32.mrf.mxu0
  %v280 = vadd.f32 0.0, %v279
  %v281 = vpop.f32.mrf.mxu0
  %v282 = vpop.f32.mrf.mxu0
  %v283 = vadd.f32 0.0, %v282
  %v284 = vpop.f32.mrf.mxu0
  %285 = vmatprep.mubr.bf16.mxu0 %v120
  %286 = vmatmul.mubr.bf16.gmra.mxu0 %v119
  %v287 = vpop.f32.mrf.mxu0
  %v288 = vadd.f32 0.0, %v287
  %v289 = vpop.f32.mrf.mxu0
  %v290 = vpop.f32.mrf.mxu0
  %v291 = vadd.f32 0.0, %v290
  %v292 = vpop.f32.mrf.mxu0
  %293 = vmatprep.mubr.bf16.mxu0 %v122
  %294 = vmatmul.mubr.bf16.gmra.mxu0 %v121
  %v295 = vpop.f32.mrf.mxu0
  %v296 = vadd.f32 0.0, %v295
  %v297 = vpop.f32.mrf.mxu0
  %v298 = vpop.f32.mrf.mxu0
  %v299 = vadd.f32 0.0, %v298
  %v300 = vpop.f32.mrf.mxu0
  %301 = vmatprep.mubr.bf16.mxu0 %v124
  %302 = vmatmul.mubr.bf16.gmra.mxu0 %v123
  %v303 = vpop.f32.mrf.mxu0
  %v304 = vadd.f32 0.0, %v303
  %v305 = vpop.f32.mrf.mxu0
  %v306 = vpop.f32.mrf.mxu0
  %v307 = vadd.f32 0.0, %v306
  %v308 = vpop.f32.mrf.mxu0
  %309 = vmatprep.mubr.bf16.mxu0 %v126
  %310 = vmatmul.mubr.bf16.gmra.mxu0 %v125
  %v311 = vpop.f32.mrf.mxu0
  %v312 = vadd.f32 0.0, %v311
  %v313 = vpop.f32.mrf.mxu0
  %v314 = vpop.f32.mrf.mxu0
  %v315 = vadd.f32 0.0, %v314
  %v316 = vpop.f32.mrf.mxu0
  %317 = vmatprep.mubr.bf16.mxu0 %v128
  %318 = vmatmul.mubr.bf16.gmra.mxu0 %v127
  %v319 = vpop.f32.mrf.mxu0
  %v320 = vadd.f32 0.0, %v319
  %v321 = vpop.f32.mrf.mxu0
  %v322 = vpop.f32.mrf.mxu0
  %v323 = vadd.f32 0.0, %v322
  %v324 = vpop.f32.mrf.mxu0
  %325 = vmatprep.mubr.bf16.mxu0 %v130
  %326 = vmatmul.mubr.bf16.gmra.mxu0 %v129
  %v327 = vpop.f32.mrf.mxu0
  %v328 = vadd.f32 0.0, %v327
  %v329 = vpop.f32.mrf.mxu0
  %v330 = vpop.f32.mrf.mxu0
  %v331 = vadd.f32 0.0, %v330
  %v332 = vpop.f32.mrf.mxu0
  %333 = vmatprep.mubr.bf16.mxu0 %v132
  %334 = vmatmul.mubr.bf16.gmra.mxu0 %v131
  %v335 = vpop.f32.mrf.mxu0
  %v336 = vadd.f32 0.0, %v335
  %v337 = vpop.f32.mrf.mxu0
  %v338 = vpop.f32.mrf.mxu0
  %v339 = vadd.f32 0.0, %v338
  %v340 = vpop.f32.mrf.mxu0
  %341 = vdwg.mxu0
  %v342 = vld [vmem:[%s2] sm:$0x1]
  %v344 = vlaneseq
  %v345 = vshrl.u32 %v344, 7
  %v346 = vsub.s32 0, %v345
  %v347 = vrot.slane %v342, %v346
  %v349 = vmul.f32 %v280, %v347
  %v350 = vmul.f32 %v283, %v347
  %v351 = vmul.f32 %v288, %v347
  %v352 = vmul.f32 %v291, %v347
  %v353 = vmul.f32 %v296, %v347
  %v354 = vmul.f32 %v299, %v347
  %v355 = vmul.f32 %v304, %v347
  %v356 = vmul.f32 %v307, %v347
  %v357 = vmul.f32 %v312, %v347
  %v358 = vmul.f32 %v315, %v347
  %v359 = vmul.f32 %v320, %v347
  %v360 = vmul.f32 %v323, %v347
  %v361 = vmul.f32 %v328, %v347
  %v362 = vmul.f32 %v331, %v347
  %v363 = vmul.f32 %v336, %v347
  %v364 = vmul.f32 %v339, %v347
  %v365 = vld [vmem:[%s3] sm:$0x1]
  %v367 = vlaneseq
  %v368 = vshrl.u32 %v367, 7
  %v369 = vsub.s32 0, %v368
  %v370 = vrot.slane %v365, %v369
  %v372 = vadd.f32 %v349, %v370
  %v373 = vadd.f32 %v350, %v370
  %v374 = vadd.f32 %v351, %v370
  %v375 = vadd.f32 %v352, %v370
  %v376 = vadd.f32 %v353, %v370
  %v377 = vadd.f32 %v354, %v370
  %v378 = vadd.f32 %v355, %v370
  %v379 = vadd.f32 %v356, %v370
  %v380 = vadd.f32 %v357, %v370
  %v381 = vadd.f32 %v358, %v370
  %v382 = vadd.f32 %v359, %v370
  %v383 = vadd.f32 %v360, %v370
  %v384 = vadd.f32 %v361, %v370
  %v385 = vadd.f32 %v362, %v370
  %v386 = vadd.f32 %v363, %v370
  %v387 = vadd.f32 %v364, %v370
  %v388 = vld [vmem:[%s4] sm:$0x1]
  %v389 = vmax.f32 %v372, 0.0
  %v390 = vmax.f32 %v373, 0.0
  %v391 = vmax.f32 %v374, 0.0
  %v392 = vmax.f32 %v375, 0.0
  %v393 = vmax.f32 %v376, 0.0
  %v394 = vmax.f32 %v377, 0.0
  %v395 = vmax.f32 %v378, 0.0
  %v396 = vmax.f32 %v379, 0.0
  %v397 = vmax.f32 %v380, 0.0
  %v398 = vmax.f32 %v381, 0.0
  %v399 = vmax.f32 %v382, 0.0
  %v400 = vmax.f32 %v383, 0.0
  %v401 = vmax.f32 %v384, 0.0
  %v402 = vmax.f32 %v385, 0.0
  %v403 = vmax.f32 %v386, 0.0
  %v404 = vmax.f32 %v387, 0.0
  %v406 = vlaneseq
  %v407 = vshrl.u32 %v406, 7
  %v408 = vsub.s32 0, %v407
  %v409 = vrot.slane %v388, %v408
  %v411 = vmul.f32 %v409, %v389
  %v412 = vmul.f32 %v409, %v390
  %v413 = vmul.f32 %v409, %v391
  %v414 = vmul.f32 %v409, %v392
  %v415 = vmul.f32 %v409, %v393
  %v416 = vmul.f32 %v409, %v394
  %v417 = vmul.f32 %v409, %v395
  %v418 = vmul.f32 %v409, %v396
  %v419 = vmul.f32 %v409, %v397
  %v420 = vmul.f32 %v409, %v398
  %v421 = vmul.f32 %v409, %v399
  %v422 = vmul.f32 %v409, %v400
  %v423 = vmul.f32 %v409, %v401
  %v424 = vmul.f32 %v409, %v402
  %v425 = vmul.f32 %v409, %v403
  %v426 = vmul.f32 %v409, %v404
  %v427 = vsub.f32 1.0, %v388
  %v429 = vlaneseq
  %v430 = vshrl.u32 %v429, 7
  %v431 = vsub.s32 0, %v430
  %v432 = vrot.slane %v427, %v431
  %v434 = vmul.f32 %v432, %v372
  %v435 = vmul.f32 %v432, %v373
  %v436 = vmul.f32 %v432, %v374
  %v437 = vmul.f32 %v432, %v375
  %v438 = vmul.f32 %v432, %v376
  %v439 = vmul.f32 %v432, %v377
  %v440 = vmul.f32 %v432, %v378
  %v441 = vmul.f32 %v432, %v379
  %v442 = vmul.f32 %v432, %v380
  %v443 = vmul.f32 %v432, %v381
  %v444 = vmul.f32 %v432, %v382
  %v445 = vmul.f32 %v432, %v383
  %v446 = vmul.f32 %v432, %v384
  %v447 = vmul.f32 %v432, %v385
  %v448 = vmul.f32 %v432, %v386
  %v449 = vmul.f32 %v432, %v387
  %v450 = vadd.f32 %v411, %v434
  %v451 = vadd.f32 %v412, %v435
  %v452 = vadd.f32 %v413, %v436
  %v453 = vadd.f32 %v414, %v437
  %v454 = vadd.f32 %v415, %v438
  %v455 = vadd.f32 %v416, %v439
  %v456 = vadd.f32 %v417, %v440
  %v457 = vadd.f32 %v418, %v441
  %v458 = vadd.f32 %v419, %v442
  %v459 = vadd.f32 %v420, %v443
  %v460 = vadd.f32 %v421, %v444
  %v461 = vadd.f32 %v422, %v445
  %v462 = vadd.f32 %v423, %v446
  %v463 = vadd.f32 %v424, %v447
  %v464 = vadd.f32 %v425, %v448
  %v465 = vadd.f32 %v426, %v449
  %v466 = vpack.c.bf16 %v451, %v450
  %v467 = vpack.c.bf16 %v453, %v452
  %v468 = vpack.c.bf16 %v455, %v454
  %v469 = vpack.c.bf16 %v457, %v456
  %v470 = vpack.c.bf16 %v459, %v458
  %v471 = vpack.c.bf16 %v461, %v460
  %v472 = vpack.c.bf16 %v463, %v462
  %v473 = vpack.c.bf16 %v465, %v464
  %v482 = vunpack.c.l.b16 %v466
  %v483 = vunpack.c.h.b16 %v466
  %v484 = vunpack.c.l.b16 %v467
  %v485 = vunpack.c.h.b16 %v467
  %v486 = vunpack.c.l.b16 %v468
  %v487 = vunpack.c.h.b16 %v468
  %v488 = vunpack.c.l.b16 %v469
  %v489 = vunpack.c.h.b16 %v469
  %v490 = vunpack.c.l.b16 %v470
  %v491 = vunpack.c.h.b16 %v470
  %v492 = vunpack.c.l.b16 %v471
  %v493 = vunpack.c.h.b16 %v471
  %v494 = vunpack.c.l.b16 %v472
  %v495 = vunpack.c.h.b16 %v472
  %v496 = vunpack.c.l.b16 %v473
  %v497 = vunpack.c.h.b16 %v473
  %v498 = vpack.c.b16 %v482, %v482
  %v499 = vpack.c.b16 %v483, %v483
  %v500 = vpack.c.b16 %v484, %v484
  %v501 = vpack.c.b16 %v485, %v485
  %v502 = vpack.c.b16 %v486, %v486
  %v503 = vpack.c.b16 %v487, %v487
  %v504 = vpack.c.b16 %v488, %v488
  %v505 = vpack.c.b16 %v489, %v489
  %v506 = vpack.c.b16 %v490, %v490
  %v507 = vpack.c.b16 %v491, %v491
  %v508 = vpack.c.b16 %v492, %v492
  %v509 = vpack.c.b16 %v493, %v493
  %v510 = vpack.c.b16 %v494, %v494
  %v511 = vpack.c.b16 %v495, %v495
  %v512 = vpack.c.b16 %v496, %v496
  %v513 = vpack.c.b16 %v497, %v497
  %530 = vst [vmem:[%s5] sm:$0xf] %v498
  %531 = vst [vmem:[%s5 + $0x4] sm:$0xf] %v499
  %532 = vst [vmem:[%s5 + $0x8] sm:$0xf] %v500
  %533 = vst [vmem:[%s5 + $0xc] sm:$0xf] %v501
  %534 = vst [vmem:[%s5 + $0x10] sm:$0xf] %v502
  %535 = vst [vmem:[%s5 + $0x14] sm:$0xf] %v503
  %536 = vst [vmem:[%s5 + $0x18] sm:$0xf] %v504
  %537 = vst [vmem:[%s5 + $0x1c] sm:$0xf] %v505
  %538 = vst [vmem:[%s5 + $0x20] sm:$0xf] %v506
  %539 = vst [vmem:[%s5 + $0x24] sm:$0xf] %v507
  %540 = vst [vmem:[%s5 + $0x28] sm:$0xf] %v508
  %541 = vst [vmem:[%s5 + $0x2c] sm:$0xf] %v509
  %542 = vst [vmem:[%s5 + $0x30] sm:$0xf] %v510
  %543 = vst [vmem:[%s5 + $0x34] sm:$0xf] %v511
  %544 = vst [vmem:[%s5 + $0x38] sm:$0xf] %v512
  %545 = vst [vmem:[%s5 + $0x3c] sm:$0xf] %v513
  // Predicated region
  $region22: #{_lambda_.16} parent=0 // pred_check
    _
  $region23: #{_lambda_.16} parent=0 // pred_check_branch
    %547 = sbr.rel (0) target = $region25
  $region24: #{_lambda_.16} parent=0 // pred_region
    _
  $region25: #{_lambda_.16} parent=0 // pred_fallthru
    _
  // Predicated region
  $region26: #{_lambda_.16} parent=0 // pred_check
    _
  $region27: #{_lambda_.16} parent=0 // pred_check_branch
    %549 = sbr.rel (0) target = $region29
  $region28: #{_lambda_.16} parent=0 // pred_region
    _
  $region29: #{_lambda_.16} parent=0 // pred_fallthru
    _

// kernel: _lambda_.20
$region0: #{_lambda_.20}
  #allocation0 [shape = 'u32[]', space=smem, size = 0x4, offset = 0x4, fixed_abs, tag = 'smem constant byte address 0x4 - core index']
  #allocation1 [shape = 'u32[144,128]{1,0:T(1,128)}', space=vmem, size = 0x12000, scoped, tag = 'internal scratch']
  %s0 = inlined_call_operand.vmem [shape: bf16[128,128], index: 0, kind: input, shape index: {}]
  %s1 = inlined_call_operand.vmem [shape: bf16[128,128], index: 1, kind: input, shape index: {}]
  %s2 = inlined_call_operand.vmem [shape: f32[1,128], index: 2, kind: input, shape index: {}]
  %s3 = inlined_call_operand.vmem [shape: f32[1,128], index: 3, kind: input, shape index: {}]
  %s4 = inlined_call_operand.vmem [shape: f32[1,128], index: 4, kind: input, shape index: {}]
  %s5 = inlined_call_operand.vmem [shape: bf16[128,128], index: 5, kind: input, shape index: {}]
  %s6 = inlined_call_operand.vmem [shape: bf16[128,128], index: 6, kind: output, shape index: {}]
  %s7 = sld [smem:[#allocation0]]
  $region34: #{_lambda_.20} parent=0
    _
  %s9 = ssub.s32 1, %s7
  %s10 = scalar_select 0, %s9, %s7
  // Predicated region
  $region2: #{_lambda_.20} parent=0 // pred_check
    _
  $region3: #{_lambda_.20} parent=0 // pred_check_branch
    %12 = sbr.rel (0) target = $region5
  $region4: #{_lambda_.20} parent=0 // pred_region
    _
  $region5: #{_lambda_.20} parent=0 // pred_fallthru
    _
  // Predicated region
  $region6: #{_lambda_.20} parent=0 // pred_check
    _
  $region7: #{_lambda_.20} parent=0 // pred_check_branch
    %14 = sbr.rel (0) target = $region9
  $region8: #{_lambda_.20} parent=0 // pred_region
    _
  $region9: #{_lambda_.20} parent=0 // pred_fallthru
    _
  // Predicated region
  $region10: #{_lambda_.20} parent=0 // pred_check
    _
  $region11: #{_lambda_.20} parent=0 // pred_check_branch
    %16 = sbr.rel (0) target = $region13
  $region12: #{_lambda_.20} parent=0 // pred_region
    _
  $region13: #{_lambda_.20} parent=0 // pred_fallthru
    _
  // Predicated region
  $region14: #{_lambda_.20} parent=0 // pred_check
    _
  $region15: #{_lambda_.20} parent=0 // pred_check_branch
    %18 = sbr.rel (0) target = $region17
  $region16: #{_lambda_.20} parent=0 // pred_region
    _
  $region17: #{_lambda_.20} parent=0 // pred_fallthru
    _
  // Predicated region
  $region18: #{_lambda_.20} parent=0 // pred_check
    _
  $region19: #{_lambda_.20} parent=0 // pred_check_branch
    %20 = sbr.rel (0) target = $region21
  $region20: #{_lambda_.20} parent=0 // pred_region
    _
  $region21: #{_lambda_.20} parent=0 // pred_fallthru
    _
  // Predicated region
  $region22: #{_lambda_.20} parent=0 // pred_check
    _
  $region23: #{_lambda_.20} parent=0 // pred_check_branch
    %22 = sbr.rel (0) target = $region25
  $region24: #{_lambda_.20} parent=0 // pred_region
    _
  $region25: #{_lambda_.20} parent=0 // pred_fallthru
    _
  %v24 = vld [vmem:[%s0] sm:$0xf]
  %v25 = vld [vmem:[%s0 + $0x4] sm:$0xf]
  %v26 = vld [vmem:[%s0 + $0x8] sm:$0xf]
  %v27 = vld [vmem:[%s0 + $0xc] sm:$0xf]
  %v28 = vld [vmem:[%s0 + $0x10] sm:$0xf]
  %v29 = vld [vmem:[%s0 + $0x14] sm:$0xf]
  %v30 = vld [vmem:[%s0 + $0x18] sm:$0xf]
  %v31 = vld [vmem:[%s0 + $0x1c] sm:$0xf]
  %v32 = vld [vmem:[%s0 + $0x20] sm:$0xf]
  %v33 = vld [vmem:[%s0 + $0x24] sm:$0xf]
  %v34 = vld [vmem:[%s0 + $0x28] sm:$0xf]
  %v35 = vld [vmem:[%s0 + $0x2c] sm:$0xf]
  %v36 = vld [vmem:[%s0 + $0x30] sm:$0xf]
  %v37 = vld [vmem:[%s0 + $0x34] sm:$0xf]
  %v38 = vld [vmem:[%s0 + $0x38] sm:$0xf]
  %v39 = vld [vmem:[%s0 + $0x3c] sm:$0xf]
  %v40 = vld [vmem:[%s1] sm:$0xf]
  %v41 = vld [vmem:[%s1 + $0x4] sm:$0xf]
  %v42 = vld [vmem:[%s1 + $0x8] sm:$0xf]
  %v43 = vld [vmem:[%s1 + $0xc] sm:$0xf]
  %v44 = vld [vmem:[%s1 + $0x10] sm:$0xf]
  %v45 = vld [vmem:[%s1 + $0x14] sm:$0xf]
  %v46 = vld [vmem:[%s1 + $0x18] sm:$0xf]
  %v47 = vld [vmem:[%s1 + $0x1c] sm:$0xf]
  %v48 = vld [vmem:[%s1 + $0x20] sm:$0xf]
  %v49 = vld [vmem:[%s1 + $0x24] sm:$0xf]
  %v50 = vld [vmem:[%s1 + $0x28] sm:$0xf]
  %v51 = vld [vmem:[%s1 + $0x2c] sm:$0xf]
  %v52 = vld [vmem:[%s1 + $0x30] sm:$0xf]
  %v53 = vld [vmem:[%s1 + $0x34] sm:$0xf]
  %v54 = vld [vmem:[%s1 + $0x38] sm:$0xf]
  %v55 = vld [vmem:[%s1 + $0x3c] sm:$0xf]
  %v72 = vunpack.c.l.b16 %v24
  %v73 = vunpack.c.l.b16 %v25
  %v74 = vunpack.c.l.b16 %v26
  %v75 = vunpack.c.l.b16 %v27
  %v76 = vunpack.c.l.b16 %v28
  %v77 = vunpack.c.l.b16 %v29
  %v78 = vunpack.c.l.b16 %v30
  %v79 = vunpack.c.l.b16 %v31
  %v80 = vunpack.c.l.b16 %v32
  %v81 = vunpack.c.l.b16 %v33
  %v82 = vunpack.c.l.b16 %v34
  %v83 = vunpack.c.l.b16 %v35
  %v84 = vunpack.c.l.b16 %v36
  %v85 = vunpack.c.l.b16 %v37
  %v86 = vunpack.c.l.b16 %v38
  %v87 = vunpack.c.l.b16 %v39
  %v88 = vpack.c.b16 %v73, %v72
  %v89 = vpack.c.b16 %v75, %v74
  %v90 = vpack.c.b16 %v77, %v76
  %v91 = vpack.c.b16 %v79, %v78
  %v92 = vpack.c.b16 %v81, %v80
  %v93 = vpack.c.b16 %v83, %v82
  %v94 = vpack.c.b16 %v85, %v84
  %v95 = vpack.c.b16 %v87, %v86
  %v120 = vunpack.c.l.b16 %v40
  %v121 = vunpack.c.l.b16 %v41
  %v122 = vunpack.c.l.b16 %v42
  %v123 = vunpack.c.l.b16 %v43
  %v124 = vunpack.c.l.b16 %v44
  %v125 = vunpack.c.l.b16 %v45
  %v126 = vunpack.c.l.b16 %v46
  %v127 = vunpack.c.l.b16 %v47
  %v128 = vunpack.c.l.b16 %v48
  %v129 = vunpack.c.l.b16 %v49
  %v130 = vunpack.c.l.b16 %v50
  %v131 = vunpack.c.l.b16 %v51
  %v132 = vunpack.c.l.b16 %v52
  %v133 = vunpack.c.l.b16 %v53
  %v134 = vunpack.c.l.b16 %v54
  %v135 = vunpack.c.l.b16 %v55
  %v136 = vpack.c.b16 %v121, %v120
  %v137 = vpack.c.b16 %v123, %v122
  %v138 = vpack.c.b16 %v125, %v124
  %v139 = vpack.c.b16 %v127, %v126
  %v140 = vpack.c.b16 %v129, %v128
  %v141 = vpack.c.b16 %v131, %v130
  %v142 = vpack.c.b16 %v133, %v132
  %v143 = vpack.c.b16 %v135, %v134
  %152 = vmatprep.subr.bf16.mxu0 0
  %153 = vmatpush1.bf16.msra.mxu0 %v143
  %154 = vmatprep.subr.bf16.mxu0 0
  %155 = vmatpush1.bf16.msra.mxu0 %v142
  %156 = vmatprep.subr.bf16.mxu0 0
  %157 = vmatpush1.bf16.msra.mxu0 %v141
  %158 = vmatprep.subr.bf16.mxu0 0
  %159 = vmatpush1.bf16.msra.mxu0 %v140
  %160 = vmatprep.subr.bf16.mxu0 0
  %161 = vmatpush1.bf16.msra.mxu0 %v139
  %162 = vmatprep.subr.bf16.mxu0 0
  %163 = vmatpush1.bf16.msra.mxu0 %v138
  %164 = vmatprep.subr.bf16.mxu0 0
  %165 = vmatpush1.bf16.msra.mxu0 %v137
  %166 = vmatprep.subr.bf16.mxu0 0
  %167 = vmatpush1.bf16.msra.mxu0 %v136
  %168 = vmatprep.subr.bf16.mxu0 0
  %169 = vmatpush2.bf16.msra.mxu0 0
  %170 = vmatprep.subr.bf16.mxu0 0
  %171 = vmatpush2.bf16.msra.mxu0 0
  %172 = vmatprep.subr.bf16.mxu0 0
  %173 = vmatpush2.bf16.msra.mxu0 0
  %174 = vmatprep.subr.bf16.mxu0 0
  %175 = vmatpush2.bf16.msra.mxu0 0
  %176 = vmatprep.subr.bf16.mxu0 0
  %177 = vmatpush2.bf16.msra.mxu0 0
  %178 = vmatprep.subr.bf16.mxu0 0
  %179 = vmatpush2.bf16.msra.mxu0 0
  %180 = vmatprep.subr.bf16.mxu0 0
  %181 = vmatpush2.bf16.msra.mxu0 0
  %182 = vmatprep.subr.bf16.mxu0 0
  %183 = vmatpush2.bf16.msra.mxu0 0
  %184 = vmatprep.mubr.bf16.mxu0 0
  %185 = vmatmul.mubr.bf16.gmra.mxu0 %v88
  %v186 = vpop.f32.mrf.mxu0
  %v187 = vadd.f32 0.0, %v186
  %v188 = vpop.f32.mrf.mxu0
  %v189 = vpop.f32.mrf.mxu0
  %v190 = vadd.f32 0.0, %v189
  %v191 = vpop.f32.mrf.mxu0
  %192 = vmatprep.mubr.bf16.mxu0 0
  %193 = vmatmul.mubr.bf16.gmra.mxu0 %v89
  %v194 = vpop.f32.mrf.mxu0
  %v195 = vadd.f32 0.0, %v194
  %v196 = vpop.f32.mrf.mxu0
  %v197 = vpop.f32.mrf.mxu0
  %v198 = vadd.f32 0.0, %v197
  %v199 = vpop.f32.mrf.mxu0
  %200 = vmatprep.mubr.bf16.mxu0 0
  %201 = vmatmul.mubr.bf16.gmra.mxu0 %v90
  %v202 = vpop.f32.mrf.mxu0
  %v203 = vadd.f32 0.0, %v202
  %v204 = vpop.f32.mrf.mxu0
  %v205 = vpop.f32.mrf.mxu0
  %v206 = vadd.f32 0.0, %v205
  %v207 = vpop.f32.mrf.mxu0
  %208 = vmatprep.mubr.bf16.mxu0 0
  %209 = vmatmul.mubr.bf16.gmra.mxu0 %v91
  %v210 = vpop.f32.mrf.mxu0
  %v211 = vadd.f32 0.0, %v210
  %v212 = vpop.f32.mrf.mxu0
  %v213 = vpop.f32.mrf.mxu0
  %v214 = vadd.f32 0.0, %v213
  %v215 = vpop.f32.mrf.mxu0
  %216 = vmatprep.mubr.bf16.mxu0 0
  %217 = vmatmul.mubr.bf16.gmra.mxu0 %v92
  %v218 = vpop.f32.mrf.mxu0
  %v219 = vadd.f32 0.0, %v218
  %v220 = vpop.f32.mrf.mxu0
  %v221 = vpop.f32.mrf.mxu0
  %v222 = vadd.f32 0.0, %v221
  %v223 = vpop.f32.mrf.mxu0
  %224 = vmatprep.mubr.bf16.mxu0 0
  %225 = vmatmul.mubr.bf16.gmra.mxu0 %v93
  %v226 = vpop.f32.mrf.mxu0
  %v227 = vadd.f32 0.0, %v226
  %v228 = vpop.f32.mrf.mxu0
  %v229 = vpop.f32.mrf.mxu0
  %v230 = vadd.f32 0.0, %v229
  %v231 = vpop.f32.mrf.mxu0
  %232 = vmatprep.mubr.bf16.mxu0 0
  %233 = vmatmul.mubr.bf16.gmra.mxu0 %v94
  %v234 = vpop.f32.mrf.mxu0
  %v235 = vadd.f32 0.0, %v234
  %v236 = vpop.f32.mrf.mxu0
  %v237 = vpop.f32.mrf.mxu0
  %v238 = vadd.f32 0.0, %v237
  %v239 = vpop.f32.mrf.mxu0
  %240 = vmatprep.mubr.bf16.mxu0 0
  %241 = vmatmul.mubr.bf16.gmra.mxu0 %v95
  %v242 = vpop.f32.mrf.mxu0
  %v243 = vadd.f32 0.0, %v242
  %v244 = vpop.f32.mrf.mxu0
  %v245 = vpop.f32.mrf.mxu0
  %v246 = vadd.f32 0.0, %v245
  %v247 = vpop.f32.mrf.mxu0
  %248 = vdwg.mxu0
  %v249 = vld [vmem:[%s2] sm:$0x1]
  %v251 = vlaneseq
  %v252 = vshrl.u32 %v251, 7
  %v253 = vsub.s32 0, %v252
  %v254 = vrot.slane %v249, %v253
  %v256 = vmul.f32 %v187, %v254
  %v257 = vmul.f32 %v190, %v254
  %v258 = vmul.f32 %v195, %v254
  %v259 = vmul.f32 %v198, %v254
  %v260 = vmul.f32 %v203, %v254
  %v261 = vmul.f32 %v206, %v254
  %v262 = vmul.f32 %v211, %v254
  %v263 = vmul.f32 %v214, %v254
  %v264 = vmul.f32 %v219, %v254
  %v265 = vmul.f32 %v222, %v254
  %v266 = vmul.f32 %v227, %v254
  %v267 = vmul.f32 %v230, %v254
  %v268 = vmul.f32 %v235, %v254
  %v269 = vmul.f32 %v238, %v254
  %v270 = vmul.f32 %v243, %v254
  %v271 = vmul.f32 %v246, %v254
  %v272 = vld [vmem:[%s3] sm:$0x1]
  %v274 = vlaneseq
  %v275 = vshrl.u32 %v274, 7
  %v276 = vsub.s32 0, %v275
  %v277 = vrot.slane %v272, %v276
  %v279 = vadd.f32 %v256, %v277
  %v280 = vadd.f32 %v257, %v277
  %v281 = vadd.f32 %v258, %v277
  %v282 = vadd.f32 %v259, %v277
  %v283 = vadd.f32 %v260, %v277
  %v284 = vadd.f32 %v261, %v277
  %v285 = vadd.f32 %v262, %v277
  %v286 = vadd.f32 %v263, %v277
  %v287 = vadd.f32 %v264, %v277
  %v288 = vadd.f32 %v265, %v277
  %v289 = vadd.f32 %v266, %v277
  %v290 = vadd.f32 %v267, %v277
  %v291 = vadd.f32 %v268, %v277
  %v292 = vadd.f32 %v269, %v277
  %v293 = vadd.f32 %v270, %v277
  %v294 = vadd.f32 %v271, %v277
  %v295 = vld [vmem:[%s5] sm:$0xf]
  %v296 = vld [vmem:[%s5 + $0x4] sm:$0xf]
  %v297 = vld [vmem:[%s5 + $0x8] sm:$0xf]
  %v298 = vld [vmem:[%s5 + $0xc] sm:$0xf]
  %v299 = vld [vmem:[%s5 + $0x10] sm:$0xf]
  %v300 = vld [vmem:[%s5 + $0x14] sm:$0xf]
  %v301 = vld [vmem:[%s5 + $0x18] sm:$0xf]
  %v302 = vld [vmem:[%s5 + $0x1c] sm:$0xf]
  %v303 = vld [vmem:[%s5 + $0x20] sm:$0xf]
  %v304 = vld [vmem:[%s5 + $0x24] sm:$0xf]
  %v305 = vld [vmem:[%s5 + $0x28] sm:$0xf]
  %v306 = vld [vmem:[%s5 + $0x2c] sm:$0xf]
  %v307 = vld [vmem:[%s5 + $0x30] sm:$0xf]
  %v308 = vld [vmem:[%s5 + $0x34] sm:$0xf]
  %v309 = vld [vmem:[%s5 + $0x38] sm:$0xf]
  %v310 = vld [vmem:[%s5 + $0x3c] sm:$0xf]
  %v311 = vunpack.c.l.bf16 %v295
  %v312 = vunpack.c.l.bf16 %v296
  %v313 = vunpack.c.l.bf16 %v297
  %v314 = vunpack.c.l.bf16 %v298
  %v315 = vunpack.c.l.bf16 %v299
  %v316 = vunpack.c.l.bf16 %v300
  %v317 = vunpack.c.l.bf16 %v301
  %v318 = vunpack.c.l.bf16 %v302
  %v319 = vunpack.c.l.bf16 %v303
  %v320 = vunpack.c.l.bf16 %v304
  %v321 = vunpack.c.l.bf16 %v305
  %v322 = vunpack.c.l.bf16 %v306
  %v323 = vunpack.c.l.bf16 %v307
  %v324 = vunpack.c.l.bf16 %v308
  %v325 = vunpack.c.l.bf16 %v309
  %v326 = vunpack.c.l.bf16 %v310
  %v327 = vadd.f32 %v279, %v311
  %v328 = vadd.f32 %v280, %v312
  %v329 = vadd.f32 %v281, %v313
  %v330 = vadd.f32 %v282, %v314
  %v331 = vadd.f32 %v283, %v315
  %v332 = vadd.f32 %v284, %v316
  %v333 = vadd.f32 %v285, %v317
  %v334 = vadd.f32 %v286, %v318
  %v335 = vadd.f32 %v287, %v319
  %v336 = vadd.f32 %v288, %v320
  %v337 = vadd.f32 %v289, %v321
  %v338 = vadd.f32 %v290, %v322
  %v339 = vadd.f32 %v291, %v323
  %v340 = vadd.f32 %v292, %v324
  %v341 = vadd.f32 %v293, %v325
  %v342 = vadd.f32 %v294, %v326
  %v343 = vld [vmem:[%s4] sm:$0x1]
  %v344 = vmax.f32 %v327, 0.0
  %v345 = vmax.f32 %v328, 0.0
  %v346 = vmax.f32 %v329, 0.0
  %v347 = vmax.f32 %v330, 0.0
  %v348 = vmax.f32 %v331, 0.0
  %v349 = vmax.f32 %v332, 0.0
  %v350 = vmax.f32 %v333, 0.0
  %v351 = vmax.f32 %v334, 0.0
  %v352 = vmax.f32 %v335, 0.0
  %v353 = vmax.f32 %v336, 0.0
  %v354 = vmax.f32 %v337, 0.0
  %v355 = vmax.f32 %v338, 0.0
  %v356 = vmax.f32 %v339, 0.0
  %v357 = vmax.f32 %v340, 0.0
  %v358 = vmax.f32 %v341, 0.0
  %v359 = vmax.f32 %v342, 0.0
  %v361 = vlaneseq
  %v362 = vshrl.u32 %v361, 7
  %v363 = vsub.s32 0, %v362
  %v364 = vrot.slane %v343, %v363
  %v366 = vmul.f32 %v364, %v344
  %v367 = vmul.f32 %v364, %v345
  %v368 = vmul.f32 %v364, %v346
  %v369 = vmul.f32 %v364, %v347
  %v370 = vmul.f32 %v364, %v348
  %v371 = vmul.f32 %v364, %v349
  %v372 = vmul.f32 %v364, %v350
  %v373 = vmul.f32 %v364, %v351
  %v374 = vmul.f32 %v364, %v352
  %v375 = vmul.f32 %v364, %v353
  %v376 = vmul.f32 %v364, %v354
  %v377 = vmul.f32 %v364, %v355
  %v378 = vmul.f32 %v364, %v356
  %v379 = vmul.f32 %v364, %v357
  %v380 = vmul.f32 %v364, %v358
  %v381 = vmul.f32 %v364, %v359
  %v382 = vsub.f32 1.0, %v343
  %v384 = vlaneseq
  %v385 = vshrl.u32 %v384, 7
  %v386 = vsub.s32 0, %v385
  %v387 = vrot.slane %v382, %v386
  %v389 = vmul.f32 %v387, %v327
  %v390 = vmul.f32 %v387, %v328
  %v391 = vmul.f32 %v387, %v329
  %v392 = vmul.f32 %v387, %v330
  %v393 = vmul.f32 %v387, %v331
  %v394 = vmul.f32 %v387, %v332
  %v395 = vmul.f32 %v387, %v333
  %v396 = vmul.f32 %v387, %v334
  %v397 = vmul.f32 %v387, %v335
  %v398 = vmul.f32 %v387, %v336
  %v399 = vmul.f32 %v387, %v337
  %v400 = vmul.f32 %v387, %v338
  %v401 = vmul.f32 %v387, %v339
  %v402 = vmul.f32 %v387, %v340
  %v403 = vmul.f32 %v387, %v341
  %v404 = vmul.f32 %v387, %v342
  %v405 = vadd.f32 %v366, %v389
  %v406 = vadd.f32 %v367, %v390
  %v407 = vadd.f32 %v368, %v391
  %v408 = vadd.f32 %v369, %v392
  %v409 = vadd.f32 %v370, %v393
  %v410 = vadd.f32 %v371, %v394
  %v411 = vadd.f32 %v372, %v395
  %v412 = vadd.f32 %v373, %v396
  %v413 = vadd.f32 %v374, %v397
  %v414 = vadd.f32 %v375, %v398
  %v415 = vadd.f32 %v376, %v399
  %v416 = vadd.f32 %v377, %v400
  %v417 = vadd.f32 %v378, %v401
  %v418 = vadd.f32 %v379, %v402
  %v419 = vadd.f32 %v380, %v403
  %v420 = vadd.f32 %v381, %v404
  %v421 = vpack.c.bf16 %v406, %v405
  %v422 = vpack.c.bf16 %v408, %v407
  %v423 = vpack.c.bf16 %v410, %v409
  %v424 = vpack.c.bf16 %v412, %v411
  %v425 = vpack.c.bf16 %v414, %v413
  %v426 = vpack.c.bf16 %v416, %v415
  %v427 = vpack.c.bf16 %v418, %v417
  %v428 = vpack.c.bf16 %v420, %v419
  %v437 = vunpack.c.l.b16 %v421
  %v438 = vunpack.c.h.b16 %v421
  %v439 = vunpack.c.l.b16 %v422
  %v440 = vunpack.c.h.b16 %v422
  %v441 = vunpack.c.l.b16 %v423
  %v442 = vunpack.c.h.b16 %v423
  %v443 = vunpack.c.l.b16 %v424
  %v444 = vunpack.c.h.b16 %v424
  %v445 = vunpack.c.l.b16 %v425
  %v446 = vunpack.c.h.b16 %v425
  %v447 = vunpack.c.l.b16 %v426
  %v448 = vunpack.c.h.b16 %v426
  %v449 = vunpack.c.l.b16 %v427
  %v450 = vunpack.c.h.b16 %v427
  %v451 = vunpack.c.l.b16 %v428
  %v452 = vunpack.c.h.b16 %v428
  %v453 = vpack.c.b16 %v437, %v437
  %v454 = vpack.c.b16 %v438, %v438
  %v455 = vpack.c.b16 %v439, %v439
  %v456 = vpack.c.b16 %v440, %v440
  %v457 = vpack.c.b16 %v441, %v441
  %v458 = vpack.c.b16 %v442, %v442
  %v459 = vpack.c.b16 %v443, %v443
  %v460 = vpack.c.b16 %v444, %v444
  %v461 = vpack.c.b16 %v445, %v445
  %v462 = vpack.c.b16 %v446, %v446
  %v463 = vpack.c.b16 %v447, %v447
  %v464 = vpack.c.b16 %v448, %v448
  %v465 = vpack.c.b16 %v449, %v449
  %v466 = vpack.c.b16 %v450, %v450
  %v467 = vpack.c.b16 %v451, %v451
  %v468 = vpack.c.b16 %v452, %v452
  %485 = vst [vmem:[%s6] sm:$0xf] %v453
  %486 = vst [vmem:[%s6 + $0x4] sm:$0xf] %v454
  %487 = vst [vmem:[%s6 + $0x8] sm:$0xf] %v455
  %488 = vst [vmem:[%s6 + $0xc] sm:$0xf] %v456
  %489 = vst [vmem:[%s6 + $0x10] sm:$0xf] %v457
  %490 = vst [vmem:[%s6 + $0x14] sm:$0xf] %v458
  %491 = vst [vmem:[%s6 + $0x18] sm:$0xf] %v459
  %492 = vst [vmem:[%s6 + $0x1c] sm:$0xf] %v460
  %493 = vst [vmem:[%s6 + $0x20] sm:$0xf] %v461
  %494 = vst [vmem:[%s6 + $0x24] sm:$0xf] %v462
  %495 = vst [vmem:[%s6 + $0x28] sm:$0xf] %v463
  %496 = vst [vmem:[%s6 + $0x2c] sm:$0xf] %v464
  %497 = vst [vmem:[%s6 + $0x30] sm:$0xf] %v465
  %498 = vst [vmem:[%s6 + $0x34] sm:$0xf] %v466
  %499 = vst [vmem:[%s6 + $0x38] sm:$0xf] %v467
  %500 = vst [vmem:[%s6 + $0x3c] sm:$0xf] %v468
  // Predicated region
  $region26: #{_lambda_.20} parent=0 // pred_check
    _
  $region27: #{_lambda_.20} parent=0 // pred_check_branch
    %502 = sbr.rel (0) target = $region29
  $region28: #{_lambda_.20} parent=0 // pred_region
    _
  $region29: #{_lambda_.20} parent=0 // pred_fallthru
    _
  // Predicated region
  $region30: #{_lambda_.20} parent=0 // pred_check
    _
  $region31: #{_lambda_.20} parent=0 // pred_check_branch
    %504 = sbr.rel (0) target = $region33
  $region32: #{_lambda_.20} parent=0 // pred_region
    _
  $region33: #{_lambda_.20} parent=0 // pred_fallthru
    _

// kernel: reverse.4
$region0: #{reverse.4}
  #allocation0 [shape = 's32[1]{0}', space=sflag, size = 0x4, scoped, tag = 'scoped memory for reverse.4']
  %s0 = inlined_call_operand.vmem [shape: f32[2,16,8,3], index: 0, kind: input, shape index: {}]
  %s1 = inlined_call_operand.vmem [shape: f32[2,16,8,3], index: 1, kind: output, shape index: {}]
  %s2 = scalar_lea.vmem %s0, 16
  %v3 = vld [vmem:[%s2] sm:$0xff]
  %4 = vst [vmem:[%s1] sm:$0xff] %v3
  %s5 = scalar_lea.vmem %s0, 40
  %v6 = vld [vmem:[%s5] sm:$0xff]
  %s7 = scalar_lea.vmem %s1, 24
  %8 = vst [vmem:[%s7] sm:$0xff] %v6
  %s9 = scalar_lea.vmem %s0, 8
  %v10 = vld [vmem:[%s9] sm:$0xff]
  %s11 = scalar_lea.vmem %s1, 8
  %12 = vst [vmem:[%s11] sm:$0xff] %v10
  %s13 = scalar_lea.vmem %s0, 32
  %v14 = vld [vmem:[%s13] sm:$0xff]
  %s15 = scalar_lea.vmem %s1, 32
  %16 = vst [vmem:[%s15] sm:$0xff] %v14
  %v17 = vld [vmem:[%s0] sm:$0xff]
  %s18 = scalar_lea.vmem %s1, 16
  %19 = vst [vmem:[%s18] sm:$0xff] %v17
  %s20 = scalar_lea.vmem %s0, 24
  %v21 = vld [vmem:[%s20] sm:$0xff]
  %s22 = scalar_lea.vmem %s1, 40
  %23 = vst [vmem:[%s22] sm:$0xff] %v21

// kernel: _lambda_.23
$region0: #{_lambda_.23}
  #allocation0 [shape = 'u32[]', space=smem, size = 0x4, offset = 0x4, fixed_abs, tag = 'smem constant byte address 0x4 - core index']
  #allocation1 [shape = 'u32[144,128]{1,0:T(1,128)}', space=vmem, size = 0x12000, scoped, tag = 'internal scratch']
  %s0 = inlined_call_operand.vmem [shape: bf16[128,128], index: 0, kind: input, shape index: {}]
  %s1 = inlined_call_operand.vmem [shape: bf16[128,128], index: 1, kind: input, shape index: {}]
  %s2 = inlined_call_operand.vmem [shape: bf16[128,128], index: 2, kind: input, shape index: {}]
  %s3 = inlined_call_operand.vmem [shape: bf16[128,128], index: 3, kind: input, shape index: {}]
  %s4 = inlined_call_operand.vmem [shape: bf16[128,128], index: 4, kind: input, shape index: {}]
  %s5 = inlined_call_operand.vmem [shape: f32[1,128], index: 5, kind: input, shape index: {}]
  %s6 = inlined_call_operand.vmem [shape: f32[1,128], index: 6, kind: input, shape index: {}]
  %s7 = inlined_call_operand.vmem [shape: f32[1,128], index: 7, kind: input, shape index: {}]
  %s8 = inlined_call_operand.vmem [shape: bf16[128,128], index: 8, kind: input, shape index: {}]
  %s9 = inlined_call_operand.vmem [shape: bf16[128,128], index: 9, kind: output, shape index: {}]
  %s10 = sld [smem:[#allocation0]]
  $region46: #{_lambda_.23} parent=0
    _
  %s12 = ssub.s32 1, %s10
  %s13 = scalar_select 0, %s12, %s10
  // Predicated region
  $region2: #{_lambda_.23} parent=0 // pred_check
    _
  $region3: #{_lambda_.23} parent=0 // pred_check_branch
    %15 = sbr.rel (0) target = $region5
  $region4: #{_lambda_.23} parent=0 // pred_region
    _
  $region5: #{_lambda_.23} parent=0 // pred_fallthru
    _
  // Predicated region
  $region6: #{_lambda_.23} parent=0 // pred_check
    _
  $region7: #{_lambda_.23} parent=0 // pred_check_branch
    %17 = sbr.rel (0) target = $region9
  $region8: #{_lambda_.23} parent=0 // pred_region
    _
  $region9: #{_lambda_.23} parent=0 // pred_fallthru
    _
  // Predicated region
  $region10: #{_lambda_.23} parent=0 // pred_check
    _
  $region11: #{_lambda_.23} parent=0 // pred_check_branch
    %19 = sbr.rel (0) target = $region13
  $region12: #{_lambda_.23} parent=0 // pred_region
    _
  $region13: #{_lambda_.23} parent=0 // pred_fallthru
    _
  // Predicated region
  $region14: #{_lambda_.23} parent=0 // pred_check
    _
  $region15: #{_lambda_.23} parent=0 // pred_check_branch
    %21 = sbr.rel (0) target = $region17
  $region16: #{_lambda_.23} parent=0 // pred_region
    _
  $region17: #{_lambda_.23} parent=0 // pred_fallthru
    _
  // Predicated region
  $region18: #{_lambda_.23} parent=0 // pred_check
    _
  $region19: #{_lambda_.23} parent=0 // pred_check_branch
    %23 = sbr.rel (0) target = $region21
  $region20: #{_lambda_.23} parent=0 // pred_region
    _
  $region21: #{_lambda_.23} parent=0 // pred_fallthru
    _
  // Predicated region
  $region22: #{_lambda_.23} parent=0 // pred_check
    _
  $region23: #{_lambda_.23} parent=0 // pred_check_branch
    %25 = sbr.rel (0) target = $region25
  $region24: #{_lambda_.23} parent=0 // pred_region
    _
  $region25: #{_lambda_.23} parent=0 // pred_fallthru
    _
  // Predicated region
  $region26: #{_lambda_.23} parent=0 // pred_check
    _
  $region27: #{_lambda_.23} parent=0 // pred_check_branch
    %27 = sbr.rel (0) target = $region29
  $region28: #{_lambda_.23} parent=0 // pred_region
    _
  $region29: #{_lambda_.23} parent=0 // pred_fallthru
    _
  // Predicated region
  $region30: #{_lambda_.23} parent=0 // pred_check
    _
  $region31: #{_lambda_.23} parent=0 // pred_check_branch
    %29 = sbr.rel (0) target = $region33
  $region32: #{_lambda_.23} parent=0 // pred_region
    _
  $region33: #{_lambda_.23} parent=0 // pred_fallthru
    _
  // Predicated region
  $region34: #{_lambda_.23} parent=0 // pred_check
    _
  $region35: #{_lambda_.23} parent=0 // pred_check_branch
    %31 = sbr.rel (0) target = $region37
  $region36: #{_lambda_.23} parent=0 // pred_region
    _
  $region37: #{_lambda_.23} parent=0 // pred_fallthru
    _
  %v33 = vld [vmem:[%s0] sm:$0xf]
  %v34 = vld [vmem:[%s0 + $0x4] sm:$0xf]
  %v35 = vld [vmem:[%s0 + $0x8] sm:$0xf]
  %v36 = vld [vmem:[%s0 + $0xc] sm:$0xf]
  %v37 = vld [vmem:[%s0 + $0x10] sm:$0xf]
  %v38 = vld [vmem:[%s0 + $0x14] sm:$0xf]
  %v39 = vld [vmem:[%s0 + $0x18] sm:$0xf]
  %v40 = vld [vmem:[%s0 + $0x1c] sm:$0xf]
  %v41 = vld [vmem:[%s0 + $0x20] sm:$0xf]
  %v42 = vld [vmem:[%s0 + $0x24] sm:$0xf]
  %v43 = vld [vmem:[%s0 + $0x28] sm:$0xf]
  %v44 = vld [vmem:[%s0 + $0x2c] sm:$0xf]
  %v45 = vld [vmem:[%s0 + $0x30] sm:$0xf]
  %v46 = vld [vmem:[%s0 + $0x34] sm:$0xf]
  %v47 = vld [vmem:[%s0 + $0x38] sm:$0xf]
  %v48 = vld [vmem:[%s0 + $0x3c] sm:$0xf]
  %v49 = vld [vmem:[%s3] sm:$0xf]
  %v50 = vld [vmem:[%s3 + $0x4] sm:$0xf]
  %v51 = vld [vmem:[%s3 + $0x8] sm:$0xf]
  %v52 = vld [vmem:[%s3 + $0xc] sm:$0xf]
  %v53 = vld [vmem:[%s3 + $0x10] sm:$0xf]
  %v54 = vld [vmem:[%s3 + $0x14] sm:$0xf]
  %v55 = vld [vmem:[%s3 + $0x18] sm:$0xf]
  %v56 = vld [vmem:[%s3 + $0x1c] sm:$0xf]
  %v57 = vld [vmem:[%s3 + $0x20] sm:$0xf]
  %v58 = vld [vmem:[%s3 + $0x24] sm:$0xf]
  %v59 = vld [vmem:[%s3 + $0x28] sm:$0xf]
  %v60 = vld [vmem:[%s3 + $0x2c] sm:$0xf]
  %v61 = vld [vmem:[%s3 + $0x30] sm:$0xf]
  %v62 = vld [vmem:[%s3 + $0x34] sm:$0xf]
  %v63 = vld [vmem:[%s3 + $0x38] sm:$0xf]
  %v64 = vld [vmem:[%s3 + $0x3c] sm:$0xf]
  %v65 = vld [vmem:[%s1] sm:$0xf]
  %v66 = vld [vmem:[%s1 + $0x4] sm:$0xf]
  %v67 = vld [vmem:[%s1 + $0x8] sm:$0xf]
  %v68 = vld [vmem:[%s1 + $0xc] sm:$0xf]
  %v69 = vld [vmem:[%s1 + $0x10] sm:$0xf]
  %v70 = vld [vmem:[%s1 + $0x14] sm:$0xf]
  %v71 = vld [vmem:[%s1 + $0x18] sm:$0xf]
  %v72 = vld [vmem:[%s1 + $0x1c] sm:$0xf]
  %v73 = vld [vmem:[%s1 + $0x20] sm:$0xf]
  %v74 = vld [vmem:[%s1 + $0x24] sm:$0xf]
  %v75 = vld [vmem:[%s1 + $0x28] sm:$0xf]
  %v76 = vld [vmem:[%s1 + $0x2c] sm:$0xf]
  %v77 = vld [vmem:[%s1 + $0x30] sm:$0xf]
  %v78 = vld [vmem:[%s1 + $0x34] sm:$0xf]
  %v79 = vld [vmem:[%s1 + $0x38] sm:$0xf]
  %v80 = vld [vmem:[%s1 + $0x3c] sm:$0xf]
  %v81 = vld [vmem:[%s2] sm:$0xf]
  %v82 = vld [vmem:[%s2 + $0x4] sm:$0xf]
  %v83 = vld [vmem:[%s2 + $0x8] sm:$0xf]
  %v84 = vld [vmem:[%s2 + $0xc] sm:$0xf]
  %v85 = vld [vmem:[%s2 + $0x10] sm:$0xf]
  %v86 = vld [vmem:[%s2 + $0x14] sm:$0xf]
  %v87 = vld [vmem:[%s2 + $0x18] sm:$0xf]
  %v88 = vld [vmem:[%s2 + $0x1c] sm:$0xf]
  %v89 = vld [vmem:[%s2 + $0x20] sm:$0xf]
  %v90 = vld [vmem:[%s2 + $0x24] sm:$0xf]
  %v91 = vld [vmem:[%s2 + $0x28] sm:$0xf]
  %v92 = vld [vmem:[%s2 + $0x2c] sm:$0xf]
  %v93 = vld [vmem:[%s2 + $0x30] sm:$0xf]
  %v94 = vld [vmem:[%s2 + $0x34] sm:$0xf]
  %v95 = vld [vmem:[%s2 + $0x38] sm:$0xf]
  %v96 = vld [vmem:[%s2 + $0x3c] sm:$0xf]
  %v97 = vadd.bf16 %v65, %v81
  %v98 = vadd.bf16 %v66, %v82
  %v99 = vadd.bf16 %v67, %v83
  %v100 = vadd.bf16 %v68, %v84
  %v101 = vadd.bf16 %v69, %v85
  %v102 = vadd.bf16 %v70, %v86
  %v103 = vadd.bf16 %v71, %v87
  %v104 = vadd.bf16 %v72, %v88
  %v105 = vadd.bf16 %v73, %v89
  %v106 = vadd.bf16 %v74, %v90
  %v107 = vadd.bf16 %v75, %v91
  %v108 = vadd.bf16 %v76, %v92
  %v109 = vadd.bf16 %v77, %v93
  %v110 = vadd.bf16 %v78, %v94
  %v111 = vadd.bf16 %v79, %v95
  %v112 = vadd.bf16 %v80, %v96
  %v113 = vld [vmem:[%s4] sm:$0xf]
  %v114 = vld [vmem:[%s4 + $0x4] sm:$0xf]
  %v115 = vld [vmem:[%s4 + $0x8] sm:$0xf]
  %v116 = vld [vmem:[%s4 + $0xc] sm:$0xf]
  %v117 = vld [vmem:[%s4 + $0x10] sm:$0xf]
  %v118 = vld [vmem:[%s4 + $0x14] sm:$0xf]
  %v119 = vld [vmem:[%s4 + $0x18] sm:$0xf]
  %v120 = vld [vmem:[%s4 + $0x1c] sm:$0xf]
  %v121 = vld [vmem:[%s4 + $0x20] sm:$0xf]
  %v122 = vld [vmem:[%s4 + $0x24] sm:$0xf]
  %v123 = vld [vmem:[%s4 + $0x28] sm:$0xf]
  %v124 = vld [vmem:[%s4 + $0x2c] sm:$0xf]
  %v125 = vld [vmem:[%s4 + $0x30] sm:$0xf]
  %v126 = vld [vmem:[%s4 + $0x34] sm:$0xf]
  %v127 = vld [vmem:[%s4 + $0x38] sm:$0xf]
  %v128 = vld [vmem:[%s4 + $0x3c] sm:$0xf]
  %v145 = vunpack.c.l.b16 %v97
  %v146 = vunpack.c.l.b16 %v98
  %v147 = vunpack.c.l.b16 %v99
  %v148 = vunpack.c.l.b16 %v100
  %v149 = vunpack.c.l.b16 %v101
  %v150 = vunpack.c.l.b16 %v102
  %v151 = vunpack.c.l.b16 %v103
  %v152 = vunpack.c.l.b16 %v104
  %v153 = vunpack.c.l.b16 %v105
  %v154 = vunpack.c.l.b16 %v106
  %v155 = vunpack.c.l.b16 %v107
  %v156 = vunpack.c.l.b16 %v108
  %v157 = vunpack.c.l.b16 %v109
  %v158 = vunpack.c.l.b16 %v110
  %v159 = vunpack.c.l.b16 %v111
  %v160 = vunpack.c.l.b16 %v112
  %v161 = vpack.c.b16 %v146, %v145
  %v162 = vpack.c.b16 %v148, %v147
  %v163 = vpack.c.b16 %v150, %v149
  %v164 = vpack.c.b16 %v152, %v151
  %v165 = vpack.c.b16 %v154, %v153
  %v166 = vpack.c.b16 %v156, %v155
  %v167 = vpack.c.b16 %v158, %v157
  %v168 = vpack.c.b16 %v160, %v159
  %v193 = vunpack.c.l.b16 %v113
  %v194 = vunpack.c.l.b16 %v114
  %v195 = vunpack.c.l.b16 %v115
  %v196 = vunpack.c.l.b16 %v116
  %v197 = vunpack.c.l.b16 %v117
  %v198 = vunpack.c.l.b16 %v118
  %v199 = vunpack.c.l.b16 %v119
  %v200 = vunpack.c.l.b16 %v120
  %v201 = vunpack.c.l.b16 %v121
  %v202 = vunpack.c.l.b16 %v122
  %v203 = vunpack.c.l.b16 %v123
  %v204 = vunpack.c.l.b16 %v124
  %v205 = vunpack.c.l.b16 %v125
  %v206 = vunpack.c.l.b16 %v126
  %v207 = vunpack.c.l.b16 %v127
  %v208 = vunpack.c.l.b16 %v128
  %v209 = vpack.c.b16 %v194, %v193
  %v210 = vpack.c.b16 %v196, %v195
  %v211 = vpack.c.b16 %v198, %v197
  %v212 = vpack.c.b16 %v200, %v199
  %v213 = vpack.c.b16 %v202, %v201
  %v214 = vpack.c.b16 %v204, %v203
  %v215 = vpack.c.b16 %v206, %v205
  %v216 = vpack.c.b16 %v208, %v207
  %225 = vmatprep.subr.bf16.mxu0 0
  %226 = vmatpush1.bf16.msra.mxu0 %v216
  %227 = vmatprep.subr.bf16.mxu0 0
  %228 = vmatpush1.bf16.msra.mxu0 %v215
  %229 = vmatprep.subr.bf16.mxu0 0
  %230 = vmatpush1.bf16.msra.mxu0 %v214
  %231 = vmatprep.subr.bf16.mxu0 0
  %232 = vmatpush1.bf16.msra.mxu0 %v213
  %233 = vmatprep.subr.bf16.mxu0 0
  %234 = vmatpush1.bf16.msra.mxu0 %v212
  %235 = vmatprep.subr.bf16.mxu0 0
  %236 = vmatpush1.bf16.msra.mxu0 %v211
  %237 = vmatprep.subr.bf16.mxu0 0
  %238 = vmatpush1.bf16.msra.mxu0 %v210
  %239 = vmatprep.subr.bf16.mxu0 0
  %240 = vmatpush1.bf16.msra.mxu0 %v209
  %241 = vmatprep.subr.bf16.mxu0 0
  %242 = vmatpush2.bf16.msra.mxu0 0
  %243 = vmatprep.subr.bf16.mxu0 0
  %244 = vmatpush2.bf16.msra.mxu0 0
  %245 = vmatprep.subr.bf16.mxu0 0
  %246 = vmatpush2.bf16.msra.mxu0 0
  %247 = vmatprep.subr.bf16.mxu0 0
  %248 = vmatpush2.bf16.msra.mxu0 0
  %249 = vmatprep.subr.bf16.mxu0 0
  %250 = vmatpush2.bf16.msra.mxu0 0
  %251 = vmatprep.subr.bf16.mxu0 0
  %252 = vmatpush2.bf16.msra.mxu0 0
  %253 = vmatprep.subr.bf16.mxu0 0
  %254 = vmatpush2.bf16.msra.mxu0 0
  %255 = vmatprep.subr.bf16.mxu0 0
  %256 = vmatpush2.bf16.msra.mxu0 0
  %257 = vmatprep.mubr.bf16.mxu0 0
  %258 = vmatmul.mubr.bf16.gmra.mxu0 %v161
  %v259 = vpop.f32.mrf.mxu0
  %v260 = vadd.f32 0.0, %v259
  %v261 = vpop.f32.mrf.mxu0
  %v262 = vpop.f32.mrf.mxu0
  %v263 = vadd.f32 0.0, %v262
  %v264 = vpop.f32.mrf.mxu0
  %265 = vmatprep.mubr.bf16.mxu0 0
  %266 = vmatmul.mubr.bf16.gmra.mxu0 %v162
  %v267 = vpop.f32.mrf.mxu0
  %v268 = vadd.f32 0.0, %v267
  %v269 = vpop.f32.mrf.mxu0
  %v270 = vpop.f32.mrf.mxu0
  %v271 = vadd.f32 0.0, %v270
  %v272 = vpop.f32.mrf.mxu0
  %273 = vmatprep.mubr.bf16.mxu0 0
  %274 = vmatmul.mubr.bf16.gmra.mxu0 %v163
  %v275 = vpop.f32.mrf.mxu0
  %v276 = vadd.f32 0.0, %v275
  %v277 = vpop.f32.mrf.mxu0
  %v278 = vpop.f32.mrf.mxu0
  %v279 = vadd.f32 0.0, %v278
  %v280 = vpop.f32.mrf.mxu0
  %281 = vmatprep.mubr.bf16.mxu0 0
  %282 = vmatmul.mubr.bf16.gmra.mxu0 %v164
  %v283 = vpop.f32.mrf.mxu0
  %v284 = vadd.f32 0.0, %v283
  %v285 = vpop.f32.mrf.mxu0
  %v286 = vpop.f32.mrf.mxu0
  %v287 = vadd.f32 0.0, %v286
  %v288 = vpop.f32.mrf.mxu0
  %289 = vmatprep.mubr.bf16.mxu0 0
  %290 = vmatmul.mubr.bf16.gmra.mxu0 %v165
  %v291 = vpop.f32.mrf.mxu0
  %v292 = vadd.f32 0.0, %v291
  %v293 = vpop.f32.mrf.mxu0
  %v294 = vpop.f32.mrf.mxu0
  %v295 = vadd.f32 0.0, %v294
  %v296 = vpop.f32.mrf.mxu0
  %297 = vmatprep.mubr.bf16.mxu0 0
  %298 = vmatmul.mubr.bf16.gmra.mxu0 %v166
  %v299 = vpop.f32.mrf.mxu0
  %v300 = vadd.f32 0.0, %v299
  %v301 = vpop.f32.mrf.mxu0
  %v302 = vpop.f32.mrf.mxu0
  %v303 = vadd.f32 0.0, %v302
  %v304 = vpop.f32.mrf.mxu0
  %305 = vmatprep.mubr.bf16.mxu0 0
  %306 = vmatmul.mubr.bf16.gmra.mxu0 %v167
  %v307 = vpop.f32.mrf.mxu0
  %v308 = vadd.f32 0.0, %v307
  %v309 = vpop.f32.mrf.mxu0
  %v310 = vpop.f32.mrf.mxu0
  %v311 = vadd.f32 0.0, %v310
  %v312 = vpop.f32.mrf.mxu0
  %313 = vmatprep.mubr.bf16.mxu0 0
  %314 = vmatmul.mubr.bf16.gmra.mxu0 %v168
  %v315 = vpop.f32.mrf.mxu0
  %v316 = vadd.f32 0.0, %v315
  %v317 = vpop.f32.mrf.mxu0
  %v318 = vpop.f32.mrf.mxu0
  %v319 = vadd.f32 0.0, %v318
  %v320 = vpop.f32.mrf.mxu0
  %321 = vdwg.mxu0
  %v338 = vunpack.c.l.b16 %v33
  %v339 = vunpack.c.l.b16 %v34
  %v340 = vunpack.c.l.b16 %v35
  %v341 = vunpack.c.l.b16 %v36
  %v342 = vunpack.c.l.b16 %v37
  %v343 = vunpack.c.l.b16 %v38
  %v344 = vunpack.c.l.b16 %v39
  %v345 = vunpack.c.l.b16 %v40
  %v346 = vunpack.c.l.b16 %v41
  %v347 = vunpack.c.l.b16 %v42
  %v348 = vunpack.c.l.b16 %v43
  %v349 = vunpack.c.l.b16 %v44
  %v350 = vunpack.c.l.b16 %v45
  %v351 = vunpack.c.l.b16 %v46
  %v352 = vunpack.c.l.b16 %v47
  %v353 = vunpack.c.l.b16 %v48
  %v354 = vpack.c.b16 %v339, %v338
  %v355 = vpack.c.b16 %v341, %v340
  %v356 = vpack.c.b16 %v343, %v342
  %v357 = vpack.c.b16 %v345, %v344
  %v358 = vpack.c.b16 %v347, %v346
  %v359 = vpack.c.b16 %v349, %v348
  %v360 = vpack.c.b16 %v351, %v350
  %v361 = vpack.c.b16 %v353, %v352
  %v386 = vunpack.c.l.b16 %v49
  %v387 = vunpack.c.l.b16 %v50
  %v388 = vunpack.c.l.b16 %v51
  %v389 = vunpack.c.l.b16 %v52
  %v390 = vunpack.c.l.b16 %v53
  %v391 = vunpack.c.l.b16 %v54
  %v392 = vunpack.c.l.b16 %v55
  %v393 = vunpack.c.l.b16 %v56
  %v394 = vunpack.c.l.b16 %v57
  %v395 = vunpack.c.l.b16 %v58
  %v396 = vunpack.c.l.b16 %v59
  %v397 = vunpack.c.l.b16 %v60
  %v398 = vunpack.c.l.b16 %v61
  %v399 = vunpack.c.l.b16 %v62
  %v400 = vunpack.c.l.b16 %v63
  %v401 = vunpack.c.l.b16 %v64
  %v402 = vpack.c.b16 %v387, %v386
  %v403 = vpack.c.b16 %v389, %v388
  %v404 = vpack.c.b16 %v391, %v390
  %v405 = vpack.c.b16 %v393, %v392
  %v406 = vpack.c.b16 %v395, %v394
  %v407 = vpack.c.b16 %v397, %v396
  %v408 = vpack.c.b16 %v399, %v398
  %v409 = vpack.c.b16 %v401, %v400
  %418 = vmatprep.subr.bf16.mxu0 0
  %419 = vmatpush1.bf16.msra.mxu0 %v409
  %420 = vmatprep.subr.bf16.mxu0 0
  %421 = vmatpush1.bf16.msra.mxu0 %v408
  %422 = vmatprep.subr.bf16.mxu0 0
  %423 = vmatpush1.bf16.msra.mxu0 %v407
  %424 = vmatprep.subr.bf16.mxu0 0
  %425 = vmatpush1.bf16.msra.mxu0 %v406
  %426 = vmatprep.subr.bf16.mxu0 0
  %427 = vmatpush1.bf16.msra.mxu0 %v405
  %428 = vmatprep.subr.bf16.mxu0 0
  %429 = vmatpush1.bf16.msra.mxu0 %v404
  %430 = vmatprep.subr.bf16.mxu0 0
  %431 = vmatpush1.bf16.msra.mxu0 %v403
  %432 = vmatprep.subr.bf16.mxu0 0
  %433 = vmatpush1.bf16.msra.mxu0 %v402
  %434 = vmatprep.subr.bf16.mxu0 0
  %435 = vmatpush2.bf16.msra.mxu0 0
  %436 = vmatprep.subr.bf16.mxu0 0
  %437 = vmatpush2.bf16.msra.mxu0 0
  %438 = vmatprep.subr.bf16.mxu0 0
  %439 = vmatpush2.bf16.msra.mxu0 0
  %440 = vmatprep.subr.bf16.mxu0 0
  %441 = vmatpush2.bf16.msra.mxu0 0
  %442 = vmatprep.subr.bf16.mxu0 0
  %443 = vmatpush2.bf16.msra.mxu0 0
  %444 = vmatprep.subr.bf16.mxu0 0
  %445 = vmatpush2.bf16.msra.mxu0 0
  %446 = vmatprep.subr.bf16.mxu0 0
  %447 = vmatpush2.bf16.msra.mxu0 0
  %448 = vmatprep.subr.bf16.mxu0 0
  %449 = vmatpush2.bf16.msra.mxu0 0
  %450 = vmatprep.mubr.bf16.mxu0 0
  %451 = vmatmul.mubr.bf16.gmra.mxu0 %v354
  %v452 = vpop.f32.mrf.mxu0
  %v453 = vadd.f32 %v260, %v452
  %v454 = vpop.f32.mrf.mxu0
  %v455 = vpop.f32.mrf.mxu0
  %v456 = vadd.f32 %v263, %v455
  %v457 = vpop.f32.mrf.mxu0
  %458 = vmatprep.mubr.bf16.mxu0 0
  %459 = vmatmul.mubr.bf16.gmra.mxu0 %v355
  %v460 = vpop.f32.mrf.mxu0
  %v461 = vadd.f32 %v268, %v460
  %v462 = vpop.f32.mrf.mxu0
  %v463 = vpop.f32.mrf.mxu0
  %v464 = vadd.f32 %v271, %v463
  %v465 = vpop.f32.mrf.mxu0
  %466 = vmatprep.mubr.bf16.mxu0 0
  %467 = vmatmul.mubr.bf16.gmra.mxu0 %v356
  %v468 = vpop.f32.mrf.mxu0
  %v469 = vadd.f32 %v276, %v468
  %v470 = vpop.f32.mrf.mxu0
  %v471 = vpop.f32.mrf.mxu0
  %v472 = vadd.f32 %v279, %v471
  %v473 = vpop.f32.mrf.mxu0
  %474 = vmatprep.mubr.bf16.mxu0 0
  %475 = vmatmul.mubr.bf16.gmra.mxu0 %v357
  %v476 = vpop.f32.mrf.mxu0
  %v477 = vadd.f32 %v284, %v476
  %v478 = vpop.f32.mrf.mxu0
  %v479 = vpop.f32.mrf.mxu0
  %v480 = vadd.f32 %v287, %v479
  %v481 = vpop.f32.mrf.mxu0
  %482 = vmatprep.mubr.bf16.mxu0 0
  %483 = vmatmul.mubr.bf16.gmra.mxu0 %v358
  %v484 = vpop.f32.mrf.mxu0
  %v485 = vadd.f32 %v292, %v484
  %v486 = vpop.f32.mrf.mxu0
  %v487 = vpop.f32.mrf.mxu0
  %v488 = vadd.f32 %v295, %v487
  %v489 = vpop.f32.mrf.mxu0
  %490 = vmatprep.mubr.bf16.mxu0 0
  %491 = vmatmul.mubr.bf16.gmra.mxu0 %v359
  %v492 = vpop.f32.mrf.mxu0
  %v493 = vadd.f32 %v300, %v492
  %v494 = vpop.f32.mrf.mxu0
  %v495 = vpop.f32.mrf.mxu0
  %v496 = vadd.f32 %v303, %v495
  %v497 = vpop.f32.mrf.mxu0
  %498 = vmatprep.mubr.bf16.mxu0 0
  %499 = vmatmul.mubr.bf16.gmra.mxu0 %v360
  %v500 = vpop.f32.mrf.mxu0
  %v501 = vadd.f32 %v308, %v500
  %v502 = vpop.f32.mrf.mxu0
  %v503 = vpop.f32.mrf.mxu0
  %v504 = vadd.f32 %v311, %v503
  %v505 = vpop.f32.mrf.mxu0
  %506 = vmatprep.mubr.bf16.mxu0 0
  %507 = vmatmul.mubr.bf16.gmra.mxu0 %v361
  %v508 = vpop.f32.mrf.mxu0
  %v509 = vadd.f32 %v316, %v508
  %v510 = vpop.f32.mrf.mxu0
  %v511 = vpop.f32.mrf.mxu0
  %v512 = vadd.f32 %v319, %v511
  %v513 = vpop.f32.mrf.mxu0
  %514 = vdwg.mxu0
  %v515 = vld [vmem:[%s5] sm:$0x1]
  %v517 = vlaneseq
  %v518 = vshrl.u32 %v517, 7
  %v519 = vsub.s32 0, %v518
  %v520 = vrot.slane %v515, %v519
  %v522 = vmul.f32 %v453, %v520
  %v523 = vmul.f32 %v456, %v520
  %v524 = vmul.f32 %v461, %v520
  %v525 = vmul.f32 %v464, %v520
  %v526 = vmul.f32 %v469, %v520
  %v527 = vmul.f32 %v472, %v520
  %v528 = vmul.f32 %v477, %v520
  %v529 = vmul.f32 %v480, %v520
  %v530 = vmul.f32 %v485, %v520
  %v531 = vmul.f32 %v488, %v520
  %v532 = vmul.f32 %v493, %v520
  %v533 = vmul.f32 %v496, %v520
  %v534 = vmul.f32 %v501, %v520
  %v535 = vmul.f32 %v504, %v520
  %v536 = vmul.f32 %v509, %v520
  %v537 = vmul.f32 %v512, %v520
  %v538 = vld [vmem:[%s6] sm:$0x1]
  %v540 = vlaneseq
  %v541 = vshrl.u32 %v540, 7
  %v542 = vsub.s32 0, %v541
  %v543 = vrot.slane %v538, %v542
  %v545 = vadd.f32 %v522, %v543
  %v546 = vadd.f32 %v523, %v543
  %v547 = vadd.f32 %v524, %v543
  %v548 = vadd.f32 %v525, %v543
  %v549 = vadd.f32 %v526, %v543
  %v550 = vadd.f32 %v527, %v543
  %v551 = vadd.f32 %v528, %v543
  %v552 = vadd.f32 %v529, %v543
  %v553 = vadd.f32 %v530, %v543
  %v554 = vadd.f32 %v531, %v543
  %v555 = vadd.f32 %v532, %v543
  %v556 = vadd.f32 %v533, %v543
  %v557 = vadd.f32 %v534, %v543
  %v558 = vadd.f32 %v535, %v543
  %v559 = vadd.f32 %v536, %v543
  %v560 = vadd.f32 %v537, %v543
  %v561 = vld [vmem:[%s8] sm:$0xf]
  %v562 = vld [vmem:[%s8 + $0x4] sm:$0xf]
  %v563 = vld [vmem:[%s8 + $0x8] sm:$0xf]
  %v564 = vld [vmem:[%s8 + $0xc] sm:$0xf]
  %v565 = vld [vmem:[%s8 + $0x10] sm:$0xf]
  %v566 = vld [vmem:[%s8 + $0x14] sm:$0xf]
  %v567 = vld [vmem:[%s8 + $0x18] sm:$0xf]
  %v568 = vld [vmem:[%s8 + $0x1c] sm:$0xf]
  %v569 = vld [vmem:[%s8 + $0x20] sm:$0xf]
  %v570 = vld [vmem:[%s8 + $0x24] sm:$0xf]
  %v571 = vld [vmem:[%s8 + $0x28] sm:$0xf]
  %v572 = vld [vmem:[%s8 + $0x2c] sm:$0xf]
  %v573 = vld [vmem:[%s8 + $0x30] sm:$0xf]
  %v574 = vld [vmem:[%s8 + $0x34] sm:$0xf]
  %v575 = vld [vmem:[%s8 + $0x38] sm:$0xf]
  %v576 = vld [vmem:[%s8 + $0x3c] sm:$0xf]
  %v577 = vunpack.c.l.bf16 %v561
  %v578 = vunpack.c.l.bf16 %v562
  %v579 = vunpack.c.l.bf16 %v563
  %v580 = vunpack.c.l.bf16 %v564
  %v581 = vunpack.c.l.bf16 %v565
  %v582 = vunpack.c.l.bf16 %v566
  %v583 = vunpack.c.l.bf16 %v567
  %v584 = vunpack.c.l.bf16 %v568
  %v585 = vunpack.c.l.bf16 %v569
  %v586 = vunpack.c.l.bf16 %v570
  %v587 = vunpack.c.l.bf16 %v571
  %v588 = vunpack.c.l.bf16 %v572
  %v589 = vunpack.c.l.bf16 %v573
  %v590 = vunpack.c.l.bf16 %v574
  %v591 = vunpack.c.l.bf16 %v575
  %v592 = vunpack.c.l.bf16 %v576
  %v593 = vadd.f32 %v545, %v577
  %v594 = vadd.f32 %v546, %v578
  %v595 = vadd.f32 %v547, %v579
  %v596 = vadd.f32 %v548, %v580
  %v597 = vadd.f32 %v549, %v581
  %v598 = vadd.f32 %v550, %v582
  %v599 = vadd.f32 %v551, %v583
  %v600 = vadd.f32 %v552, %v584
  %v601 = vadd.f32 %v553, %v585
  %v602 = vadd.f32 %v554, %v586
  %v603 = vadd.f32 %v555, %v587
  %v604 = vadd.f32 %v556, %v588
  %v605 = vadd.f32 %v557, %v589
  %v606 = vadd.f32 %v558, %v590
  %v607 = vadd.f32 %v559, %v591
  %v608 = vadd.f32 %v560, %v592
  %v609 = vld [vmem:[%s7] sm:$0x1]
  %v610 = vmax.f32 %v593, 0.0
  %v611 = vmax.f32 %v594, 0.0
  %v612 = vmax.f32 %v595, 0.0
  %v613 = vmax.f32 %v596, 0.0
  %v614 = vmax.f32 %v597, 0.0
  %v615 = vmax.f32 %v598, 0.0
  %v616 = vmax.f32 %v599, 0.0
  %v617 = vmax.f32 %v600, 0.0
  %v618 = vmax.f32 %v601, 0.0
  %v619 = vmax.f32 %v602, 0.0
  %v620 = vmax.f32 %v603, 0.0
  %v621 = vmax.f32 %v604, 0.0
  %v622 = vmax.f32 %v605, 0.0
  %v623 = vmax.f32 %v606, 0.0
  %v624 = vmax.f32 %v607, 0.0
  %v625 = vmax.f32 %v608, 0.0
  %v627 = vlaneseq
  %v628 = vshrl.u32 %v627, 7
  %v629 = vsub.s32 0, %v628
  %v630 = vrot.slane %v609, %v629
  %v632 = vmul.f32 %v630, %v610
  %v633 = vmul.f32 %v630, %v611
  %v634 = vmul.f32 %v630, %v612
  %v635 = vmul.f32 %v630, %v613
  %v636 = vmul.f32 %v630, %v614
  %v637 = vmul.f32 %v630, %v615
  %v638 = vmul.f32 %v630, %v616
  %v639 = vmul.f32 %v630, %v617
  %v640 = vmul.f32 %v630, %v618
  %v641 = vmul.f32 %v630, %v619
  %v642 = vmul.f32 %v630, %v620
  %v643 = vmul.f32 %v630, %v621
  %v644 = vmul.f32 %v630, %v622
  %v645 = vmul.f32 %v630, %v623
  %v646 = vmul.f32 %v630, %v624
  %v647 = vmul.f32 %v630, %v625
  %v648 = vsub.f32 1.0, %v609
  %v650 = vlaneseq
  %v651 = vshrl.u32 %v650, 7
  %v652 = vsub.s32 0, %v651
  %v653 = vrot.slane %v648, %v652
  %v655 = vmul.f32 %v653, %v593
  %v656 = vmul.f32 %v653, %v594
  %v657 = vmul.f32 %v653, %v595
  %v658 = vmul.f32 %v653, %v596
  %v659 = vmul.f32 %v653, %v597
  %v660 = vmul.f32 %v653, %v598
  %v661 = vmul.f32 %v653, %v599
  %v662 = vmul.f32 %v653, %v600
  %v663 = vmul.f32 %v653, %v601
  %v664 = vmul.f32 %v653, %v602
  %v665 = vmul.f32 %v653, %v603
  %v666 = vmul.f32 %v653, %v604
  %v667 = vmul.f32 %v653, %v605
  %v668 = vmul.f32 %v653, %v606
  %v669 = vmul.f32 %v653, %v607
  %v670 = vmul.f32 %v653, %v608
  %v671 = vadd.f32 %v632, %v655
  %v672 = vadd.f32 %v633, %v656
  %v673 = vadd.f32 %v634, %v657
  %v674 = vadd.f32 %v635, %v658
  %v675 = vadd.f32 %v636, %v659
  %v676 = vadd.f32 %v637, %v660
  %v677 = vadd.f32 %v638, %v661
  %v678 = vadd.f32 %v639, %v662
  %v679 = vadd.f32 %v640, %v663
  %v680 = vadd.f32 %v641, %v664
  %v681 = vadd.f32 %v642, %v665
  %v682 = vadd.f32 %v643, %v666
  %v683 = vadd.f32 %v644, %v667
  %v684 = vadd.f32 %v645, %v668
  %v685 = vadd.f32 %v646, %v669
  %v686 = vadd.f32 %v647, %v670
  %v687 = vpack.c.bf16 %v672, %v671
  %v688 = vpack.c.bf16 %v674, %v673
  %v689 = vpack.c.bf16 %v676, %v675
  %v690 = vpack.c.bf16 %v678, %v677
  %v691 = vpack.c.bf16 %v680, %v679
  %v692 = vpack.c.bf16 %v682, %v681
  %v693 = vpack.c.bf16 %v684, %v683
  %v694 = vpack.c.bf16 %v686, %v685
  %v703 = vunpack.c.l.b16 %v687
  %v704 = vunpack.c.h.b16 %v687
  %v705 = vunpack.c.l.b16 %v688
  %v706 = vunpack.c.h.b16 %v688
  %v707 = vunpack.c.l.b16 %v689
  %v708 = vunpack.c.h.b16 %v689
  %v709 = vunpack.c.l.b16 %v690
  %v710 = vunpack.c.h.b16 %v690
  %v711 = vunpack.c.l.b16 %v691
  %v712 = vunpack.c.h.b16 %v691
  %v713 = vunpack.c.l.b16 %v692
  %v714 = vunpack.c.h.b16 %v692
  %v715 = vunpack.c.l.b16 %v693
  %v716 = vunpack.c.h.b16 %v693
  %v717 = vunpack.c.l.b16 %v694
  %v718 = vunpack.c.h.b16 %v694
  %v719 = vpack.c.b16 %v703, %v703
  %v720 = vpack.c.b16 %v704, %v704
  %v721 = vpack.c.b16 %v705, %v705
  %v722 = vpack.c.b16 %v706, %v706
  %v723 = vpack.c.b16 %v707, %v707
  %v724 = vpack.c.b16 %v708, %v708
  %v725 = vpack.c.b16 %v709, %v709
  %v726 = vpack.c.b16 %v710, %v710
  %v727 = vpack.c.b16 %v711, %v711
  %v728 = vpack.c.b16 %v712, %v712
  %v729 = vpack.c.b16 %v713, %v713
  %v730 = vpack.c.b16 %v714, %v714
  %v731 = vpack.c.b16 %v715, %v715
  %v732 = vpack.c.b16 %v716, %v716
  %v733 = vpack.c.b16 %v717, %v717
  %v734 = vpack.c.b16 %v718, %v718
  %751 = vst [vmem:[%s9] sm:$0xf] %v719
  %752 = vst [vmem:[%s9 + $0x4] sm:$0xf] %v720
  %753 = vst [vmem:[%s9 + $0x8] sm:$0xf] %v721
  %754 = vst [vmem:[%s9 + $0xc] sm:$0xf] %v722
  %755 = vst [vmem:[%s9 + $0x10] sm:$0xf] %v723
  %756 = vst [vmem:[%s9 + $0x14] sm:$0xf] %v724
  %757 = vst [vmem:[%s9 + $0x18] sm:$0xf] %v725
  %758 = vst [vmem:[%s9 + $0x1c] sm:$0xf] %v726
  %759 = vst [vmem:[%s9 + $0x20] sm:$0xf] %v727
  %760 = vst [vmem:[%s9 + $0x24] sm:$0xf] %v728
  %761 = vst [vmem:[%s9 + $0x28] sm:$0xf] %v729
  %762 = vst [vmem:[%s9 + $0x2c] sm:$0xf] %v730
  %763 = vst [vmem:[%s9 + $0x30] sm:$0xf] %v731
  %764 = vst [vmem:[%s9 + $0x34] sm:$0xf] %v732
  %765 = vst [vmem:[%s9 + $0x38] sm:$0xf] %v733
  %766 = vst [vmem:[%s9 + $0x3c] sm:$0xf] %v734
  // Predicated region
  $region38: #{_lambda_.23} parent=0 // pred_check
    _
  $region39: #{_lambda_.23} parent=0 // pred_check_branch
    %768 = sbr.rel (0) target = $region41
  $region40: #{_lambda_.23} parent=0 // pred_region
    _
  $region41: #{_lambda_.23} parent=0 // pred_fallthru
    _
  // Predicated region
  $region42: #{_lambda_.23} parent=0 // pred_check
    _
  $region43: #{_lambda_.23} parent=0 // pred_check_branch
    %770 = sbr.rel (0) target = $region45
  $region44: #{_lambda_.23} parent=0 // pred_region
    _
  $region45: #{_lambda_.23} parent=0 // pred_fallthru
    _

</llo_original>
